<compile_context>
chip_gen: v7x
topology: tpu7x:2x2x1
jax: 0.10.0
libtpu: 0.0.40
codegen_flags: <defaults>
</compile_context>

<pallas_src>
import jax
import jax.numpy as jnp
from jax import lax
from jax.experimental import pallas as pl
from jax.experimental.pallas import tpu as pltpu

# --- model configuration (BaseRNN(input_size=16, hidden_size=32, output_size=4,
#                                   num_layers=2, dropout=0.0, rnn_type='GRU')) ---
INPUT_SIZE = 16
HIDDEN = 32
OUTPUT = 4
NUM_LAYERS = 2
BATCH = 8
SEQ = 8
BN_EPS = 1e-5

GP = 128             # one full vreg of lanes
ZOFF = 64            # z-gate lane offset inside the packed r/z block
G2 = 2 * GP          # layer-0 packed gate width: [rz | n]
G3L1 = 3 * GP        # layer-1 fused output width: [rz_sum | gi_n | gh_n]


def base_rnn_kernel(x_ref,
                    wih0_ref, bih0_ref, whh0_ref, bhh0n_ref,
                    wl1_ref, bl1_ref,
                    gamma_ref, beta_ref, fcw_ref, fcb_ref,
                    out_ref, gi0_ref):
    # ---- hoisted layer-0 input projection: one (T*B, I) @ (I, 2*GP) MXU call ----
    gi0_all = jnp.dot(x_ref[...], wih0_ref[...],
                      preferred_element_type=jnp.float32) + bih0_ref[...]
    # leading-dim split only (minor dim unchanged) -> layout-preserving
    gi0_ref[...] = gi0_all.reshape(SEQ, BATCH, G2)

    # ---- loop-invariant ref reads / broadcasts hoisted out of the unrolled loop ----
    whh0 = whh0_ref[...]                                          # (H, G2)
    wl1 = wl1_ref[...]                                            # (2H, G3L1)
    bhh0n = jnp.broadcast_to(bhh0n_ref[...], (BATCH, HIDDEN))     # n-gate hidden bias, layer 0
    bl1 = jnp.broadcast_to(bl1_ref[...], (BATCH, G3L1))           # all layer-1 biases, folded

    def sigmoid_t(x):
        # sigma(x) = 0.5*(1 + tanh(0.5*x)): one EUP op; the muls/adds use idle VALU slack.
        return 0.5 * (jnp.tanh(0.5 * x) + 1.0)

    h0 = jnp.zeros((BATCH, HIDDEN), jnp.float32)
    h1 = jnp.zeros((BATCH, HIDDEN), jnp.float32)

    # Fully unrolled time loop (static t -> static scratch indexing); layer-1 step t can
    # overlap with layer-0 step t+1 in the LLO schedule.
    for t in range(SEQ):
        # ---- layer 0: only the recurrent matmul remains on the per-step path ----
        gi0_t = gi0_ref[t]                                        # (B, G2), input biases folded
        gh0 = jnp.dot(h0, whh0, preferred_element_type=jnp.float32)
        rz0 = sigmoid_t(gi0_t[:, :GP] + gh0[:, :GP])              # one packed r/z nonlinearity
        r0 = rz0[:, :HIDDEN]
        z0 = rz0[:, ZOFF:ZOFF + HIDDEN]
        n0 = jnp.tanh(gi0_t[:, GP:GP + HIDDEN]
                      + r0 * (gh0[:, GP:GP + HIDDEN] + bhh0n))
        h0 = (1.0 - z0) * n0 + z0 * h0

        # ---- layer 1: input + recurrent matmuls fused into ONE MXU call ----
        # (dropout=0.0 between layers -> identity)
        lhs1 = jnp.concatenate([h0, h1], axis=1)                  # (B, 2H), lane-concat (XLU)
        g1 = jnp.dot(lhs1, wl1, preferred_element_type=jnp.float32) + bl1
        rz1 = sigmoid_t(g1[:, :GP])                               # rz_sum block (gi+gh+biases)
        r1 = rz1[:, :HIDDEN]
        z1 = rz1[:, ZOFF:ZOFF + HIDDEN]
        n1 = jnp.tanh(g1[:, GP:GP + HIDDEN]                       # gi_n (+ b_ih_n)
                      + r1 * g1[:, 2 * GP:2 * GP + HIDDEN])       # gh_n (+ b_hh_n)
        h1 = (1.0 - z1) * n1 + z1 * h1

    # BatchNorm1d, training mode (nn.Module default): batch mean / biased variance.
    # TODO(synk): running_mean/running_var buffer updates (training side effect) are not
    # reproduced; they do not affect the returned forward value in train mode.
    mean = jnp.mean(h1, axis=0, keepdims=True)
    var = jnp.mean((h1 - mean) ** 2, axis=0, keepdims=True)
    bn = (h1 - mean) * lax.rsqrt(var + BN_EPS) * gamma_ref[...] + beta_ref[...]

    # Final linear layer.
    out_ref[...] = jnp.dot(bn, fcw_ref[...],
                           preferred_element_type=jnp.float32) + fcb_ref[...]


# --------------------- one-time weight preparation (NOT per call) ---------------------

def prepare_params(params):
    """Pack/fold/fuse all weights once at parameter-load time.

    Returns a dict of device arrays consumed directly by the kernel; call this once and
    reuse the result for every forward call.
    """
    H = HIDDEN
    f32 = jnp.float32

    def pack_rzn(w_t):
        """(rows, 3H) -> (rows, G2): r -> lanes [0,H), z -> [ZOFF,ZOFF+H), n -> [GP,GP+H)."""
        rows = w_t.shape[0]
        out = jnp.zeros((rows, G2), f32)
        out = out.at[:, 0:H].set(w_t[:, 0:H].astype(f32))
        out = out.at[:, ZOFF:ZOFF + H].set(w_t[:, H:2 * H].astype(f32))
        out = out.at[:, GP:GP + H].set(w_t[:, 2 * H:3 * H].astype(f32))
        return out

    # ---- layer 0 ----
    wih0 = pack_rzn(params['w_ih_l0'].T)                 # (I, G2)
    whh0 = pack_rzn(params['w_hh_l0'].T)                 # (H, G2)
    b_ih0 = params['b_ih_l0'].astype(f32)
    b_hh0 = params['b_hh_l0'].astype(f32)
    # input-side folded bias: r/z get b_ih+b_hh (only ever summed), n gets b_ih only.
    bih0 = jnp.zeros((1, G2), f32)
    bih0 = bih0.at[0, 0:H].set(b_ih0[0:H] + b_hh0[0:H])
    bih0 = bih0.at[0, ZOFF:ZOFF + H].set(b_ih0[H:2 * H] + b_hh0[H:2 * H])
    bih0 = bih0.at[0, GP:GP + H].set(b_ih0[2 * H:3 * H])
    # only the n-gate hidden bias stays on the recurrent side (inside r * (...)).
    bhh0n = b_hh0[2 * H:3 * H][None, :]                  # (1, H)

    # ---- layer 1: fused [input | recurrent] weight, LHS = [h0 | h1] (B, 2H) ----
    wih1_t = params['w_ih_l1'].T.astype(f32)             # (H, 3H)
    whh1_t = params['w_hh_l1'].T.astype(f32)             # (H, 3H)
    wl1 = jnp.zeros((2 * H, G3L1), f32)
    # rz block: gi and gh are summed directly -> both halves write the same columns.
    wl1 = wl1.at[0:H, 0:H].set(wih1_t[:, 0:H])
    wl1 = wl1.at[0:H, ZOFF:ZOFF + H].set(wih1_t[:, H:2 * H])
    wl1 = wl1.at[H:2 * H, 0:H].set(whh1_t[:, 0:H])
    wl1 = wl1.at[H:2 * H, ZOFF:ZOFF + H].set(whh1_t[:, H:2 * H])
    # gi_n block (input half only) and gh_n block (hidden half only) kept separate,
    # because r multiplies only the hidden-side n pre-activation.
    wl1 = wl1.at[0:H, GP:GP + H].set(wih1_t[:, 2 * H:3 * H])
    wl1 = wl1.at[H:2 * H, 2 * GP:2 * GP + H].set(whh1_t[:, 2 * H:3 * H])

    b_ih1 = params['b_ih_l1'].astype(f32)
    b_hh1 = params['b_hh_l1'].astype(f32)
    bl1 = jnp.zeros((1, G3L1), f32)
    bl1 = bl1.at[0, 0:H].set(b_ih1[0:H] + b_hh1[0:H])
    bl1 = bl1.at[0, ZOFF:ZOFF + H].set(b_ih1[H:2 * H] + b_hh1[H:2 * H])
    bl1 = bl1.at[0, GP:GP + H].set(b_ih1[2 * H:3 * H])            # gi_n bias
    bl1 = bl1.at[0, 2 * GP:2 * GP + H].set(b_hh1[2 * H:3 * H])    # gh_n bias

    return {
        'wih0': wih0, 'bih0': bih0, 'whh0': whh0, 'bhh0n': bhh0n,
        'wl1': wl1, 'bl1': bl1,
        'gamma': params['bn_gamma'][None, :].astype(f32),
        'beta': params['bn_beta'][None, :].astype(f32),
        'fcw': params['fc_w'].T.astype(f32),
        'fcb': params['fc_b'][None, :].astype(f32),
    }


# --------------------------------- forward wrapper ---------------------------------

@jax.jit
def base_rnn_forward(x, prep):
    """x: (B, T, I) float32; prep: output of prepare_params(). Returns (B, OUTPUT)."""
    # time-major flatten so the hoisted layer-0 input projection is one (T*B, I) matmul.
    x2d = jnp.transpose(x, (1, 0, 2)).reshape(SEQ * BATCH, INPUT_SIZE).astype(jnp.float32)

    args = (x2d, prep['wih0'], prep['bih0'], prep['whh0'], prep['bhh0n'],
            prep['wl1'], prep['bl1'], prep['gamma'], prep['beta'],
            prep['fcw'], prep['fcb'])
    vmem = pl.BlockSpec(memory_space=pltpu.MemorySpace.VMEM)
    return pl.pallas_call(
        base_rnn_kernel,
        out_shape=jax.ShapeDtypeStruct((BATCH, OUTPUT), jnp.float32),
        in_specs=[vmem] * len(args),
        out_specs=vmem,
        scratch_shapes=[pltpu.VMEM((SEQ, BATCH, G2), jnp.float32)],
    )(*args)


# ----------------------------- params & pure-JAX reference -----------------------------

def init_params(key):
    """Deterministic synthetic init mirroring PyTorch shapes (uniform +/- 1/sqrt(H))."""
    bound = 1.0 / (HIDDEN ** 0.5)
    keys = jax.random.split(key, 10)

    def u(k, shape):
        return jax.random.uniform(k, shape, jnp.float32, -bound, bound)

    return {
        'w_ih_l0': u(keys[0], (3 * HIDDEN, INPUT_SIZE)),
        'w_hh_l0': u(keys[1], (3 * HIDDEN, HIDDEN)),
        'b_ih_l0': u(keys[2], (3 * HIDDEN,)),
        'b_hh_l0': u(keys[3], (3 * HIDDEN,)),
        'w_ih_l1': u(keys[4], (3 * HIDDEN, HIDDEN)),
        'w_hh_l1': u(keys[5], (3 * HIDDEN, HIDDEN)),
        'b_ih_l1': u(keys[6], (3 * HIDDEN,)),
        'b_hh_l1': u(keys[7], (3 * HIDDEN,)),
        'bn_gamma': jnp.ones((HIDDEN,), jnp.float32),
        'bn_beta': jnp.zeros((HIDDEN,), jnp.float32),
        'fc_w': u(keys[8], (OUTPUT, HIDDEN)),
        'fc_b': u(keys[9], (OUTPUT,)),
    }


def base_rnn_reference(x, params):
    """Pure-JAX reference of the same forward (PyTorch GRU gate order r, z, n)."""
    B = x.shape[0]
    h0 = jnp.zeros((B, HIDDEN), jnp.float32)
    h1 = jnp.zeros((B, HIDDEN), jnp.float32)

    def cell(xt, h, w_ih, w_hh, b_ih, b_hh):
        gi = xt @ w_ih.T + b_ih
        gh = h @ w_hh.T + b_hh
        r = jax.nn.sigmoid(gi[:, :HIDDEN] + gh[:, :HIDDEN])
        z = jax.nn.sigmoid(gi[:, HIDDEN:2 * HIDDEN] + gh[:, HIDDEN:2 * HIDDEN])
        n = jnp.tanh(gi[:, 2 * HIDDEN:] + r * gh[:, 2 * HIDDEN:])
        return (1.0 - z) * n + z * h

    for t in range(SEQ):
        xt = x[:, t, :]
        h0 = cell(xt, h0, params['w_ih_l0'], params['w_hh_l0'],
                  params['b_ih_l0'], params['b_hh_l0'])
        h1 = cell(h0, h1, params['w_ih_l1'], params['w_hh_l1'],
                  params['b_ih_l1'], params['b_hh_l1'])
    mean = jnp.mean(h1, axis=0, keepdims=True)
    var = jnp.mean((h1 - mean) ** 2, axis=0, keepdims=True)
    bn = (h1 - mean) / jnp.sqrt(var + BN_EPS) * params['bn_gamma'] + params['bn_beta']
    return bn @ params['fc_w'].T + params['fc_b']


if __name__ == "__main__":
    key = jax.random.PRNGKey(0)
    kx, kp = jax.random.split(key)
    x = jax.random.normal(kx, (BATCH, SEQ, INPUT_SIZE), jnp.float32)
    params = init_params(kp)

    prep = prepare_params(params)          # one-time weight prep (not on the per-call path)
    out = base_rnn_forward(x, prep)
    out = jax.block_until_ready(out)

    ref = base_rnn_reference(x, params)
    assert out.shape == (BATCH, OUTPUT)
    assert jnp.allclose(out, ref, atol=2e-4, rtol=2e-4)

    print("KERNEL_OK")
</pallas_src>

<mosaic_0001>
module attributes {stable_mosaic.version = 11 : i64} {
  func.func @base_rnn_kernel(%arg0: memref<64x16xf32, #tpu.memory_space<vmem>>, %arg1: memref<16x256xf32, #tpu.memory_space<vmem>>, %arg2: memref<1x256xf32, #tpu.memory_space<vmem>>, %arg3: memref<32x256xf32, #tpu.memory_space<vmem>>, %arg4: memref<1x32xf32, #tpu.memory_space<vmem>>, %arg5: memref<64x384xf32, #tpu.memory_space<vmem>>, %arg6: memref<1x384xf32, #tpu.memory_space<vmem>>, %arg7: memref<1x32xf32, #tpu.memory_space<vmem>>, %arg8: memref<1x32xf32, #tpu.memory_space<vmem>>, %arg9: memref<32x4xf32, #tpu.memory_space<vmem>>, %arg10: memref<1x4xf32, #tpu.memory_space<vmem>>, %arg11: memref<8x4xf32, #tpu.memory_space<vmem>>, %arg12: memref<8x8x256xf32, #tpu.memory_space<vmem>>) attributes {dimension_semantics = [], scalar_prefetch = 0 : i64, scratch_operands = 1 : i64, tpu.core_type = #tpu.core_type<tc>} {
    %c0 = arith.constant 0 : index
    %c0_0 = arith.constant 0 : index
    %0 = vector.load %arg0[%c0, %c0_0] : memref<64x16xf32, #tpu.memory_space<vmem>>, vector<64x16xf32>
    %c0_1 = arith.constant 0 : index
    %c0_2 = arith.constant 0 : index
    %1 = vector.load %arg1[%c0_1, %c0_2] : memref<16x256xf32, #tpu.memory_space<vmem>>, vector<16x256xf32>
    %cst = arith.constant dense<0.000000e+00> : vector<64x256xf32>
    %2 = tpu.matmul %0, %1, %cst {dimension_numbers = #tpu.dot_dimension_numbers<[1], [0], [0], [1], [0, 0, 1, 1], [], []>} : vector<64x16xf32>, vector<16x256xf32>, vector<64x256xf32> -> vector<64x256xf32>
    %c0_3 = arith.constant 0 : index
    %c0_4 = arith.constant 0 : index
    %3 = vector.load %arg2[%c0_3, %c0_4] : memref<1x256xf32, #tpu.memory_space<vmem>>, vector<1x256xf32>
    %4 = vector.broadcast %3 : vector<1x256xf32> to vector<64x256xf32>
    %5 = arith.addf %2, %4 : vector<64x256xf32>
    %6 = vector.shape_cast %5 : vector<64x256xf32> to vector<8x8x256xf32>
    %c0_5 = arith.constant 0 : index
    %c0_6 = arith.constant 0 : index
    %c0_7 = arith.constant 0 : index
    %7 = vector.load %arg12[%c0_5, %c0_6, %c0_7] : memref<8x8x256xf32, #tpu.memory_space<vmem>>, vector<8x8x256xf32>
    tpu.vector_store %arg12[%c0_5, %c0_6, %c0_7], %6 {strides = array<i32>} : memref<8x8x256xf32, #tpu.memory_space<vmem>>, vector<8x8x256xf32>,
    %c0_8 = arith.constant 0 : index
    %c0_9 = arith.constant 0 : index
    %8 = vector.load %arg3[%c0_8, %c0_9] : memref<32x256xf32, #tpu.memory_space<vmem>>, vector<32x256xf32>
    %c0_10 = arith.constant 0 : index
    %c0_11 = arith.constant 0 : index
    %9 = vector.load %arg5[%c0_10, %c0_11] : memref<64x384xf32, #tpu.memory_space<vmem>>, vector<64x384xf32>
    %c0_12 = arith.constant 0 : index
    %c0_13 = arith.constant 0 : index
    %10 = vector.load %arg4[%c0_12, %c0_13] : memref<1x32xf32, #tpu.memory_space<vmem>>, vector<1x32xf32>
    %11 = vector.shape_cast %10 : vector<1x32xf32> to vector<1x32xf32>
    %12 = vector.broadcast %11 : vector<1x32xf32> to vector<8x32xf32>
    %c0_14 = arith.constant 0 : index
    %c0_15 = arith.constant 0 : index
    %13 = vector.load %arg6[%c0_14, %c0_15] : memref<1x384xf32, #tpu.memory_space<vmem>>, vector<1x384xf32>
    %14 = vector.shape_cast %13 : vector<1x384xf32> to vector<1x384xf32>
    %15 = vector.broadcast %14 : vector<1x384xf32> to vector<8x384xf32>
    %cst_16 = arith.constant 0.000000e+00 : f32
    %16 = vector.broadcast %cst_16 : f32 to vector<8x32xf32>
    %cst_17 = arith.constant 0.000000e+00 : f32
    %17 = vector.broadcast %cst_17 : f32 to vector<8x32xf32>
    %c0_18 = arith.constant 0 : index
    %c0_19 = arith.constant 0 : index
    %c0_20 = arith.constant 0 : index
    %18 = vector.load %arg12[%c0_18, %c0_19, %c0_20] : memref<8x8x256xf32, #tpu.memory_space<vmem>>, vector<1x8x256xf32>
    %19 = vector.shape_cast %18 : vector<1x8x256xf32> to vector<8x256xf32>
    %cst_21 = arith.constant dense<0.000000e+00> : vector<8x256xf32>
    %20 = tpu.matmul %16, %8, %cst_21 {dimension_numbers = #tpu.dot_dimension_numbers<[1], [0], [0], [1], [0, 0, 1, 1], [], []>} : vector<8x32xf32>, vector<32x256xf32>, vector<8x256xf32> -> vector<8x256xf32>
    %21 = vector.extract_strided_slice %19 {offsets = [0, 0], sizes = [8, 128], strides = [1, 1]} : vector<8x256xf32> to vector<8x128xf32>
    %22 = vector.extract_strided_slice %20 {offsets = [0, 0], sizes = [8, 128], strides = [1, 1]} : vector<8x256xf32> to vector<8x128xf32>
    %23 = arith.addf %21, %22 : vector<8x128xf32>
    %cst_22 = arith.constant 5.000000e-01 : f32
    %24 = vector.broadcast %cst_22 : f32 to vector<8x128xf32>
    %25 = arith.mulf %24, %23 : vector<8x128xf32>
    %26 = math.tanh %25 : vector<8x128xf32>
    %cst_23 = arith.constant 1.000000e+00 : f32
    %27 = vector.broadcast %cst_23 : f32 to vector<8x128xf32>
    %28 = arith.addf %26, %27 : vector<8x128xf32>
    %cst_24 = arith.constant 5.000000e-01 : f32
    %29 = vector.broadcast %cst_24 : f32 to vector<8x128xf32>
    %30 = arith.mulf %29, %28 : vector<8x128xf32>
    %31 = vector.extract_strided_slice %30 {offsets = [0, 0], sizes = [8, 32], strides = [1, 1]} : vector<8x128xf32> to vector<8x32xf32>
    %32 = vector.extract_strided_slice %30 {offsets = [0, 64], sizes = [8, 32], strides = [1, 1]} : vector<8x128xf32> to vector<8x32xf32>
    %33 = vector.extract_strided_slice %19 {offsets = [0, 128], sizes = [8, 32], strides = [1, 1]} : vector<8x256xf32> to vector<8x32xf32>
    %34 = vector.extract_strided_slice %20 {offsets = [0, 128], sizes = [8, 32], strides = [1, 1]} : vector<8x256xf32> to vector<8x32xf32>
    %35 = arith.addf %34, %12 : vector<8x32xf32>
    %36 = arith.mulf %31, %35 : vector<8x32xf32>
    %37 = arith.addf %33, %36 : vector<8x32xf32>
    %38 = math.tanh %37 : vector<8x32xf32>
    %cst_25 = arith.constant 1.000000e+00 : f32
    %39 = vector.broadcast %cst_25 : f32 to vector<8x32xf32>
    %40 = arith.subf %39, %32 : vector<8x32xf32>
    %41 = arith.mulf %40, %38 : vector<8x32xf32>
    %42 = arith.mulf %32, %16 : vector<8x32xf32>
    %43 = arith.addf %41, %42 : vector<8x32xf32>
    %44 = tpu.concatenate %43, %17 in 1 : vector<8x32xf32>, vector<8x32xf32> -> vector<8x64xf32>
    %cst_26 = arith.constant dense<0.000000e+00> : vector<8x384xf32>
    %45 = tpu.matmul %44, %9, %cst_26 {dimension_numbers = #tpu.dot_dimension_numbers<[1], [0], [0], [1], [0, 0, 1, 1], [], []>} : vector<8x64xf32>, vector<64x384xf32>, vector<8x384xf32> -> vector<8x384xf32>
    %46 = arith.addf %45, %15 : vector<8x384xf32>
    %47 = vector.extract_strided_slice %46 {offsets = [0, 0], sizes = [8, 128], strides = [1, 1]} : vector<8x384xf32> to vector<8x128xf32>
    %cst_27 = arith.constant 5.000000e-01 : f32
    %48 = vector.broadcast %cst_27 : f32 to vector<8x128xf32>
    %49 = arith.mulf %48, %47 : vector<8x128xf32>
    %50 = math.tanh %49 : vector<8x128xf32>
    %cst_28 = arith.constant 1.000000e+00 : f32
    %51 = vector.broadcast %cst_28 : f32 to vector<8x128xf32>
    %52 = arith.addf %50, %51 : vector<8x128xf32>
    %cst_29 = arith.constant 5.000000e-01 : f32
    %53 = vector.broadcast %cst_29 : f32 to vector<8x128xf32>
    %54 = arith.mulf %53, %52 : vector<8x128xf32>
    %55 = vector.extract_strided_slice %54 {offsets = [0, 0], sizes = [8, 32], strides = [1, 1]} : vector<8x128xf32> to vector<8x32xf32>
    %56 = vector.extract_strided_slice %54 {offsets = [0, 64], sizes = [8, 32], strides = [1, 1]} : vector<8x128xf32> to vector<8x32xf32>
    %57 = vector.extract_strided_slice %46 {offsets = [0, 128], sizes = [8, 32], strides = [1, 1]} : vector<8x384xf32> to vector<8x32xf32>
    %58 = vector.extract_strided_slice %46 {offsets = [0, 256], sizes = [8, 32], strides = [1, 1]} : vector<8x384xf32> to vector<8x32xf32>
    %59 = arith.mulf %55, %58 : vector<8x32xf32>
    %60 = arith.addf %57, %59 : vector<8x32xf32>
    %61 = math.tanh %60 : vector<8x32xf32>
    %cst_30 = arith.constant 1.000000e+00 : f32
    %62 = vector.broadcast %cst_30 : f32 to vector<8x32xf32>
    %63 = arith.subf %62, %56 : vector<8x32xf32>
    %64 = arith.mulf %63, %61 : vector<8x32xf32>
    %65 = arith.mulf %56, %17 : vector<8x32xf32>
    %66 = arith.addf %64, %65 : vector<8x32xf32>
    %c1 = arith.constant 1 : index
    %c0_31 = arith.constant 0 : index
    %c0_32 = arith.constant 0 : index
    %67 = vector.load %arg12[%c1, %c0_31, %c0_32] : memref<8x8x256xf32, #tpu.memory_space<vmem>>, vector<1x8x256xf32>
    %68 = vector.shape_cast %67 : vector<1x8x256xf32> to vector<8x256xf32>
    %cst_33 = arith.constant dense<0.000000e+00> : vector<8x256xf32>
    %69 = tpu.matmul %43, %8, %cst_33 {dimension_numbers = #tpu.dot_dimension_numbers<[1], [0], [0], [1], [0, 0, 1, 1], [], []>} : vector<8x32xf32>, vector<32x256xf32>, vector<8x256xf32> -> vector<8x256xf32>
    %70 = vector.extract_strided_slice %68 {offsets = [0, 0], sizes = [8, 128], strides = [1, 1]} : vector<8x256xf32> to vector<8x128xf32>
    %71 = vector.extract_strided_slice %69 {offsets = [0, 0], sizes = [8, 128], strides = [1, 1]} : vector<8x256xf32> to vector<8x128xf32>
    %72 = arith.addf %70, %71 : vector<8x128xf32>
    %cst_34 = arith.constant 5.000000e-01 : f32
    %73 = vector.broadcast %cst_34 : f32 to vector<8x128xf32>
    %74 = arith.mulf %73, %72 : vector<8x128xf32>
    %75 = math.tanh %74 : vector<8x128xf32>
    %cst_35 = arith.constant 1.000000e+00 : f32
    %76 = vector.broadcast %cst_35 : f32 to vector<8x128xf32>
    %77 = arith.addf %75, %76 : vector<8x128xf32>
    %cst_36 = arith.constant 5.000000e-01 : f32
    %78 = vector.broadcast %cst_36 : f32 to vector<8x128xf32>
    %79 = arith.mulf %78, %77 : vector<8x128xf32>
    %80 = vector.extract_strided_slice %79 {offsets = [0, 0], sizes = [8, 32], strides = [1, 1]} : vector<8x128xf32> to vector<8x32xf32>
    %81 = vector.extract_strided_slice %79 {offsets = [0, 64], sizes = [8, 32], strides = [1, 1]} : vector<8x128xf32> to vector<8x32xf32>
    %82 = vector.extract_strided_slice %68 {offsets = [0, 128], sizes = [8, 32], strides = [1, 1]} : vector<8x256xf32> to vector<8x32xf32>
    %83 = vector.extract_strided_slice %69 {offsets = [0, 128], sizes = [8, 32], strides = [1, 1]} : vector<8x256xf32> to vector<8x32xf32>
    %84 = arith.addf %83, %12 : vector<8x32xf32>
    %85 = arith.mulf %80, %84 : vector<8x32xf32>
    %86 = arith.addf %82, %85 : vector<8x32xf32>
    %87 = math.tanh %86 : vector<8x32xf32>
    %cst_37 = arith.constant 1.000000e+00 : f32
    %88 = vector.broadcast %cst_37 : f32 to vector<8x32xf32>
    %89 = arith.subf %88, %81 : vector<8x32xf32>
    %90 = arith.mulf %89, %87 : vector<8x32xf32>
    %91 = arith.mulf %81, %43 : vector<8x32xf32>
    %92 = arith.addf %90, %91 : vector<8x32xf32>
    %93 = tpu.concatenate %92, %66 in 1 : vector<8x32xf32>, vector<8x32xf32> -> vector<8x64xf32>
    %cst_38 = arith.constant dense<0.000000e+00> : vector<8x384xf32>
    %94 = tpu.matmul %93, %9, %cst_38 {dimension_numbers = #tpu.dot_dimension_numbers<[1], [0], [0], [1], [0, 0, 1, 1], [], []>} : vector<8x64xf32>, vector<64x384xf32>, vector<8x384xf32> -> vector<8x384xf32>
    %95 = arith.addf %94, %15 : vector<8x384xf32>
    %96 = vector.extract_strided_slice %95 {offsets = [0, 0], sizes = [8, 128], strides = [1, 1]} : vector<8x384xf32> to vector<8x128xf32>
    %cst_39 = arith.constant 5.000000e-01 : f32
    %97 = vector.broadcast %cst_39 : f32 to vector<8x128xf32>
    %98 = arith.mulf %97, %96 : vector<8x128xf32>
    %99 = math.tanh %98 : vector<8x128xf32>
    %cst_40 = arith.constant 1.000000e+00 : f32
    %100 = vector.broadcast %cst_40 : f32 to vector<8x128xf32>
    %101 = arith.addf %99, %100 : vector<8x128xf32>
    %cst_41 = arith.constant 5.000000e-01 : f32
    %102 = vector.broadcast %cst_41 : f32 to vector<8x128xf32>
    %103 = arith.mulf %102, %101 : vector<8x128xf32>
    %104 = vector.extract_strided_slice %103 {offsets = [0, 0], sizes = [8, 32], strides = [1, 1]} : vector<8x128xf32> to vector<8x32xf32>
    %105 = vector.extract_strided_slice %103 {offsets = [0, 64], sizes = [8, 32], strides = [1, 1]} : vector<8x128xf32> to vector<8x32xf32>
    %106 = vector.extract_strided_slice %95 {offsets = [0, 128], sizes = [8, 32], strides = [1, 1]} : vector<8x384xf32> to vector<8x32xf32>
    %107 = vector.extract_strided_slice %95 {offsets = [0, 256], sizes = [8, 32], strides = [1, 1]} : vector<8x384xf32> to vector<8x32xf32>
    %108 = arith.mulf %104, %107 : vector<8x32xf32>
    %109 = arith.addf %106, %108 : vector<8x32xf32>
    %110 = math.tanh %109 : vector<8x32xf32>
    %cst_42 = arith.constant 1.000000e+00 : f32
    %111 = vector.broadcast %cst_42 : f32 to vector<8x32xf32>
    %112 = arith.subf %111, %105 : vector<8x32xf32>
    %113 = arith.mulf %112, %110 : vector<8x32xf32>
    %114 = arith.mulf %105, %66 : vector<8x32xf32>
    %115 = arith.addf %113, %114 : vector<8x32xf32>
    %c2 = arith.constant 2 : index
    %c0_43 = arith.constant 0 : index
    %c0_44 = arith.constant 0 : index
    %116 = vector.load %arg12[%c2, %c0_43, %c0_44] : memref<8x8x256xf32, #tpu.memory_space<vmem>>, vector<1x8x256xf32>
    %117 = vector.shape_cast %116 : vector<1x8x256xf32> to vector<8x256xf32>
    %cst_45 = arith.constant dense<0.000000e+00> : vector<8x256xf32>
    %118 = tpu.matmul %92, %8, %cst_45 {dimension_numbers = #tpu.dot_dimension_numbers<[1], [0], [0], [1], [0, 0, 1, 1], [], []>} : vector<8x32xf32>, vector<32x256xf32>, vector<8x256xf32> -> vector<8x256xf32>
    %119 = vector.extract_strided_slice %117 {offsets = [0, 0], sizes = [8, 128], strides = [1, 1]} : vector<8x256xf32> to vector<8x128xf32>
    %120 = vector.extract_strided_slice %118 {offsets = [0, 0], sizes = [8, 128], strides = [1, 1]} : vector<8x256xf32> to vector<8x128xf32>
    %121 = arith.addf %119, %120 : vector<8x128xf32>
    %cst_46 = arith.constant 5.000000e-01 : f32
    %122 = vector.broadcast %cst_46 : f32 to vector<8x128xf32>
    %123 = arith.mulf %122, %121 : vector<8x128xf32>
    %124 = math.tanh %123 : vector<8x128xf32>
    %cst_47 = arith.constant 1.000000e+00 : f32
    %125 = vector.broadcast %cst_47 : f32 to vector<8x128xf32>
    %126 = arith.addf %124, %125 : vector<8x128xf32>
    %cst_48 = arith.constant 5.000000e-01 : f32
    %127 = vector.broadcast %cst_48 : f32 to vector<8x128xf32>
    %128 = arith.mulf %127, %126 : vector<8x128xf32>
    %129 = vector.extract_strided_slice %128 {offsets = [0, 0], sizes = [8, 32], strides = [1, 1]} : vector<8x128xf32> to vector<8x32xf32>
    %130 = vector.extract_strided_slice %128 {offsets = [0, 64], sizes = [8, 32], strides = [1, 1]} : vector<8x128xf32> to vector<8x32xf32>
    %131 = vector.extract_strided_slice %117 {offsets = [0, 128], sizes = [8, 32], strides = [1, 1]} : vector<8x256xf32> to vector<8x32xf32>
    %132 = vector.extract_strided_slice %118 {offsets = [0, 128], sizes = [8, 32], strides = [1, 1]} : vector<8x256xf32> to vector<8x32xf32>
    %133 = arith.addf %132, %12 : vector<8x32xf32>
    %134 = arith.mulf %129, %133 : vector<8x32xf32>
    %135 = arith.addf %131, %134 : vector<8x32xf32>
    %136 = math.tanh %135 : vector<8x32xf32>
    %cst_49 = arith.constant 1.000000e+00 : f32
    %137 = vector.broadcast %cst_49 : f32 to vector<8x32xf32>
    %138 = arith.subf %137, %130 : vector<8x32xf32>
    %139 = arith.mulf %138, %136 : vector<8x32xf32>
    %140 = arith.mulf %130, %92 : vector<8x32xf32>
    %141 = arith.addf %139, %140 : vector<8x32xf32>
    %142 = tpu.concatenate %141, %115 in 1 : vector<8x32xf32>, vector<8x32xf32> -> vector<8x64xf32>
    %cst_50 = arith.constant dense<0.000000e+00> : vector<8x384xf32>
    %143 = tpu.matmul %142, %9, %cst_50 {dimension_numbers = #tpu.dot_dimension_numbers<[1], [0], [0], [1], [0, 0, 1, 1], [], []>} : vector<8x64xf32>, vector<64x384xf32>, vector<8x384xf32> -> vector<8x384xf32>
    %144 = arith.addf %143, %15 : vector<8x384xf32>
    %145 = vector.extract_strided_slice %144 {offsets = [0, 0], sizes = [8, 128], strides = [1, 1]} : vector<8x384xf32> to vector<8x128xf32>
    %cst_51 = arith.constant 5.000000e-01 : f32
    %146 = vector.broadcast %cst_51 : f32 to vector<8x128xf32>
    %147 = arith.mulf %146, %145 : vector<8x128xf32>
    %148 = math.tanh %147 : vector<8x128xf32>
    %cst_52 = arith.constant 1.000000e+00 : f32
    %149 = vector.broadcast %cst_52 : f32 to vector<8x128xf32>
    %150 = arith.addf %148, %149 : vector<8x128xf32>
    %cst_53 = arith.constant 5.000000e-01 : f32
    %151 = vector.broadcast %cst_53 : f32 to vector<8x128xf32>
    %152 = arith.mulf %151, %150 : vector<8x128xf32>
    %153 = vector.extract_strided_slice %152 {offsets = [0, 0], sizes = [8, 32], strides = [1, 1]} : vector<8x128xf32> to vector<8x32xf32>
    %154 = vector.extract_strided_slice %152 {offsets = [0, 64], sizes = [8, 32], strides = [1, 1]} : vector<8x128xf32> to vector<8x32xf32>
    %155 = vector.extract_strided_slice %144 {offsets = [0, 128], sizes = [8, 32], strides = [1, 1]} : vector<8x384xf32> to vector<8x32xf32>
    %156 = vector.extract_strided_slice %144 {offsets = [0, 256], sizes = [8, 32], strides = [1, 1]} : vector<8x384xf32> to vector<8x32xf32>
    %157 = arith.mulf %153, %156 : vector<8x32xf32>
    %158 = arith.addf %155, %157 : vector<8x32xf32>
    %159 = math.tanh %158 : vector<8x32xf32>
    %cst_54 = arith.constant 1.000000e+00 : f32
    %160 = vector.broadcast %cst_54 : f32 to vector<8x32xf32>
    %161 = arith.subf %160, %154 : vector<8x32xf32>
    %162 = arith.mulf %161, %159 : vector<8x32xf32>
    %163 = arith.mulf %154, %115 : vector<8x32xf32>
    %164 = arith.addf %162, %163 : vector<8x32xf32>
    %c3 = arith.constant 3 : index
    %c0_55 = arith.constant 0 : index
    %c0_56 = arith.constant 0 : index
    %165 = vector.load %arg12[%c3, %c0_55, %c0_56] : memref<8x8x256xf32, #tpu.memory_space<vmem>>, vector<1x8x256xf32>
    %166 = vector.shape_cast %165 : vector<1x8x256xf32> to vector<8x256xf32>
    %cst_57 = arith.constant dense<0.000000e+00> : vector<8x256xf32>
    %167 = tpu.matmul %141, %8, %cst_57 {dimension_numbers = #tpu.dot_dimension_numbers<[1], [0], [0], [1], [0, 0, 1, 1], [], []>} : vector<8x32xf32>, vector<32x256xf32>, vector<8x256xf32> -> vector<8x256xf32>
    %168 = vector.extract_strided_slice %166 {offsets = [0, 0], sizes = [8, 128], strides = [1, 1]} : vector<8x256xf32> to vector<8x128xf32>
    %169 = vector.extract_strided_slice %167 {offsets = [0, 0], sizes = [8, 128], strides = [1, 1]} : vector<8x256xf32> to vector<8x128xf32>
    %170 = arith.addf %168, %169 : vector<8x128xf32>
    %cst_58 = arith.constant 5.000000e-01 : f32
    %171 = vector.broadcast %cst_58 : f32 to vector<8x128xf32>
    %172 = arith.mulf %171, %170 : vector<8x128xf32>
    %173 = math.tanh %172 : vector<8x128xf32>
    %cst_59 = arith.constant 1.000000e+00 : f32
    %174 = vector.broadcast %cst_59 : f32 to vector<8x128xf32>
    %175 = arith.addf %173, %174 : vector<8x128xf32>
    %cst_60 = arith.constant 5.000000e-01 : f32
    %176 = vector.broadcast %cst_60 : f32 to vector<8x128xf32>
    %177 = arith.mulf %176, %175 : vector<8x128xf32>
    %178 = vector.extract_strided_slice %177 {offsets = [0, 0], sizes = [8, 32], strides = [1, 1]} : vector<8x128xf32> to vector<8x32xf32>
    %179 = vector.extract_strided_slice %177 {offsets = [0, 64], sizes = [8, 32], strides = [1, 1]} : vector<8x128xf32> to vector<8x32xf32>
    %180 = vector.extract_strided_slice %166 {offsets = [0, 128], sizes = [8, 32], strides = [1, 1]} : vector<8x256xf32> to vector<8x32xf32>
    %181 = vector.extract_strided_slice %167 {offsets = [0, 128], sizes = [8, 32], strides = [1, 1]} : vector<8x256xf32> to vector<8x32xf32>
    %182 = arith.addf %181, %12 : vector<8x32xf32>
    %183 = arith.mulf %178, %182 : vector<8x32xf32>
    %184 = arith.addf %180, %183 : vector<8x32xf32>
    %185 = math.tanh %184 : vector<8x32xf32>
    %cst_61 = arith.constant 1.000000e+00 : f32
    %186 = vector.broadcast %cst_61 : f32 to vector<8x32xf32>
    %187 = arith.subf %186, %179 : vector<8x32xf32>
    %188 = arith.mulf %187, %185 : vector<8x32xf32>
    %189 = arith.mulf %179, %141 : vector<8x32xf32>
    %190 = arith.addf %188, %189 : vector<8x32xf32>
    %191 = tpu.concatenate %190, %164 in 1 : vector<8x32xf32>, vector<8x32xf32> -> vector<8x64xf32>
    %cst_62 = arith.constant dense<0.000000e+00> : vector<8x384xf32>
    %192 = tpu.matmul %191, %9, %cst_62 {dimension_numbers = #tpu.dot_dimension_numbers<[1], [0], [0], [1], [0, 0, 1, 1], [], []>} : vector<8x64xf32>, vector<64x384xf32>, vector<8x384xf32> -> vector<8x384xf32>
    %193 = arith.addf %192, %15 : vector<8x384xf32>
    %194 = vector.extract_strided_slice %193 {offsets = [0, 0], sizes = [8, 128], strides = [1, 1]} : vector<8x384xf32> to vector<8x128xf32>
    %cst_63 = arith.constant 5.000000e-01 : f32
    %195 = vector.broadcast %cst_63 : f32 to vector<8x128xf32>
    %196 = arith.mulf %195, %194 : vector<8x128xf32>
    %197 = math.tanh %196 : vector<8x128xf32>
    %cst_64 = arith.constant 1.000000e+00 : f32
    %198 = vector.broadcast %cst_64 : f32 to vector<8x128xf32>
    %199 = arith.addf %197, %198 : vector<8x128xf32>
    %cst_65 = arith.constant 5.000000e-01 : f32
    %200 = vector.broadcast %cst_65 : f32 to vector<8x128xf32>
    %201 = arith.mulf %200, %199 : vector<8x128xf32>
    %202 = vector.extract_strided_slice %201 {offsets = [0, 0], sizes = [8, 32], strides = [1, 1]} : vector<8x128xf32> to vector<8x32xf32>
    %203 = vector.extract_strided_slice %201 {offsets = [0, 64], sizes = [8, 32], strides = [1, 1]} : vector<8x128xf32> to vector<8x32xf32>
    %204 = vector.extract_strided_slice %193 {offsets = [0, 128], sizes = [8, 32], strides = [1, 1]} : vector<8x384xf32> to vector<8x32xf32>
    %205 = vector.extract_strided_slice %193 {offsets = [0, 256], sizes = [8, 32], strides = [1, 1]} : vector<8x384xf32> to vector<8x32xf32>
    %206 = arith.mulf %202, %205 : vector<8x32xf32>
    %207 = arith.addf %204, %206 : vector<8x32xf32>
    %208 = math.tanh %207 : vector<8x32xf32>
    %cst_66 = arith.constant 1.000000e+00 : f32
    %209 = vector.broadcast %cst_66 : f32 to vector<8x32xf32>
    %210 = arith.subf %209, %203 : vector<8x32xf32>
    %211 = arith.mulf %210, %208 : vector<8x32xf32>
    %212 = arith.mulf %203, %164 : vector<8x32xf32>
    %213 = arith.addf %211, %212 : vector<8x32xf32>
    %c4 = arith.constant 4 : index
    %c0_67 = arith.constant 0 : index
    %c0_68 = arith.constant 0 : index
    %214 = vector.load %arg12[%c4, %c0_67, %c0_68] : memref<8x8x256xf32, #tpu.memory_space<vmem>>, vector<1x8x256xf32>
    %215 = vector.shape_cast %214 : vector<1x8x256xf32> to vector<8x256xf32>
    %cst_69 = arith.constant dense<0.000000e+00> : vector<8x256xf32>
    %216 = tpu.matmul %190, %8, %cst_69 {dimension_numbers = #tpu.dot_dimension_numbers<[1], [0], [0], [1], [0, 0, 1, 1], [], []>} : vector<8x32xf32>, vector<32x256xf32>, vector<8x256xf32> -> vector<8x256xf32>
    %217 = vector.extract_strided_slice %215 {offsets = [0, 0], sizes = [8, 128], strides = [1, 1]} : vector<8x256xf32> to vector<8x128xf32>
    %218 = vector.extract_strided_slice %216 {offsets = [0, 0], sizes = [8, 128], strides = [1, 1]} : vector<8x256xf32> to vector<8x128xf32>
    %219 = arith.addf %217, %218 : vector<8x128xf32>
    %cst_70 = arith.constant 5.000000e-01 : f32
    %220 = vector.broadcast %cst_70 : f32 to vector<8x128xf32>
    %221 = arith.mulf %220, %219 : vector<8x128xf32>
    %222 = math.tanh %221 : vector<8x128xf32>
    %cst_71 = arith.constant 1.000000e+00 : f32
    %223 = vector.broadcast %cst_71 : f32 to vector<8x128xf32>
    %224 = arith.addf %222, %223 : vector<8x128xf32>
    %cst_72 = arith.constant 5.000000e-01 : f32
    %225 = vector.broadcast %cst_72 : f32 to vector<8x128xf32>
    %226 = arith.mulf %225, %224 : vector<8x128xf32>
    %227 = vector.extract_strided_slice %226 {offsets = [0, 0], sizes = [8, 32], strides = [1, 1]} : vector<8x128xf32> to vector<8x32xf32>
    %228 = vector.extract_strided_slice %226 {offsets = [0, 64], sizes = [8, 32], strides = [1, 1]} : vector<8x128xf32> to vector<8x32xf32>
    %229 = vector.extract_strided_slice %215 {offsets = [0, 128], sizes = [8, 32], strides = [1, 1]} : vector<8x256xf32> to vector<8x32xf32>
    %230 = vector.extract_strided_slice %216 {offsets = [0, 128], sizes = [8, 32], strides = [1, 1]} : vector<8x256xf32> to vector<8x32xf32>
    %231 = arith.addf %230, %12 : vector<8x32xf32>
    %232 = arith.mulf %227, %231 : vector<8x32xf32>
    %233 = arith.addf %229, %232 : vector<8x32xf32>
    %234 = math.tanh %233 : vector<8x32xf32>
    %cst_73 = arith.constant 1.000000e+00 : f32
    %235 = vector.broadcast %cst_73 : f32 to vector<8x32xf32>
    %236 = arith.subf %235, %228 : vector<8x32xf32>
    %237 = arith.mulf %236, %234 : vector<8x32xf32>
    %238 = arith.mulf %228, %190 : vector<8x32xf32>
    %239 = arith.addf %237, %238 : vector<8x32xf32>
    %240 = tpu.concatenate %239, %213 in 1 : vector<8x32xf32>, vector<8x32xf32> -> vector<8x64xf32>
    %cst_74 = arith.constant dense<0.000000e+00> : vector<8x384xf32>
    %241 = tpu.matmul %240, %9, %cst_74 {dimension_numbers = #tpu.dot_dimension_numbers<[1], [0], [0], [1], [0, 0, 1, 1], [], []>} : vector<8x64xf32>, vector<64x384xf32>, vector<8x384xf32> -> vector<8x384xf32>
    %242 = arith.addf %241, %15 : vector<8x384xf32>
    %243 = vector.extract_strided_slice %242 {offsets = [0, 0], sizes = [8, 128], strides = [1, 1]} : vector<8x384xf32> to vector<8x128xf32>
    %cst_75 = arith.constant 5.000000e-01 : f32
    %244 = vector.broadcast %cst_75 : f32 to vector<8x128xf32>
    %245 = arith.mulf %244, %243 : vector<8x128xf32>
    %246 = math.tanh %245 : vector<8x128xf32>
    %cst_76 = arith.constant 1.000000e+00 : f32
    %247 = vector.broadcast %cst_76 : f32 to vector<8x128xf32>
    %248 = arith.addf %246, %247 : vector<8x128xf32>
    %cst_77 = arith.constant 5.000000e-01 : f32
    %249 = vector.broadcast %cst_77 : f32 to vector<8x128xf32>
    %250 = arith.mulf %249, %248 : vector<8x128xf32>
    %251 = vector.extract_strided_slice %250 {offsets = [0, 0], sizes = [8, 32], strides = [1, 1]} : vector<8x128xf32> to vector<8x32xf32>
    %252 = vector.extract_strided_slice %250 {offsets = [0, 64], sizes = [8, 32], strides = [1, 1]} : vector<8x128xf32> to vector<8x32xf32>
    %253 = vector.extract_strided_slice %242 {offsets = [0, 128], sizes = [8, 32], strides = [1, 1]} : vector<8x384xf32> to vector<8x32xf32>
    %254 = vector.extract_strided_slice %242 {offsets = [0, 256], sizes = [8, 32], strides = [1, 1]} : vector<8x384xf32> to vector<8x32xf32>
    %255 = arith.mulf %251, %254 : vector<8x32xf32>
    %256 = arith.addf %253, %255 : vector<8x32xf32>
    %257 = math.tanh %256 : vector<8x32xf32>
    %cst_78 = arith.constant 1.000000e+00 : f32
    %258 = vector.broadcast %cst_78 : f32 to vector<8x32xf32>
    %259 = arith.subf %258, %252 : vector<8x32xf32>
    %260 = arith.mulf %259, %257 : vector<8x32xf32>
    %261 = arith.mulf %252, %213 : vector<8x32xf32>
    %262 = arith.addf %260, %261 : vector<8x32xf32>
    %c5 = arith.constant 5 : index
    %c0_79 = arith.constant 0 : index
    %c0_80 = arith.constant 0 : index
    %263 = vector.load %arg12[%c5, %c0_79, %c0_80] : memref<8x8x256xf32, #tpu.memory_space<vmem>>, vector<1x8x256xf32>
    %264 = vector.shape_cast %263 : vector<1x8x256xf32> to vector<8x256xf32>
    %cst_81 = arith.constant dense<0.000000e+00> : vector<8x256xf32>
    %265 = tpu.matmul %239, %8, %cst_81 {dimension_numbers = #tpu.dot_dimension_numbers<[1], [0], [0], [1], [0, 0, 1, 1], [], []>} : vector<8x32xf32>, vector<32x256xf32>, vector<8x256xf32> -> vector<8x256xf32>
    %266 = vector.extract_strided_slice %264 {offsets = [0, 0], sizes = [8, 128], strides = [1, 1]} : vector<8x256xf32> to vector<8x128xf32>
    %267 = vector.extract_strided_slice %265 {offsets = [0, 0], sizes = [8, 128], strides = [1, 1]} : vector<8x256xf32> to vector<8x128xf32>
    %268 = arith.addf %266, %267 : vector<8x128xf32>
    %cst_82 = arith.constant 5.000000e-01 : f32
    %269 = vector.broadcast %cst_82 : f32 to vector<8x128xf32>
    %270 = arith.mulf %269, %268 : vector<8x128xf32>
    %271 = math.tanh %270 : vector<8x128xf32>
    %cst_83 = arith.constant 1.000000e+00 : f32
    %272 = vector.broadcast %cst_83 : f32 to vector<8x128xf32>
    %273 = arith.addf %271, %272 : vector<8x128xf32>
    %cst_84 = arith.constant 5.000000e-01 : f32
    %274 = vector.broadcast %cst_84 : f32 to vector<8x128xf32>
    %275 = arith.mulf %274, %273 : vector<8x128xf32>
    %276 = vector.extract_strided_slice %275 {offsets = [0, 0], sizes = [8, 32], strides = [1, 1]} : vector<8x128xf32> to vector<8x32xf32>
    %277 = vector.extract_strided_slice %275 {offsets = [0, 64], sizes = [8, 32], strides = [1, 1]} : vector<8x128xf32> to vector<8x32xf32>
    %278 = vector.extract_strided_slice %264 {offsets = [0, 128], sizes = [8, 32], strides = [1, 1]} : vector<8x256xf32> to vector<8x32xf32>
    %279 = vector.extract_strided_slice %265 {offsets = [0, 128], sizes = [8, 32], strides = [1, 1]} : vector<8x256xf32> to vector<8x32xf32>
    %280 = arith.addf %279, %12 : vector<8x32xf32>
    %281 = arith.mulf %276, %280 : vector<8x32xf32>
    %282 = arith.addf %278, %281 : vector<8x32xf32>
    %283 = math.tanh %282 : vector<8x32xf32>
    %cst_85 = arith.constant 1.000000e+00 : f32
    %284 = vector.broadcast %cst_85 : f32 to vector<8x32xf32>
    %285 = arith.subf %284, %277 : vector<8x32xf32>
    %286 = arith.mulf %285, %283 : vector<8x32xf32>
    %287 = arith.mulf %277, %239 : vector<8x32xf32>
    %288 = arith.addf %286, %287 : vector<8x32xf32>
    %289 = tpu.concatenate %288, %262 in 1 : vector<8x32xf32>, vector<8x32xf32> -> vector<8x64xf32>
    %cst_86 = arith.constant dense<0.000000e+00> : vector<8x384xf32>
    %290 = tpu.matmul %289, %9, %cst_86 {dimension_numbers = #tpu.dot_dimension_numbers<[1], [0], [0], [1], [0, 0, 1, 1], [], []>} : vector<8x64xf32>, vector<64x384xf32>, vector<8x384xf32> -> vector<8x384xf32>
    %291 = arith.addf %290, %15 : vector<8x384xf32>
    %292 = vector.extract_strided_slice %291 {offsets = [0, 0], sizes = [8, 128], strides = [1, 1]} : vector<8x384xf32> to vector<8x128xf32>
    %cst_87 = arith.constant 5.000000e-01 : f32
    %293 = vector.broadcast %cst_87 : f32 to vector<8x128xf32>
    %294 = arith.mulf %293, %292 : vector<8x128xf32>
    %295 = math.tanh %294 : vector<8x128xf32>
    %cst_88 = arith.constant 1.000000e+00 : f32
    %296 = vector.broadcast %cst_88 : f32 to vector<8x128xf32>
    %297 = arith.addf %295, %296 : vector<8x128xf32>
    %cst_89 = arith.constant 5.000000e-01 : f32
    %298 = vector.broadcast %cst_89 : f32 to vector<8x128xf32>
    %299 = arith.mulf %298, %297 : vector<8x128xf32>
    %300 = vector.extract_strided_slice %299 {offsets = [0, 0], sizes = [8, 32], strides = [1, 1]} : vector<8x128xf32> to vector<8x32xf32>
    %301 = vector.extract_strided_slice %299 {offsets = [0, 64], sizes = [8, 32], strides = [1, 1]} : vector<8x128xf32> to vector<8x32xf32>
    %302 = vector.extract_strided_slice %291 {offsets = [0, 128], sizes = [8, 32], strides = [1, 1]} : vector<8x384xf32> to vector<8x32xf32>
    %303 = vector.extract_strided_slice %291 {offsets = [0, 256], sizes = [8, 32], strides = [1, 1]} : vector<8x384xf32> to vector<8x32xf32>
    %304 = arith.mulf %300, %303 : vector<8x32xf32>
    %305 = arith.addf %302, %304 : vector<8x32xf32>
    %306 = math.tanh %305 : vector<8x32xf32>
    %cst_90 = arith.constant 1.000000e+00 : f32
    %307 = vector.broadcast %cst_90 : f32 to vector<8x32xf32>
    %308 = arith.subf %307, %301 : vector<8x32xf32>
    %309 = arith.mulf %308, %306 : vector<8x32xf32>
    %310 = arith.mulf %301, %262 : vector<8x32xf32>
    %311 = arith.addf %309, %310 : vector<8x32xf32>
    %c6 = arith.constant 6 : index
    %c0_91 = arith.constant 0 : index
    %c0_92 = arith.constant 0 : index
    %312 = vector.load %arg12[%c6, %c0_91, %c0_92] : memref<8x8x256xf32, #tpu.memory_space<vmem>>, vector<1x8x256xf32>
    %313 = vector.shape_cast %312 : vector<1x8x256xf32> to vector<8x256xf32>
    %cst_93 = arith.constant dense<0.000000e+00> : vector<8x256xf32>
    %314 = tpu.matmul %288, %8, %cst_93 {dimension_numbers = #tpu.dot_dimension_numbers<[1], [0], [0], [1], [0, 0, 1, 1], [], []>} : vector<8x32xf32>, vector<32x256xf32>, vector<8x256xf32> -> vector<8x256xf32>
    %315 = vector.extract_strided_slice %313 {offsets = [0, 0], sizes = [8, 128], strides = [1, 1]} : vector<8x256xf32> to vector<8x128xf32>
    %316 = vector.extract_strided_slice %314 {offsets = [0, 0], sizes = [8, 128], strides = [1, 1]} : vector<8x256xf32> to vector<8x128xf32>
    %317 = arith.addf %315, %316 : vector<8x128xf32>
    %cst_94 = arith.constant 5.000000e-01 : f32
    %318 = vector.broadcast %cst_94 : f32 to vector<8x128xf32>
    %319 = arith.mulf %318, %317 : vector<8x128xf32>
    %320 = math.tanh %319 : vector<8x128xf32>
    %cst_95 = arith.constant 1.000000e+00 : f32
    %321 = vector.broadcast %cst_95 : f32 to vector<8x128xf32>
    %322 = arith.addf %320, %321 : vector<8x128xf32>
    %cst_96 = arith.constant 5.000000e-01 : f32
    %323 = vector.broadcast %cst_96 : f32 to vector<8x128xf32>
    %324 = arith.mulf %323, %322 : vector<8x128xf32>
    %325 = vector.extract_strided_slice %324 {offsets = [0, 0], sizes = [8, 32], strides = [1, 1]} : vector<8x128xf32> to vector<8x32xf32>
    %326 = vector.extract_strided_slice %324 {offsets = [0, 64], sizes = [8, 32], strides = [1, 1]} : vector<8x128xf32> to vector<8x32xf32>
    %327 = vector.extract_strided_slice %313 {offsets = [0, 128], sizes = [8, 32], strides = [1, 1]} : vector<8x256xf32> to vector<8x32xf32>
    %328 = vector.extract_strided_slice %314 {offsets = [0, 128], sizes = [8, 32], strides = [1, 1]} : vector<8x256xf32> to vector<8x32xf32>
    %329 = arith.addf %328, %12 : vector<8x32xf32>
    %330 = arith.mulf %325, %329 : vector<8x32xf32>
    %331 = arith.addf %327, %330 : vector<8x32xf32>
    %332 = math.tanh %331 : vector<8x32xf32>
    %cst_97 = arith.constant 1.000000e+00 : f32
    %333 = vector.broadcast %cst_97 : f32 to vector<8x32xf32>
    %334 = arith.subf %333, %326 : vector<8x32xf32>
    %335 = arith.mulf %334, %332 : vector<8x32xf32>
    %336 = arith.mulf %326, %288 : vector<8x32xf32>
    %337 = arith.addf %335, %336 : vector<8x32xf32>
    %338 = tpu.concatenate %337, %311 in 1 : vector<8x32xf32>, vector<8x32xf32> -> vector<8x64xf32>
    %cst_98 = arith.constant dense<0.000000e+00> : vector<8x384xf32>
    %339 = tpu.matmul %338, %9, %cst_98 {dimension_numbers = #tpu.dot_dimension_numbers<[1], [0], [0], [1], [0, 0, 1, 1], [], []>} : vector<8x64xf32>, vector<64x384xf32>, vector<8x384xf32> -> vector<8x384xf32>
    %340 = arith.addf %339, %15 : vector<8x384xf32>
    %341 = vector.extract_strided_slice %340 {offsets = [0, 0], sizes = [8, 128], strides = [1, 1]} : vector<8x384xf32> to vector<8x128xf32>
    %cst_99 = arith.constant 5.000000e-01 : f32
    %342 = vector.broadcast %cst_99 : f32 to vector<8x128xf32>
    %343 = arith.mulf %342, %341 : vector<8x128xf32>
    %344 = math.tanh %343 : vector<8x128xf32>
    %cst_100 = arith.constant 1.000000e+00 : f32
    %345 = vector.broadcast %cst_100 : f32 to vector<8x128xf32>
    %346 = arith.addf %344, %345 : vector<8x128xf32>
    %cst_101 = arith.constant 5.000000e-01 : f32
    %347 = vector.broadcast %cst_101 : f32 to vector<8x128xf32>
    %348 = arith.mulf %347, %346 : vector<8x128xf32>
    %349 = vector.extract_strided_slice %348 {offsets = [0, 0], sizes = [8, 32], strides = [1, 1]} : vector<8x128xf32> to vector<8x32xf32>
    %350 = vector.extract_strided_slice %348 {offsets = [0, 64], sizes = [8, 32], strides = [1, 1]} : vector<8x128xf32> to vector<8x32xf32>
    %351 = vector.extract_strided_slice %340 {offsets = [0, 128], sizes = [8, 32], strides = [1, 1]} : vector<8x384xf32> to vector<8x32xf32>
    %352 = vector.extract_strided_slice %340 {offsets = [0, 256], sizes = [8, 32], strides = [1, 1]} : vector<8x384xf32> to vector<8x32xf32>
    %353 = arith.mulf %349, %352 : vector<8x32xf32>
    %354 = arith.addf %351, %353 : vector<8x32xf32>
    %355 = math.tanh %354 : vector<8x32xf32>
    %cst_102 = arith.constant 1.000000e+00 : f32
    %356 = vector.broadcast %cst_102 : f32 to vector<8x32xf32>
    %357 = arith.subf %356, %350 : vector<8x32xf32>
    %358 = arith.mulf %357, %355 : vector<8x32xf32>
    %359 = arith.mulf %350, %311 : vector<8x32xf32>
    %360 = arith.addf %358, %359 : vector<8x32xf32>
    %c7 = arith.constant 7 : index
    %c0_103 = arith.constant 0 : index
    %c0_104 = arith.constant 0 : index
    %361 = vector.load %arg12[%c7, %c0_103, %c0_104] : memref<8x8x256xf32, #tpu.memory_space<vmem>>, vector<1x8x256xf32>
    %362 = vector.shape_cast %361 : vector<1x8x256xf32> to vector<8x256xf32>
    %cst_105 = arith.constant dense<0.000000e+00> : vector<8x256xf32>
    %363 = tpu.matmul %337, %8, %cst_105 {dimension_numbers = #tpu.dot_dimension_numbers<[1], [0], [0], [1], [0, 0, 1, 1], [], []>} : vector<8x32xf32>, vector<32x256xf32>, vector<8x256xf32> -> vector<8x256xf32>
    %364 = vector.extract_strided_slice %362 {offsets = [0, 0], sizes = [8, 128], strides = [1, 1]} : vector<8x256xf32> to vector<8x128xf32>
    %365 = vector.extract_strided_slice %363 {offsets = [0, 0], sizes = [8, 128], strides = [1, 1]} : vector<8x256xf32> to vector<8x128xf32>
    %366 = arith.addf %364, %365 : vector<8x128xf32>
    %cst_106 = arith.constant 5.000000e-01 : f32
    %367 = vector.broadcast %cst_106 : f32 to vector<8x128xf32>
    %368 = arith.mulf %367, %366 : vector<8x128xf32>
    %369 = math.tanh %368 : vector<8x128xf32>
    %cst_107 = arith.constant 1.000000e+00 : f32
    %370 = vector.broadcast %cst_107 : f32 to vector<8x128xf32>
    %371 = arith.addf %369, %370 : vector<8x128xf32>
    %cst_108 = arith.constant 5.000000e-01 : f32
    %372 = vector.broadcast %cst_108 : f32 to vector<8x128xf32>
    %373 = arith.mulf %372, %371 : vector<8x128xf32>
    %374 = vector.extract_strided_slice %373 {offsets = [0, 0], sizes = [8, 32], strides = [1, 1]} : vector<8x128xf32> to vector<8x32xf32>
    %375 = vector.extract_strided_slice %373 {offsets = [0, 64], sizes = [8, 32], strides = [1, 1]} : vector<8x128xf32> to vector<8x32xf32>
    %376 = vector.extract_strided_slice %362 {offsets = [0, 128], sizes = [8, 32], strides = [1, 1]} : vector<8x256xf32> to vector<8x32xf32>
    %377 = vector.extract_strided_slice %363 {offsets = [0, 128], sizes = [8, 32], strides = [1, 1]} : vector<8x256xf32> to vector<8x32xf32>
    %378 = arith.addf %377, %12 : vector<8x32xf32>
    %379 = arith.mulf %374, %378 : vector<8x32xf32>
    %380 = arith.addf %376, %379 : vector<8x32xf32>
    %381 = math.tanh %380 : vector<8x32xf32>
    %cst_109 = arith.constant 1.000000e+00 : f32
    %382 = vector.broadcast %cst_109 : f32 to vector<8x32xf32>
    %383 = arith.subf %382, %375 : vector<8x32xf32>
    %384 = arith.mulf %383, %381 : vector<8x32xf32>
    %385 = arith.mulf %375, %337 : vector<8x32xf32>
    %386 = arith.addf %384, %385 : vector<8x32xf32>
    %387 = tpu.concatenate %386, %360 in 1 : vector<8x32xf32>, vector<8x32xf32> -> vector<8x64xf32>
    %cst_110 = arith.constant dense<0.000000e+00> : vector<8x384xf32>
    %388 = tpu.matmul %387, %9, %cst_110 {dimension_numbers = #tpu.dot_dimension_numbers<[1], [0], [0], [1], [0, 0, 1, 1], [], []>} : vector<8x64xf32>, vector<64x384xf32>, vector<8x384xf32> -> vector<8x384xf32>
    %389 = arith.addf %388, %15 : vector<8x384xf32>
    %390 = vector.extract_strided_slice %389 {offsets = [0, 0], sizes = [8, 128], strides = [1, 1]} : vector<8x384xf32> to vector<8x128xf32>
    %cst_111 = arith.constant 5.000000e-01 : f32
    %391 = vector.broadcast %cst_111 : f32 to vector<8x128xf32>
    %392 = arith.mulf %391, %390 : vector<8x128xf32>
    %393 = math.tanh %392 : vector<8x128xf32>
    %cst_112 = arith.constant 1.000000e+00 : f32
    %394 = vector.broadcast %cst_112 : f32 to vector<8x128xf32>
    %395 = arith.addf %393, %394 : vector<8x128xf32>
    %cst_113 = arith.constant 5.000000e-01 : f32
    %396 = vector.broadcast %cst_113 : f32 to vector<8x128xf32>
    %397 = arith.mulf %396, %395 : vector<8x128xf32>
    %398 = vector.extract_strided_slice %397 {offsets = [0, 0], sizes = [8, 32], strides = [1, 1]} : vector<8x128xf32> to vector<8x32xf32>
    %399 = vector.extract_strided_slice %397 {offsets = [0, 64], sizes = [8, 32], strides = [1, 1]} : vector<8x128xf32> to vector<8x32xf32>
    %400 = vector.extract_strided_slice %389 {offsets = [0, 128], sizes = [8, 32], strides = [1, 1]} : vector<8x384xf32> to vector<8x32xf32>
    %401 = vector.extract_strided_slice %389 {offsets = [0, 256], sizes = [8, 32], strides = [1, 1]} : vector<8x384xf32> to vector<8x32xf32>
    %402 = arith.mulf %398, %401 : vector<8x32xf32>
    %403 = arith.addf %400, %402 : vector<8x32xf32>
    %404 = math.tanh %403 : vector<8x32xf32>
    %cst_114 = arith.constant 1.000000e+00 : f32
    %405 = vector.broadcast %cst_114 : f32 to vector<8x32xf32>
    %406 = arith.subf %405, %399 : vector<8x32xf32>
    %407 = arith.mulf %406, %404 : vector<8x32xf32>
    %408 = arith.mulf %399, %360 : vector<8x32xf32>
    %409 = arith.addf %407, %408 : vector<8x32xf32>
    %cst_115 = arith.constant dense<0.000000e+00> : vector<32xf32>
    %410 = vector.multi_reduction <add>, %409, %cst_115 [0] : vector<8x32xf32> to vector<32xf32>
    %411 = vector.shape_cast %410 : vector<32xf32> to vector<1x32xf32>
    %cst_116 = arith.constant 8.000000e+00 : f32
    %412 = vector.broadcast %cst_116 : f32 to vector<1x32xf32>
    %413 = arith.divf %411, %412 : vector<1x32xf32>
    %414 = vector.broadcast %413 : vector<1x32xf32> to vector<8x32xf32>
    %415 = arith.subf %409, %414 : vector<8x32xf32>
    %416 = arith.mulf %415, %415 : vector<8x32xf32>
    %cst_117 = arith.constant dense<0.000000e+00> : vector<32xf32>
    %417 = vector.multi_reduction <add>, %416, %cst_117 [0] : vector<8x32xf32> to vector<32xf32>
    %418 = vector.shape_cast %417 : vector<32xf32> to vector<1x32xf32>
    %cst_118 = arith.constant 8.000000e+00 : f32
    %419 = vector.broadcast %cst_118 : f32 to vector<1x32xf32>
    %420 = arith.divf %418, %419 : vector<1x32xf32>
    %421 = vector.broadcast %413 : vector<1x32xf32> to vector<8x32xf32>
    %422 = arith.subf %409, %421 : vector<8x32xf32>
    %cst_119 = arith.constant 9.99999974E-6 : f32
    %423 = vector.broadcast %cst_119 : f32 to vector<1x32xf32>
    %424 = arith.addf %420, %423 : vector<1x32xf32>
    %425 = math.rsqrt %424 : vector<1x32xf32>
    %426 = vector.broadcast %425 : vector<1x32xf32> to vector<8x32xf32>
    %427 = arith.mulf %422, %426 : vector<8x32xf32>
    %c0_120 = arith.constant 0 : index
    %c0_121 = arith.constant 0 : index
    %428 = vector.load %arg7[%c0_120, %c0_121] : memref<1x32xf32, #tpu.memory_space<vmem>>, vector<1x32xf32>
    %429 = vector.broadcast %428 : vector<1x32xf32> to vector<8x32xf32>
    %430 = arith.mulf %427, %429 : vector<8x32xf32>
    %c0_122 = arith.constant 0 : index
    %c0_123 = arith.constant 0 : index
    %431 = vector.load %arg8[%c0_122, %c0_123] : memref<1x32xf32, #tpu.memory_space<vmem>>, vector<1x32xf32>
    %432 = vector.broadcast %431 : vector<1x32xf32> to vector<8x32xf32>
    %433 = arith.addf %430, %432 : vector<8x32xf32>
    %c0_124 = arith.constant 0 : index
    %c0_125 = arith.constant 0 : index
    %434 = vector.load %arg9[%c0_124, %c0_125] : memref<32x4xf32, #tpu.memory_space<vmem>>, vector<32x4xf32>
    %cst_126 = arith.constant dense<0.000000e+00> : vector<8x4xf32>
    %435 = tpu.matmul %433, %434, %cst_126 {dimension_numbers = #tpu.dot_dimension_numbers<[1], [0], [0], [1], [0, 0, 1, 1], [], []>} : vector<8x32xf32>, vector<32x4xf32>, vector<8x4xf32> -> vector<8x4xf32>
    %c0_127 = arith.constant 0 : index
    %c0_128 = arith.constant 0 : index
    %436 = vector.load %arg10[%c0_127, %c0_128] : memref<1x4xf32, #tpu.memory_space<vmem>>, vector<1x4xf32>
    %437 = vector.broadcast %436 : vector<1x4xf32> to vector<8x4xf32>
    %438 = arith.addf %435, %437 : vector<8x4xf32>
    %c0_129 = arith.constant 0 : index
    %c0_130 = arith.constant 0 : index
    %439 = vector.load %arg11[%c0_129, %c0_130] : memref<8x4xf32, #tpu.memory_space<vmem>>, vector<8x4xf32>
    tpu.vector_store %arg11[%c0_129, %c0_130], %438 {strides = array<i32>} : memref<8x4xf32, #tpu.memory_space<vmem>>, vector<8x4xf32>,
    return
  }
}

</mosaic_0001>

<llo_original>
// kernel: base_rnn_forward.1
$region0: #{base_rnn_forward.1}
  #allocation0 [shape = 'u32[]', space=smem, size = 0x4, offset = 0x4, fixed_abs, tag = 'smem constant byte address 0x4 - core index']
  #allocation1 [shape = 'u32[144,128]{1,0:T(1,128)}', space=vmem, size = 0x12000, scoped, tag = 'internal scratch']
  #allocation2 [shape = 'f32[8,8,256]{2,1,0:T(8,128)}', space=vmem, size = 0x10000, scoped, tag = 'scratch operand']
  %s0 = inlined_call_operand.vmem [shape: f32[64,16], index: 0, kind: input, shape index: {}]
  %s1 = inlined_call_operand.hbm [shape: f32[16,256], index: 1, kind: input, shape index: {}]
  %s2 = inlined_call_operand.vmem [shape: f32[1,256], index: 2, kind: input, shape index: {}]
  %s3 = inlined_call_operand.hbm [shape: f32[32,256], index: 3, kind: input, shape index: {}]
  %s4 = inlined_call_operand.vmem [shape: f32[1,32], index: 4, kind: input, shape index: {}]
  %s5 = inlined_call_operand.vmem [shape: f32[64,384], index: 5, kind: input, shape index: {}]
  %s6 = inlined_call_operand.vmem [shape: f32[1,384], index: 6, kind: input, shape index: {}]
  %s7 = inlined_call_operand.vmem [shape: f32[1,32], index: 7, kind: input, shape index: {}]
  %s8 = inlined_call_operand.vmem [shape: f32[1,32], index: 8, kind: input, shape index: {}]
  %s9 = inlined_call_operand.vmem [shape: f32[32,4], index: 9, kind: input, shape index: {}]
  %s10 = inlined_call_operand.vmem [shape: f32[1,4], index: 10, kind: input, shape index: {}]
  %s11 = inlined_call_operand.vmem [shape: f32[8,4], index: 11, kind: output, shape index: {}]
  %s12 = sld [smem:[#allocation0]]
  $region62: #{base_rnn_forward.1} parent=0
    _
  %s14 = ssub.s32 1, %s12
  %s15 = scalar_select 0, %s14, %s12
  $region1: #{base_rnn_forward.1} parent=0
    #allocation3 [shape = 'u8[16384]{0}', space=vmem, size = 0x4000, scoped, tag = 'input window, operand 1, single buffered']
    #allocation4 [shape = 's32[1]{0}', space=sflag, size = 0x4, scoped, tag = 'scoped memory for base_rnn_forward.1']
    #allocation5 [shape = 'u8[32768]{0}', space=vmem, size = 0x8000, scoped, tag = 'input window, operand 3, single buffered']
    #allocation6 [shape = 's32[1]{0}', space=sflag, size = 0x4, scoped, tag = 'scoped memory for base_rnn_forward.1']
    %16 = vsyncpa [#allocation4], 0
    %17 = vsyncpa [#allocation6], 0
    // Predicated region
    $region2: #{base_rnn_forward.1} parent=1 // pred_check
      _
    $region3: #{base_rnn_forward.1} parent=1 // pred_check_branch
      %19 = sbr.rel (0) target = $region5
    $region4: #{base_rnn_forward.1} parent=1 // pred_region
      _
    $region5: #{base_rnn_forward.1} parent=1 // pred_fallthru
      _
    // Predicated region
    $region6: #{base_rnn_forward.1} parent=1 // pred_check
      _
    $region7: #{base_rnn_forward.1} parent=1 // pred_check_branch
      %21 = sbr.rel (0) target = $region9
    $region8: #{base_rnn_forward.1} parent=1 // pred_region
      %s23 = ssub.s32 512, 512
      %24 = vsyncadd [#allocation4], %s23
      %s25 = sshll.u32 [#allocation3], 4
      %s26 = int_to_ptr.vmem [resolvable:$true] %s25
      %31 = dma.hbm_to_vmem [thread:$0]  %s1, 512, %s26, [#allocation4], 256, 256, 16
    $region9: #{base_rnn_forward.1} parent=1 // pred_fallthru
      _
    // Predicated region
    $region10: #{base_rnn_forward.1} parent=1 // pred_check
      _
    $region11: #{base_rnn_forward.1} parent=1 // pred_check_branch
      %33 = sbr.rel (0) target = $region13
    $region12: #{base_rnn_forward.1} parent=1 // pred_region
      _
    $region13: #{base_rnn_forward.1} parent=1 // pred_fallthru
      _
    // Predicated region
    $region14: #{base_rnn_forward.1} parent=1 // pred_check
      _
    $region15: #{base_rnn_forward.1} parent=1 // pred_check_branch
      %35 = sbr.rel (0) target = $region17
    $region16: #{base_rnn_forward.1} parent=1 // pred_region
      %s37 = ssub.s32 1024, 1024
      %38 = vsyncadd [#allocation6], %s37
      %s39 = sshll.u32 [#allocation5], 4
      %s40 = int_to_ptr.vmem [resolvable:$true] %s39
      %45 = dma.hbm_to_vmem [thread:$0]  %s3, 1024, %s40, [#allocation6], 256, 256, 16
    $region17: #{base_rnn_forward.1} parent=1 // pred_fallthru
      _
    // Predicated region
    $region18: #{base_rnn_forward.1} parent=1 // pred_check
      _
    $region19: #{base_rnn_forward.1} parent=1 // pred_check_branch
      %47 = sbr.rel (0) target = $region21
    $region20: #{base_rnn_forward.1} parent=1 // pred_region
      _
    $region21: #{base_rnn_forward.1} parent=1 // pred_fallthru
      _
    // Predicated region
    $region22: #{base_rnn_forward.1} parent=1 // pred_check
      _
    $region23: #{base_rnn_forward.1} parent=1 // pred_check_branch
      %49 = sbr.rel (0) target = $region25
    $region24: #{base_rnn_forward.1} parent=1 // pred_region
      _
    $region25: #{base_rnn_forward.1} parent=1 // pred_fallthru
      _
    // Predicated region
    $region26: #{base_rnn_forward.1} parent=1 // pred_check
      _
    $region27: #{base_rnn_forward.1} parent=1 // pred_check_branch
      %51 = sbr.rel (0) target = $region29
    $region28: #{base_rnn_forward.1} parent=1 // pred_region
      _
    $region29: #{base_rnn_forward.1} parent=1 // pred_fallthru
      _
    // Predicated region
    $region30: #{base_rnn_forward.1} parent=1 // pred_check
      _
    $region31: #{base_rnn_forward.1} parent=1 // pred_check_branch
      %53 = sbr.rel (0) target = $region33
    $region32: #{base_rnn_forward.1} parent=1 // pred_region
      _
    $region33: #{base_rnn_forward.1} parent=1 // pred_fallthru
      _
    // Predicated region
    $region34: #{base_rnn_forward.1} parent=1 // pred_check
      _
    $region35: #{base_rnn_forward.1} parent=1 // pred_check_branch
      %55 = sbr.rel (0) target = $region37
    $region36: #{base_rnn_forward.1} parent=1 // pred_region
      _
    $region37: #{base_rnn_forward.1} parent=1 // pred_fallthru
      _
    // Predicated region
    $region38: #{base_rnn_forward.1} parent=1 // pred_check
      _
    $region39: #{base_rnn_forward.1} parent=1 // pred_check_branch
      %57 = sbr.rel (0) target = $region41
    $region40: #{base_rnn_forward.1} parent=1 // pred_region
      _
    $region41: #{base_rnn_forward.1} parent=1 // pred_fallthru
      _
    // Predicated region
    $region42: #{base_rnn_forward.1} parent=1 // pred_check
      _
    $region43: #{base_rnn_forward.1} parent=1 // pred_check_branch
      %59 = sbr.rel (0) target = $region45
    $region44: #{base_rnn_forward.1} parent=1 // pred_region
      _
    $region45: #{base_rnn_forward.1} parent=1 // pred_fallthru
      _
    // Predicated region
    $region46: #{base_rnn_forward.1} parent=1 // pred_check
      _
    $region47: #{base_rnn_forward.1} parent=1 // pred_check_branch
      %61 = sbr.rel (0) target = $region49
    $region48: #{base_rnn_forward.1} parent=1 // pred_region
      %62 = dma.done [#allocation4], 512
    $region49: #{base_rnn_forward.1} parent=1 // pred_fallthru
      _
    // Predicated region
    $region50: #{base_rnn_forward.1} parent=1 // pred_check
      _
    $region51: #{base_rnn_forward.1} parent=1 // pred_check_branch
      %64 = sbr.rel (0) target = $region53
    $region52: #{base_rnn_forward.1} parent=1 // pred_region
      %65 = dma.done [#allocation6], 1024
    $region53: #{base_rnn_forward.1} parent=1 // pred_fallthru
      _
    %v66 = vld [vmem:[%s0] sm:$0xff]
    %v67 = vld [vmem:[%s0 + $0x8] sm:$0xff]
    %v68 = vld [vmem:[%s0 + $0x10] sm:$0xff]
    %v69 = vld [vmem:[%s0 + $0x18] sm:$0xff]
    %v70 = vld [vmem:[%s0 + $0x20] sm:$0xff]
    %v71 = vld [vmem:[%s0 + $0x28] sm:$0xff]
    %v72 = vld [vmem:[%s0 + $0x30] sm:$0xff]
    %v73 = vld [vmem:[%s0 + $0x38] sm:$0xff]
    %v74 = vld [vmem:[#allocation3] sm:$0xff]
    %v75 = vld [vmem:[#allocation3 + $0x8] sm:$0xff]
    %v76 = vld [vmem:[#allocation3 + $0x10] sm:$0xff]
    %v77 = vld [vmem:[#allocation3 + $0x18] sm:$0xff]
    %v78 = vld [vmem:[%s2] sm:$0x3]
    %v80 = vlaneseq
    %v81 = vshrl.u32 %v80, 7
    %v82 = vsub.s32 0, %v81
    %v83 = vrot.slane %v78, %v82
    %v84 = vlaneseq
    %v85 = vshrl.u32 %v84, 7
    %v86 = vsub.s32 1, %v85
    %v87 = vrot.slane %v78, %v86
    %vm90 = vcmask 130048
    %v92 = vsel %vm90, %v66, 0
    %v95 = vsel %vm90, %v67, 0
    %v98 = vsel %vm90, %v68, 0
    %v101 = vsel %vm90, %v69, 0
    %v104 = vsel %vm90, %v70, 0
    %v107 = vsel %vm90, %v71, 0
    %v110 = vsel %vm90, %v72, 0
    %v113 = vsel %vm90, %v73, 0
    %115 = vmatprep.subr.mxu0 %v75
    %116 = vmatpush1.msra.mxu0 %v74
    %117 = vmatprep.subr.mxu0 %v77
    %118 = vmatpush1.msra.mxu0 %v76
    %119 = vmatprep.subr.mxu0 0.0
    %120 = vmatpush1.msra.mxu0 0.0
    %121 = vmatprep.subr.mxu0 0.0
    %122 = vmatpush1.msra.mxu0 0.0
    %123 = vmatprep.subr.mxu0 0.0
    %124 = vmatpush1.msra.mxu0 0.0
    %125 = vmatprep.subr.mxu0 0.0
    %126 = vmatpush1.msra.mxu0 0.0
    %127 = vmatprep.subr.mxu0 0.0
    %128 = vmatpush1.msra.mxu0 0.0
    %129 = vmatprep.subr.mxu0 0.0
    %130 = vmatpush1.msra.mxu0 0.0
    %131 = vmatprep.subr.mxu0 0.0
    %132 = vmatpush1.msra.mxu0 0.0
    %133 = vmatprep.subr.mxu0 0.0
    %134 = vmatpush1.msra.mxu0 0.0
    %135 = vmatprep.subr.mxu0 0.0
    %136 = vmatpush1.msra.mxu0 0.0
    %137 = vmatprep.subr.mxu0 0.0
    %138 = vmatpush1.msra.mxu0 0.0
    %139 = vmatprep.subr.mxu0 0.0
    %140 = vmatpush1.msra.mxu0 0.0
    %141 = vmatprep.subr.mxu0 0.0
    %142 = vmatpush1.msra.mxu0 0.0
    %143 = vmatprep.subr.mxu0 0.0
    %144 = vmatpush1.msra.mxu0 0.0
    %145 = vmatprep.subr.mxu0 0.0
    %146 = vmatpush1.msra.mxu0 0.0
    %147 = vmatprep.subr.mxu0 0.0
    %148 = vmatpush1.msra.mxu0 0.0
    %149 = vmatprep.subr.mxu0 0.0
    %150 = vmatpush1.msra.mxu0 0.0
    %151 = vmatprep.subr.mxu0 0.0
    %152 = vmatpush1.msra.mxu0 0.0
    %153 = vmatprep.subr.mxu0 0.0
    %154 = vmatpush1.msra.mxu0 0.0
    %155 = vmatprep.subr.mxu0 0.0
    %156 = vmatpush1.msra.mxu0 0.0
    %157 = vmatprep.subr.mxu0 0.0
    %158 = vmatpush1.msra.mxu0 0.0
    %159 = vmatprep.subr.mxu0 0.0
    %160 = vmatpush1.msra.mxu0 0.0
    %161 = vmatprep.subr.mxu0 0.0
    %162 = vmatpush1.msra.mxu0 0.0
    %163 = vmatprep.subr.mxu0 0.0
    %164 = vmatpush1.msra.mxu0 0.0
    %165 = vmatprep.subr.mxu0 0.0
    %166 = vmatpush1.msra.mxu0 0.0
    %167 = vmatprep.subr.mxu0 0.0
    %168 = vmatpush1.msra.mxu0 0.0
    %169 = vmatprep.subr.mxu0 0.0
    %170 = vmatpush1.msra.mxu0 0.0
    %171 = vmatprep.subr.mxu0 0.0
    %172 = vmatpush1.msra.mxu0 0.0
    %173 = vmatprep.subr.mxu0 0.0
    %174 = vmatpush1.msra.mxu0 0.0
    %175 = vmatprep.subr.mxu0 0.0
    %176 = vmatpush1.msra.mxu0 0.0
    %177 = vmatprep.subr.mxu0 0.0
    %178 = vmatpush1.msra.mxu0 0.0
    %179 = vmatprep.mubr.f32.mxu0 0.0
    %180 = vmatmul.mubr.f32.gmra.mrb[0].mxu0 %v92
    %v181 = vpop.f32.mrb[0].mxu0
    %v182 = vadd.f32 %v83, %v181
    %v183 = vpop.f32.mrb[0].mxu0
    %v184 = vadd.f32 %v87, %v183
    %185 = vmatprep.mubr.f32.mxu0 0.0
    %186 = vmatmul.mubr.f32.gmra.mrb[0].mxu0 %v95
    %v187 = vpop.f32.mrb[0].mxu0
    %v188 = vadd.f32 %v83, %v187
    %v189 = vpop.f32.mrb[0].mxu0
    %v190 = vadd.f32 %v87, %v189
    %191 = vmatprep.mubr.f32.mxu0 0.0
    %192 = vmatmul.mubr.f32.gmra.mrb[0].mxu0 %v98
    %v193 = vpop.f32.mrb[0].mxu0
    %v194 = vadd.f32 %v83, %v193
    %v195 = vpop.f32.mrb[0].mxu0
    %v196 = vadd.f32 %v87, %v195
    %197 = vmatprep.mubr.f32.mxu0 0.0
    %198 = vmatmul.mubr.f32.gmra.mrb[0].mxu0 %v101
    %v199 = vpop.f32.mrb[0].mxu0
    %v200 = vadd.f32 %v83, %v199
    %v201 = vpop.f32.mrb[0].mxu0
    %v202 = vadd.f32 %v87, %v201
    %203 = vmatprep.mubr.f32.mxu0 0.0
    %204 = vmatmul.mubr.f32.gmra.mrb[0].mxu0 %v104
    %v205 = vpop.f32.mrb[0].mxu0
    %v206 = vadd.f32 %v83, %v205
    %v207 = vpop.f32.mrb[0].mxu0
    %v208 = vadd.f32 %v87, %v207
    %209 = vmatprep.mubr.f32.mxu0 0.0
    %210 = vmatmul.mubr.f32.gmra.mrb[0].mxu0 %v107
    %v211 = vpop.f32.mrb[0].mxu0
    %v212 = vadd.f32 %v83, %v211
    %v213 = vpop.f32.mrb[0].mxu0
    %v214 = vadd.f32 %v87, %v213
    %215 = vmatprep.mubr.f32.mxu0 0.0
    %216 = vmatmul.mubr.f32.gmra.mrb[0].mxu0 %v110
    %v217 = vpop.f32.mrb[0].mxu0
    %v218 = vadd.f32 %v83, %v217
    %v219 = vpop.f32.mrb[0].mxu0
    %v220 = vadd.f32 %v87, %v219
    %221 = vmatprep.mubr.f32.mxu0 0.0
    %222 = vmatmul.mubr.f32.gmra.mrb[0].mxu0 %v113
    %v223 = vpop.f32.mrb[0].mxu0
    %v224 = vadd.f32 %v83, %v223
    %v225 = vpop.f32.mrb[0].mxu0
    %v226 = vadd.f32 %v87, %v225
    %227 = vdwg.mxu0
    %228 = vst [vmem:[#allocation2] sm:$0xff] %v182
    %229 = vst [vmem:[#allocation2 + $0x8] sm:$0xff] %v184
    %230 = vst [vmem:[#allocation2 + $0x10] sm:$0xff] %v188
    %231 = vst [vmem:[#allocation2 + $0x18] sm:$0xff] %v190
    %232 = vst [vmem:[#allocation2 + $0x20] sm:$0xff] %v194
    %233 = vst [vmem:[#allocation2 + $0x28] sm:$0xff] %v196
    %234 = vst [vmem:[#allocation2 + $0x30] sm:$0xff] %v200
    %235 = vst [vmem:[#allocation2 + $0x38] sm:$0xff] %v202
    %236 = vst [vmem:[#allocation2 + $0x40] sm:$0xff] %v206
    %237 = vst [vmem:[#allocation2 + $0x48] sm:$0xff] %v208
    %238 = vst [vmem:[#allocation2 + $0x50] sm:$0xff] %v212
    %239 = vst [vmem:[#allocation2 + $0x58] sm:$0xff] %v214
    %240 = vst [vmem:[#allocation2 + $0x60] sm:$0xff] %v218
    %241 = vst [vmem:[#allocation2 + $0x68] sm:$0xff] %v220
    %242 = vst [vmem:[#allocation2 + $0x70] sm:$0xff] %v224
    %243 = vst [vmem:[#allocation2 + $0x78] sm:$0xff] %v226
    %v244 = vld [vmem:[#allocation5] sm:$0xff]
    %v245 = vld [vmem:[#allocation5 + $0x8] sm:$0xff]
    %v246 = vld [vmem:[#allocation5 + $0x10] sm:$0xff]
    %v247 = vld [vmem:[#allocation5 + $0x18] sm:$0xff]
    %v248 = vld [vmem:[#allocation5 + $0x20] sm:$0xff]
    %v249 = vld [vmem:[#allocation5 + $0x28] sm:$0xff]
    %v250 = vld [vmem:[#allocation5 + $0x30] sm:$0xff]
    %v251 = vld [vmem:[#allocation5 + $0x38] sm:$0xff]
    %v252 = vld [vmem:[%s5] sm:$0xff]
    %v253 = vld [vmem:[%s5 + $0x8] sm:$0xff]
    %v254 = vld [vmem:[%s5 + $0x10] sm:$0xff]
    %v255 = vld [vmem:[%s5 + $0x18] sm:$0xff]
    %v256 = vld [vmem:[%s5 + $0x20] sm:$0xff]
    %v257 = vld [vmem:[%s5 + $0x28] sm:$0xff]
    %v258 = vld [vmem:[%s5 + $0x30] sm:$0xff]
    %v259 = vld [vmem:[%s5 + $0x38] sm:$0xff]
    %v260 = vld [vmem:[%s5 + $0x40] sm:$0xff]
    %v261 = vld [vmem:[%s5 + $0x48] sm:$0xff]
    %v262 = vld [vmem:[%s5 + $0x50] sm:$0xff]
    %v263 = vld [vmem:[%s5 + $0x58] sm:$0xff]
    %v264 = vld [vmem:[%s5 + $0x60] sm:$0xff]
    %v265 = vld [vmem:[%s5 + $0x68] sm:$0xff]
    %v266 = vld [vmem:[%s5 + $0x70] sm:$0xff]
    %v267 = vld [vmem:[%s5 + $0x78] sm:$0xff]
    %v268 = vld [vmem:[%s5 + $0x80] sm:$0xff]
    %v269 = vld [vmem:[%s5 + $0x88] sm:$0xff]
    %v270 = vld [vmem:[%s5 + $0x90] sm:$0xff]
    %v271 = vld [vmem:[%s5 + $0x98] sm:$0xff]
    %v272 = vld [vmem:[%s5 + $0xa0] sm:$0xff]
    %v273 = vld [vmem:[%s5 + $0xa8] sm:$0xff]
    %v274 = vld [vmem:[%s5 + $0xb0] sm:$0xff]
    %v275 = vld [vmem:[%s5 + $0xb8] sm:$0xff]
    %v276 = vld [vmem:[%s4] sm:$0x1]
    %v278 = vlaneseq
    %v279 = vshrl.u32 %v278, 7
    %v280 = vsub.s32 0, %v279
    %v281 = vrot.slane %v276, %v280
    %v283 = vld [vmem:[%s6] sm:$0x7]
    %v285 = vlaneseq
    %v286 = vshrl.u32 %v285, 7
    %v287 = vsub.s32 0, %v286
    %v288 = vrot.slane %v283, %v287
    %v289 = vlaneseq
    %v290 = vshrl.u32 %v289, 7
    %v291 = vsub.s32 1, %v290
    %v292 = vrot.slane %v283, %v291
    %v293 = vlaneseq
    %v294 = vshrl.u32 %v293, 7
    %v295 = vsub.s32 2, %v294
    %v296 = vrot.slane %v283, %v295
    %v300 = vld [vmem:[#allocation2] sm:$0xff]
    %v301 = vld [vmem:[#allocation2 + $0x8] sm:$0xff]
    %vm302 = vcmask 261120
    %v304 = vsel %vm302, 0.0, 0
    %306 = vmatprep.subr.mxu0 %v245
    %307 = vmatpush1.msra.mxu0 %v244
    %308 = vmatprep.subr.mxu0 %v247
    %309 = vmatpush1.msra.mxu0 %v246
    %310 = vmatprep.subr.mxu0 %v249
    %311 = vmatpush1.msra.mxu0 %v248
    %312 = vmatprep.subr.mxu0 %v251
    %313 = vmatpush1.msra.mxu0 %v250
    %314 = vmatprep.subr.mxu0 0.0
    %315 = vmatpush1.msra.mxu0 0.0
    %316 = vmatprep.subr.mxu0 0.0
    %317 = vmatpush1.msra.mxu0 0.0
    %318 = vmatprep.subr.mxu0 0.0
    %319 = vmatpush1.msra.mxu0 0.0
    %320 = vmatprep.subr.mxu0 0.0
    %321 = vmatpush1.msra.mxu0 0.0
    %322 = vmatprep.subr.mxu0 0.0
    %323 = vmatpush1.msra.mxu0 0.0
    %324 = vmatprep.subr.mxu0 0.0
    %325 = vmatpush1.msra.mxu0 0.0
    %326 = vmatprep.subr.mxu0 0.0
    %327 = vmatpush1.msra.mxu0 0.0
    %328 = vmatprep.subr.mxu0 0.0
    %329 = vmatpush1.msra.mxu0 0.0
    %330 = vmatprep.subr.mxu0 0.0
    %331 = vmatpush1.msra.mxu0 0.0
    %332 = vmatprep.subr.mxu0 0.0
    %333 = vmatpush1.msra.mxu0 0.0
    %334 = vmatprep.subr.mxu0 0.0
    %335 = vmatpush1.msra.mxu0 0.0
    %336 = vmatprep.subr.mxu0 0.0
    %337 = vmatpush1.msra.mxu0 0.0
    %338 = vmatprep.subr.mxu0 0.0
    %339 = vmatpush1.msra.mxu0 0.0
    %340 = vmatprep.subr.mxu0 0.0
    %341 = vmatpush1.msra.mxu0 0.0
    %342 = vmatprep.subr.mxu0 0.0
    %343 = vmatpush1.msra.mxu0 0.0
    %344 = vmatprep.subr.mxu0 0.0
    %345 = vmatpush1.msra.mxu0 0.0
    %346 = vmatprep.subr.mxu0 0.0
    %347 = vmatpush1.msra.mxu0 0.0
    %348 = vmatprep.subr.mxu0 0.0
    %349 = vmatpush1.msra.mxu0 0.0
    %350 = vmatprep.subr.mxu0 0.0
    %351 = vmatpush1.msra.mxu0 0.0
    %352 = vmatprep.subr.mxu0 0.0
    %353 = vmatpush1.msra.mxu0 0.0
    %354 = vmatprep.subr.mxu0 0.0
    %355 = vmatpush1.msra.mxu0 0.0
    %356 = vmatprep.subr.mxu0 0.0
    %357 = vmatpush1.msra.mxu0 0.0
    %358 = vmatprep.subr.mxu0 0.0
    %359 = vmatpush1.msra.mxu0 0.0
    %360 = vmatprep.subr.mxu0 0.0
    %361 = vmatpush1.msra.mxu0 0.0
    %362 = vmatprep.subr.mxu0 0.0
    %363 = vmatpush1.msra.mxu0 0.0
    %364 = vmatprep.subr.mxu0 0.0
    %365 = vmatpush1.msra.mxu0 0.0
    %366 = vmatprep.subr.mxu0 0.0
    %367 = vmatpush1.msra.mxu0 0.0
    %368 = vmatprep.subr.mxu0 0.0
    %369 = vmatpush1.msra.mxu0 0.0
    %370 = vmatprep.mubr.f32.mxu0 0.0
    %371 = vmatmul.mubr.f32.gmra.mrb[0].mxu0 %v304
    %v372 = vpop.f32.mrb[0].mxu0
    %v373 = vadd.f32 0.0, %v372
    %v374 = vpop.f32.mrb[0].mxu0
    %v375 = vadd.f32 0.0, %v374
    %376 = vdwg.mxu0
    %v377 = vadd.f32 %v300, %v373
    %v378 = vmul.f32 %v377, 0.5
    %v379 = vtanh.pop %v378
    %v380 = vadd.f32 %v379, 1.0
    %v381 = vmul.f32 %v380, 0.5
    %v382 = vadd.f32 %v375, %v281
    %v383 = vmul.f32 %v381, %v382
    %v384 = vadd.f32 %v301, %v383
    %v385 = vtanh.pop %v384
    %v386 = vsub.f32 1.0, %v381
    %388 = vrot.lane.b32.xlu0 %v385, 64
    %v389 = vpop.permute.xlu0 %388
    %v391 = vmul.f32 %v386, %v389
    %v392 = vmul.f32 %v381, 0.0
    %v393 = vadd.f32 %v391, %v392
    %395 = vrot.lane.b32.xlu0 %v393, 64
    %v396 = vpop.permute.xlu0 %395
    %v398 = vsel %vm302, %v396, 0.0
    %vm399 = vcmask 523264
    %v401 = vsel %vm399, %v398, 0
    %403 = vmatprep.subr.mxu0 %v253
    %404 = vmatpush1.msra.mxu0 %v252
    %405 = vmatprep.subr.mxu0 %v256
    %406 = vmatpush1.msra.mxu0 %v255
    %407 = vmatprep.subr.mxu0 %v259
    %408 = vmatpush1.msra.mxu0 %v258
    %409 = vmatprep.subr.mxu0 %v262
    %410 = vmatpush1.msra.mxu0 %v261
    %411 = vmatprep.subr.mxu0 %v265
    %412 = vmatpush1.msra.mxu0 %v264
    %413 = vmatprep.subr.mxu0 %v268
    %414 = vmatpush1.msra.mxu0 %v267
    %415 = vmatprep.subr.mxu0 %v271
    %416 = vmatpush1.msra.mxu0 %v270
    %417 = vmatprep.subr.mxu0 %v274
    %418 = vmatpush1.msra.mxu0 %v273
    %419 = vmatprep.subr.mxu0 0.0
    %420 = vmatpush1.msra.mxu0 0.0
    %421 = vmatprep.subr.mxu0 0.0
    %422 = vmatpush1.msra.mxu0 0.0
    %423 = vmatprep.subr.mxu0 0.0
    %424 = vmatpush1.msra.mxu0 0.0
    %425 = vmatprep.subr.mxu0 0.0
    %426 = vmatpush1.msra.mxu0 0.0
    %427 = vmatprep.subr.mxu0 0.0
    %428 = vmatpush1.msra.mxu0 0.0
    %429 = vmatprep.subr.mxu0 0.0
    %430 = vmatpush1.msra.mxu0 0.0
    %431 = vmatprep.subr.mxu0 0.0
    %432 = vmatpush1.msra.mxu0 0.0
    %433 = vmatprep.subr.mxu0 0.0
    %434 = vmatpush1.msra.mxu0 0.0
    %435 = vmatprep.subr.mxu0 0.0
    %436 = vmatpush1.msra.mxu0 0.0
    %437 = vmatprep.subr.mxu0 0.0
    %438 = vmatpush1.msra.mxu0 0.0
    %439 = vmatprep.subr.mxu0 0.0
    %440 = vmatpush1.msra.mxu0 0.0
    %441 = vmatprep.subr.mxu0 0.0
    %442 = vmatpush1.msra.mxu0 0.0
    %443 = vmatprep.subr.mxu0 0.0
    %444 = vmatpush1.msra.mxu0 0.0
    %445 = vmatprep.subr.mxu0 0.0
    %446 = vmatpush1.msra.mxu0 0.0
    %447 = vmatprep.subr.mxu0 0.0
    %448 = vmatpush1.msra.mxu0 0.0
    %449 = vmatprep.subr.mxu0 0.0
    %450 = vmatpush1.msra.mxu0 0.0
    %451 = vmatprep.subr.mxu0 0.0
    %452 = vmatpush1.msra.mxu0 0.0
    %453 = vmatprep.subr.mxu0 0.0
    %454 = vmatpush1.msra.mxu0 0.0
    %455 = vmatprep.subr.mxu0 0.0
    %456 = vmatpush1.msra.mxu0 0.0
    %457 = vmatprep.subr.mxu0 0.0
    %458 = vmatpush1.msra.mxu0 0.0
    %459 = vmatprep.subr.mxu0 0.0
    %460 = vmatpush1.msra.mxu0 0.0
    %461 = vmatprep.subr.mxu0 0.0
    %462 = vmatpush1.msra.mxu0 0.0
    %463 = vmatprep.subr.mxu0 0.0
    %464 = vmatpush1.msra.mxu0 0.0
    %465 = vmatprep.subr.mxu0 0.0
    %466 = vmatpush1.msra.mxu0 0.0
    %467 = vmatprep.mubr.f32.mxu0 0.0
    %468 = vmatmul.mubr.f32.gmra.mrb[0].mxu0 %v401
    %v469 = vpop.f32.mrb[0].mxu0
    %v470 = vadd.f32 %v288, %v469
    %v471 = vpop.f32.mrb[0].mxu0
    %v472 = vadd.f32 %v292, %v471
    %473 = vdwg.mxu0
    %474 = vmatprep.subr.mxu0 0.0
    %475 = vmatpush1.msra.mxu0 %v254
    %476 = vmatprep.subr.mxu0 0.0
    %477 = vmatpush1.msra.mxu0 %v257
    %478 = vmatprep.subr.mxu0 0.0
    %479 = vmatpush1.msra.mxu0 %v260
    %480 = vmatprep.subr.mxu0 0.0
    %481 = vmatpush1.msra.mxu0 %v263
    %482 = vmatprep.subr.mxu0 0.0
    %483 = vmatpush1.msra.mxu0 %v266
    %484 = vmatprep.subr.mxu0 0.0
    %485 = vmatpush1.msra.mxu0 %v269
    %486 = vmatprep.subr.mxu0 0.0
    %487 = vmatpush1.msra.mxu0 %v272
    %488 = vmatprep.subr.mxu0 0.0
    %489 = vmatpush1.msra.mxu0 %v275
    %490 = vmatprep.subr.mxu0 0.0
    %491 = vmatpush1.msra.mxu0 0.0
    %492 = vmatprep.subr.mxu0 0.0
    %493 = vmatpush1.msra.mxu0 0.0
    %494 = vmatprep.subr.mxu0 0.0
    %495 = vmatpush1.msra.mxu0 0.0
    %496 = vmatprep.subr.mxu0 0.0
    %497 = vmatpush1.msra.mxu0 0.0
    %498 = vmatprep.subr.mxu0 0.0
    %499 = vmatpush1.msra.mxu0 0.0
    %500 = vmatprep.subr.mxu0 0.0
    %501 = vmatpush1.msra.mxu0 0.0
    %502 = vmatprep.subr.mxu0 0.0
    %503 = vmatpush1.msra.mxu0 0.0
    %504 = vmatprep.subr.mxu0 0.0
    %505 = vmatpush1.msra.mxu0 0.0
    %506 = vmatprep.subr.mxu0 0.0
    %507 = vmatpush1.msra.mxu0 0.0
    %508 = vmatprep.subr.mxu0 0.0
    %509 = vmatpush1.msra.mxu0 0.0
    %510 = vmatprep.subr.mxu0 0.0
    %511 = vmatpush1.msra.mxu0 0.0
    %512 = vmatprep.subr.mxu0 0.0
    %513 = vmatpush1.msra.mxu0 0.0
    %514 = vmatprep.subr.mxu0 0.0
    %515 = vmatpush1.msra.mxu0 0.0
    %516 = vmatprep.subr.mxu0 0.0
    %517 = vmatpush1.msra.mxu0 0.0
    %518 = vmatprep.subr.mxu0 0.0
    %519 = vmatpush1.msra.mxu0 0.0
    %520 = vmatprep.subr.mxu0 0.0
    %521 = vmatpush1.msra.mxu0 0.0
    %522 = vmatprep.subr.mxu0 0.0
    %523 = vmatpush1.msra.mxu0 0.0
    %524 = vmatprep.subr.mxu0 0.0
    %525 = vmatpush1.msra.mxu0 0.0
    %526 = vmatprep.subr.mxu0 0.0
    %527 = vmatpush1.msra.mxu0 0.0
    %528 = vmatprep.subr.mxu0 0.0
    %529 = vmatpush1.msra.mxu0 0.0
    %530 = vmatprep.subr.mxu0 0.0
    %531 = vmatpush1.msra.mxu0 0.0
    %532 = vmatprep.subr.mxu0 0.0
    %533 = vmatpush1.msra.mxu0 0.0
    %534 = vmatprep.subr.mxu0 0.0
    %535 = vmatpush1.msra.mxu0 0.0
    %536 = vmatprep.subr.mxu0 0.0
    %537 = vmatpush1.msra.mxu0 0.0
    %538 = vmatprep.mubr.f32.mxu0 0.0
    %539 = vmatmul.mubr.f32.gmra.mrb[0].mxu0 %v401
    %v540 = vpop.f32.mrb[0].mxu0
    %v541 = vadd.f32 %v296, %v540
    %v542 = vpop.f32.mrb[0].mxu0
    %543 = vdwg.mxu0
    %v544 = vmul.f32 %v470, 0.5
    %v545 = vtanh.pop %v544
    %v546 = vadd.f32 %v545, 1.0
    %v547 = vmul.f32 %v546, 0.5
    %v548 = vmul.f32 %v547, %v541
    %v549 = vadd.f32 %v472, %v548
    %v550 = vtanh.pop %v549
    %v551 = vsub.f32 1.0, %v547
    %553 = vrot.lane.b32.xlu0 %v550, 64
    %v554 = vpop.permute.xlu0 %553
    %v556 = vmul.f32 %v551, %v554
    %v557 = vmul.f32 %v547, 0.0
    %v558 = vadd.f32 %v556, %v557
    %s559 = scalar_lea.vmem [#allocation2], 16
    %v560 = vld [vmem:[%s559] sm:$0xff]
    %v561 = vld [vmem:[%s559 + $0x8] sm:$0xff]
    %v562 = vsel %vm302, %v396, 0
    %564 = vmatprep.subr.mxu0 %v245
    %565 = vmatpush1.msra.mxu0 %v244
    %566 = vmatprep.subr.mxu0 %v247
    %567 = vmatpush1.msra.mxu0 %v246
    %568 = vmatprep.subr.mxu0 %v249
    %569 = vmatpush1.msra.mxu0 %v248
    %570 = vmatprep.subr.mxu0 %v251
    %571 = vmatpush1.msra.mxu0 %v250
    %572 = vmatprep.subr.mxu0 0.0
    %573 = vmatpush1.msra.mxu0 0.0
    %574 = vmatprep.subr.mxu0 0.0
    %575 = vmatpush1.msra.mxu0 0.0
    %576 = vmatprep.subr.mxu0 0.0
    %577 = vmatpush1.msra.mxu0 0.0
    %578 = vmatprep.subr.mxu0 0.0
    %579 = vmatpush1.msra.mxu0 0.0
    %580 = vmatprep.subr.mxu0 0.0
    %581 = vmatpush1.msra.mxu0 0.0
    %582 = vmatprep.subr.mxu0 0.0
    %583 = vmatpush1.msra.mxu0 0.0
    %584 = vmatprep.subr.mxu0 0.0
    %585 = vmatpush1.msra.mxu0 0.0
    %586 = vmatprep.subr.mxu0 0.0
    %587 = vmatpush1.msra.mxu0 0.0
    %588 = vmatprep.subr.mxu0 0.0
    %589 = vmatpush1.msra.mxu0 0.0
    %590 = vmatprep.subr.mxu0 0.0
    %591 = vmatpush1.msra.mxu0 0.0
    %592 = vmatprep.subr.mxu0 0.0
    %593 = vmatpush1.msra.mxu0 0.0
    %594 = vmatprep.subr.mxu0 0.0
    %595 = vmatpush1.msra.mxu0 0.0
    %596 = vmatprep.subr.mxu0 0.0
    %597 = vmatpush1.msra.mxu0 0.0
    %598 = vmatprep.subr.mxu0 0.0
    %599 = vmatpush1.msra.mxu0 0.0
    %600 = vmatprep.subr.mxu0 0.0
    %601 = vmatpush1.msra.mxu0 0.0
    %602 = vmatprep.subr.mxu0 0.0
    %603 = vmatpush1.msra.mxu0 0.0
    %604 = vmatprep.subr.mxu0 0.0
    %605 = vmatpush1.msra.mxu0 0.0
    %606 = vmatprep.subr.mxu0 0.0
    %607 = vmatpush1.msra.mxu0 0.0
    %608 = vmatprep.subr.mxu0 0.0
    %609 = vmatpush1.msra.mxu0 0.0
    %610 = vmatprep.subr.mxu0 0.0
    %611 = vmatpush1.msra.mxu0 0.0
    %612 = vmatprep.subr.mxu0 0.0
    %613 = vmatpush1.msra.mxu0 0.0
    %614 = vmatprep.subr.mxu0 0.0
    %615 = vmatpush1.msra.mxu0 0.0
    %616 = vmatprep.subr.mxu0 0.0
    %617 = vmatpush1.msra.mxu0 0.0
    %618 = vmatprep.subr.mxu0 0.0
    %619 = vmatpush1.msra.mxu0 0.0
    %620 = vmatprep.subr.mxu0 0.0
    %621 = vmatpush1.msra.mxu0 0.0
    %622 = vmatprep.subr.mxu0 0.0
    %623 = vmatpush1.msra.mxu0 0.0
    %624 = vmatprep.subr.mxu0 0.0
    %625 = vmatpush1.msra.mxu0 0.0
    %626 = vmatprep.subr.mxu0 0.0
    %627 = vmatpush1.msra.mxu0 0.0
    %628 = vmatprep.mubr.f32.mxu0 0.0
    %629 = vmatmul.mubr.f32.gmra.mrb[0].mxu0 %v562
    %v630 = vpop.f32.mrb[0].mxu0
    %v631 = vadd.f32 0.0, %v630
    %v632 = vpop.f32.mrb[0].mxu0
    %v633 = vadd.f32 0.0, %v632
    %634 = vdwg.mxu0
    %v635 = vadd.f32 %v560, %v631
    %v636 = vmul.f32 %v635, 0.5
    %v637 = vtanh.pop %v636
    %v638 = vadd.f32 %v637, 1.0
    %v639 = vmul.f32 %v638, 0.5
    %v640 = vadd.f32 %v633, %v281
    %v641 = vmul.f32 %v639, %v640
    %v642 = vadd.f32 %v561, %v641
    %v643 = vtanh.pop %v642
    %v644 = vsub.f32 1.0, %v639
    %646 = vrot.lane.b32.xlu0 %v643, 64
    %v647 = vpop.permute.xlu0 %646
    %v649 = vmul.f32 %v644, %v647
    %v650 = vmul.f32 %v639, %v393
    %v651 = vadd.f32 %v649, %v650
    %653 = vrot.lane.b32.xlu0 %v651, 64
    %v654 = vpop.permute.xlu0 %653
    %657 = vrot.lane.b32.xlu0 %v558, 96
    %v658 = vpop.permute.xlu0 %657
    %v660 = vsel %vm302, %v654, %v658
    %v662 = vsel %vm399, %v660, 0
    %664 = vmatprep.subr.mxu0 %v253
    %665 = vmatpush1.msra.mxu0 %v252
    %666 = vmatprep.subr.mxu0 %v256
    %667 = vmatpush1.msra.mxu0 %v255
    %668 = vmatprep.subr.mxu0 %v259
    %669 = vmatpush1.msra.mxu0 %v258
    %670 = vmatprep.subr.mxu0 %v262
    %671 = vmatpush1.msra.mxu0 %v261
    %672 = vmatprep.subr.mxu0 %v265
    %673 = vmatpush1.msra.mxu0 %v264
    %674 = vmatprep.subr.mxu0 %v268
    %675 = vmatpush1.msra.mxu0 %v267
    %676 = vmatprep.subr.mxu0 %v271
    %677 = vmatpush1.msra.mxu0 %v270
    %678 = vmatprep.subr.mxu0 %v274
    %679 = vmatpush1.msra.mxu0 %v273
    %680 = vmatprep.subr.mxu0 0.0
    %681 = vmatpush1.msra.mxu0 0.0
    %682 = vmatprep.subr.mxu0 0.0
    %683 = vmatpush1.msra.mxu0 0.0
    %684 = vmatprep.subr.mxu0 0.0
    %685 = vmatpush1.msra.mxu0 0.0
    %686 = vmatprep.subr.mxu0 0.0
    %687 = vmatpush1.msra.mxu0 0.0
    %688 = vmatprep.subr.mxu0 0.0
    %689 = vmatpush1.msra.mxu0 0.0
    %690 = vmatprep.subr.mxu0 0.0
    %691 = vmatpush1.msra.mxu0 0.0
    %692 = vmatprep.subr.mxu0 0.0
    %693 = vmatpush1.msra.mxu0 0.0
    %694 = vmatprep.subr.mxu0 0.0
    %695 = vmatpush1.msra.mxu0 0.0
    %696 = vmatprep.subr.mxu0 0.0
    %697 = vmatpush1.msra.mxu0 0.0
    %698 = vmatprep.subr.mxu0 0.0
    %699 = vmatpush1.msra.mxu0 0.0
    %700 = vmatprep.subr.mxu0 0.0
    %701 = vmatpush1.msra.mxu0 0.0
    %702 = vmatprep.subr.mxu0 0.0
    %703 = vmatpush1.msra.mxu0 0.0
    %704 = vmatprep.subr.mxu0 0.0
    %705 = vmatpush1.msra.mxu0 0.0
    %706 = vmatprep.subr.mxu0 0.0
    %707 = vmatpush1.msra.mxu0 0.0
    %708 = vmatprep.subr.mxu0 0.0
    %709 = vmatpush1.msra.mxu0 0.0
    %710 = vmatprep.subr.mxu0 0.0
    %711 = vmatpush1.msra.mxu0 0.0
    %712 = vmatprep.subr.mxu0 0.0
    %713 = vmatpush1.msra.mxu0 0.0
    %714 = vmatprep.subr.mxu0 0.0
    %715 = vmatpush1.msra.mxu0 0.0
    %716 = vmatprep.subr.mxu0 0.0
    %717 = vmatpush1.msra.mxu0 0.0
    %718 = vmatprep.subr.mxu0 0.0
    %719 = vmatpush1.msra.mxu0 0.0
    %720 = vmatprep.subr.mxu0 0.0
    %721 = vmatpush1.msra.mxu0 0.0
    %722 = vmatprep.subr.mxu0 0.0
    %723 = vmatpush1.msra.mxu0 0.0
    %724 = vmatprep.subr.mxu0 0.0
    %725 = vmatpush1.msra.mxu0 0.0
    %726 = vmatprep.subr.mxu0 0.0
    %727 = vmatpush1.msra.mxu0 0.0
    %728 = vmatprep.mubr.f32.mxu0 0.0
    %729 = vmatmul.mubr.f32.gmra.mrb[0].mxu0 %v662
    %v730 = vpop.f32.mrb[0].mxu0
    %v731 = vadd.f32 %v288, %v730
    %v732 = vpop.f32.mrb[0].mxu0
    %v733 = vadd.f32 %v292, %v732
    %734 = vdwg.mxu0
    %735 = vmatprep.subr.mxu0 0.0
    %736 = vmatpush1.msra.mxu0 %v254
    %737 = vmatprep.subr.mxu0 0.0
    %738 = vmatpush1.msra.mxu0 %v257
    %739 = vmatprep.subr.mxu0 0.0
    %740 = vmatpush1.msra.mxu0 %v260
    %741 = vmatprep.subr.mxu0 0.0
    %742 = vmatpush1.msra.mxu0 %v263
    %743 = vmatprep.subr.mxu0 0.0
    %744 = vmatpush1.msra.mxu0 %v266
    %745 = vmatprep.subr.mxu0 0.0
    %746 = vmatpush1.msra.mxu0 %v269
    %747 = vmatprep.subr.mxu0 0.0
    %748 = vmatpush1.msra.mxu0 %v272
    %749 = vmatprep.subr.mxu0 0.0
    %750 = vmatpush1.msra.mxu0 %v275
    %751 = vmatprep.subr.mxu0 0.0
    %752 = vmatpush1.msra.mxu0 0.0
    %753 = vmatprep.subr.mxu0 0.0
    %754 = vmatpush1.msra.mxu0 0.0
    %755 = vmatprep.subr.mxu0 0.0
    %756 = vmatpush1.msra.mxu0 0.0
    %757 = vmatprep.subr.mxu0 0.0
    %758 = vmatpush1.msra.mxu0 0.0
    %759 = vmatprep.subr.mxu0 0.0
    %760 = vmatpush1.msra.mxu0 0.0
    %761 = vmatprep.subr.mxu0 0.0
    %762 = vmatpush1.msra.mxu0 0.0
    %763 = vmatprep.subr.mxu0 0.0
    %764 = vmatpush1.msra.mxu0 0.0
    %765 = vmatprep.subr.mxu0 0.0
    %766 = vmatpush1.msra.mxu0 0.0
    %767 = vmatprep.subr.mxu0 0.0
    %768 = vmatpush1.msra.mxu0 0.0
    %769 = vmatprep.subr.mxu0 0.0
    %770 = vmatpush1.msra.mxu0 0.0
    %771 = vmatprep.subr.mxu0 0.0
    %772 = vmatpush1.msra.mxu0 0.0
    %773 = vmatprep.subr.mxu0 0.0
    %774 = vmatpush1.msra.mxu0 0.0
    %775 = vmatprep.subr.mxu0 0.0
    %776 = vmatpush1.msra.mxu0 0.0
    %777 = vmatprep.subr.mxu0 0.0
    %778 = vmatpush1.msra.mxu0 0.0
    %779 = vmatprep.subr.mxu0 0.0
    %780 = vmatpush1.msra.mxu0 0.0
    %781 = vmatprep.subr.mxu0 0.0
    %782 = vmatpush1.msra.mxu0 0.0
    %783 = vmatprep.subr.mxu0 0.0
    %784 = vmatpush1.msra.mxu0 0.0
    %785 = vmatprep.subr.mxu0 0.0
    %786 = vmatpush1.msra.mxu0 0.0
    %787 = vmatprep.subr.mxu0 0.0
    %788 = vmatpush1.msra.mxu0 0.0
    %789 = vmatprep.subr.mxu0 0.0
    %790 = vmatpush1.msra.mxu0 0.0
    %791 = vmatprep.subr.mxu0 0.0
    %792 = vmatpush1.msra.mxu0 0.0
    %793 = vmatprep.subr.mxu0 0.0
    %794 = vmatpush1.msra.mxu0 0.0
    %795 = vmatprep.subr.mxu0 0.0
    %796 = vmatpush1.msra.mxu0 0.0
    %797 = vmatprep.subr.mxu0 0.0
    %798 = vmatpush1.msra.mxu0 0.0
    %799 = vmatprep.mubr.f32.mxu0 0.0
    %800 = vmatmul.mubr.f32.gmra.mrb[0].mxu0 %v662
    %v801 = vpop.f32.mrb[0].mxu0
    %v802 = vadd.f32 %v296, %v801
    %v803 = vpop.f32.mrb[0].mxu0
    %804 = vdwg.mxu0
    %v805 = vmul.f32 %v731, 0.5
    %v806 = vtanh.pop %v805
    %v807 = vadd.f32 %v806, 1.0
    %v808 = vmul.f32 %v807, 0.5
    %v809 = vmul.f32 %v808, %v802
    %v810 = vadd.f32 %v733, %v809
    %v811 = vtanh.pop %v810
    %v812 = vsub.f32 1.0, %v808
    %814 = vrot.lane.b32.xlu0 %v811, 64
    %v815 = vpop.permute.xlu0 %814
    %v817 = vmul.f32 %v812, %v815
    %v818 = vmul.f32 %v808, %v558
    %v819 = vadd.f32 %v817, %v818
    %s820 = scalar_lea.vmem [#allocation2], 32
    %v821 = vld [vmem:[%s820] sm:$0xff]
    %v822 = vld [vmem:[%s820 + $0x8] sm:$0xff]
    %v823 = vsel %vm302, %v654, 0
    %825 = vmatprep.subr.mxu0 %v245
    %826 = vmatpush1.msra.mxu0 %v244
    %827 = vmatprep.subr.mxu0 %v247
    %828 = vmatpush1.msra.mxu0 %v246
    %829 = vmatprep.subr.mxu0 %v249
    %830 = vmatpush1.msra.mxu0 %v248
    %831 = vmatprep.subr.mxu0 %v251
    %832 = vmatpush1.msra.mxu0 %v250
    %833 = vmatprep.subr.mxu0 0.0
    %834 = vmatpush1.msra.mxu0 0.0
    %835 = vmatprep.subr.mxu0 0.0
    %836 = vmatpush1.msra.mxu0 0.0
    %837 = vmatprep.subr.mxu0 0.0
    %838 = vmatpush1.msra.mxu0 0.0
    %839 = vmatprep.subr.mxu0 0.0
    %840 = vmatpush1.msra.mxu0 0.0
    %841 = vmatprep.subr.mxu0 0.0
    %842 = vmatpush1.msra.mxu0 0.0
    %843 = vmatprep.subr.mxu0 0.0
    %844 = vmatpush1.msra.mxu0 0.0
    %845 = vmatprep.subr.mxu0 0.0
    %846 = vmatpush1.msra.mxu0 0.0
    %847 = vmatprep.subr.mxu0 0.0
    %848 = vmatpush1.msra.mxu0 0.0
    %849 = vmatprep.subr.mxu0 0.0
    %850 = vmatpush1.msra.mxu0 0.0
    %851 = vmatprep.subr.mxu0 0.0
    %852 = vmatpush1.msra.mxu0 0.0
    %853 = vmatprep.subr.mxu0 0.0
    %854 = vmatpush1.msra.mxu0 0.0
    %855 = vmatprep.subr.mxu0 0.0
    %856 = vmatpush1.msra.mxu0 0.0
    %857 = vmatprep.subr.mxu0 0.0
    %858 = vmatpush1.msra.mxu0 0.0
    %859 = vmatprep.subr.mxu0 0.0
    %860 = vmatpush1.msra.mxu0 0.0
    %861 = vmatprep.subr.mxu0 0.0
    %862 = vmatpush1.msra.mxu0 0.0
    %863 = vmatprep.subr.mxu0 0.0
    %864 = vmatpush1.msra.mxu0 0.0
    %865 = vmatprep.subr.mxu0 0.0
    %866 = vmatpush1.msra.mxu0 0.0
    %867 = vmatprep.subr.mxu0 0.0
    %868 = vmatpush1.msra.mxu0 0.0
    %869 = vmatprep.subr.mxu0 0.0
    %870 = vmatpush1.msra.mxu0 0.0
    %871 = vmatprep.subr.mxu0 0.0
    %872 = vmatpush1.msra.mxu0 0.0
    %873 = vmatprep.subr.mxu0 0.0
    %874 = vmatpush1.msra.mxu0 0.0
    %875 = vmatprep.subr.mxu0 0.0
    %876 = vmatpush1.msra.mxu0 0.0
    %877 = vmatprep.subr.mxu0 0.0
    %878 = vmatpush1.msra.mxu0 0.0
    %879 = vmatprep.subr.mxu0 0.0
    %880 = vmatpush1.msra.mxu0 0.0
    %881 = vmatprep.subr.mxu0 0.0
    %882 = vmatpush1.msra.mxu0 0.0
    %883 = vmatprep.subr.mxu0 0.0
    %884 = vmatpush1.msra.mxu0 0.0
    %885 = vmatprep.subr.mxu0 0.0
    %886 = vmatpush1.msra.mxu0 0.0
    %887 = vmatprep.subr.mxu0 0.0
    %888 = vmatpush1.msra.mxu0 0.0
    %889 = vmatprep.mubr.f32.mxu0 0.0
    %890 = vmatmul.mubr.f32.gmra.mrb[0].mxu0 %v823
    %v891 = vpop.f32.mrb[0].mxu0
    %v892 = vadd.f32 0.0, %v891
    %v893 = vpop.f32.mrb[0].mxu0
    %v894 = vadd.f32 0.0, %v893
    %895 = vdwg.mxu0
    %v896 = vadd.f32 %v821, %v892
    %v897 = vmul.f32 %v896, 0.5
    %v898 = vtanh.pop %v897
    %v899 = vadd.f32 %v898, 1.0
    %v900 = vmul.f32 %v899, 0.5
    %v901 = vadd.f32 %v894, %v281
    %v902 = vmul.f32 %v900, %v901
    %v903 = vadd.f32 %v822, %v902
    %v904 = vtanh.pop %v903
    %v905 = vsub.f32 1.0, %v900
    %907 = vrot.lane.b32.xlu0 %v904, 64
    %v908 = vpop.permute.xlu0 %907
    %v910 = vmul.f32 %v905, %v908
    %v911 = vmul.f32 %v900, %v651
    %v912 = vadd.f32 %v910, %v911
    %914 = vrot.lane.b32.xlu0 %v912, 64
    %v915 = vpop.permute.xlu0 %914
    %918 = vrot.lane.b32.xlu0 %v819, 96
    %v919 = vpop.permute.xlu0 %918
    %v921 = vsel %vm302, %v915, %v919
    %v923 = vsel %vm399, %v921, 0
    %925 = vmatprep.subr.mxu0 %v253
    %926 = vmatpush1.msra.mxu0 %v252
    %927 = vmatprep.subr.mxu0 %v256
    %928 = vmatpush1.msra.mxu0 %v255
    %929 = vmatprep.subr.mxu0 %v259
    %930 = vmatpush1.msra.mxu0 %v258
    %931 = vmatprep.subr.mxu0 %v262
    %932 = vmatpush1.msra.mxu0 %v261
    %933 = vmatprep.subr.mxu0 %v265
    %934 = vmatpush1.msra.mxu0 %v264
    %935 = vmatprep.subr.mxu0 %v268
    %936 = vmatpush1.msra.mxu0 %v267
    %937 = vmatprep.subr.mxu0 %v271
    %938 = vmatpush1.msra.mxu0 %v270
    %939 = vmatprep.subr.mxu0 %v274
    %940 = vmatpush1.msra.mxu0 %v273
    %941 = vmatprep.subr.mxu0 0.0
    %942 = vmatpush1.msra.mxu0 0.0
    %943 = vmatprep.subr.mxu0 0.0
    %944 = vmatpush1.msra.mxu0 0.0
    %945 = vmatprep.subr.mxu0 0.0
    %946 = vmatpush1.msra.mxu0 0.0
    %947 = vmatprep.subr.mxu0 0.0
    %948 = vmatpush1.msra.mxu0 0.0
    %949 = vmatprep.subr.mxu0 0.0
    %950 = vmatpush1.msra.mxu0 0.0
    %951 = vmatprep.subr.mxu0 0.0
    %952 = vmatpush1.msra.mxu0 0.0
    %953 = vmatprep.subr.mxu0 0.0
    %954 = vmatpush1.msra.mxu0 0.0
    %955 = vmatprep.subr.mxu0 0.0
    %956 = vmatpush1.msra.mxu0 0.0
    %957 = vmatprep.subr.mxu0 0.0
    %958 = vmatpush1.msra.mxu0 0.0
    %959 = vmatprep.subr.mxu0 0.0
    %960 = vmatpush1.msra.mxu0 0.0
    %961 = vmatprep.subr.mxu0 0.0
    %962 = vmatpush1.msra.mxu0 0.0
    %963 = vmatprep.subr.mxu0 0.0
    %964 = vmatpush1.msra.mxu0 0.0
    %965 = vmatprep.subr.mxu0 0.0
    %966 = vmatpush1.msra.mxu0 0.0
    %967 = vmatprep.subr.mxu0 0.0
    %968 = vmatpush1.msra.mxu0 0.0
    %969 = vmatprep.subr.mxu0 0.0
    %970 = vmatpush1.msra.mxu0 0.0
    %971 = vmatprep.subr.mxu0 0.0
    %972 = vmatpush1.msra.mxu0 0.0
    %973 = vmatprep.subr.mxu0 0.0
    %974 = vmatpush1.msra.mxu0 0.0
    %975 = vmatprep.subr.mxu0 0.0
    %976 = vmatpush1.msra.mxu0 0.0
    %977 = vmatprep.subr.mxu0 0.0
    %978 = vmatpush1.msra.mxu0 0.0
    %979 = vmatprep.subr.mxu0 0.0
    %980 = vmatpush1.msra.mxu0 0.0
    %981 = vmatprep.subr.mxu0 0.0
    %982 = vmatpush1.msra.mxu0 0.0
    %983 = vmatprep.subr.mxu0 0.0
    %984 = vmatpush1.msra.mxu0 0.0
    %985 = vmatprep.subr.mxu0 0.0
    %986 = vmatpush1.msra.mxu0 0.0
    %987 = vmatprep.subr.mxu0 0.0
    %988 = vmatpush1.msra.mxu0 0.0
    %989 = vmatprep.mubr.f32.mxu0 0.0
    %990 = vmatmul.mubr.f32.gmra.mrb[0].mxu0 %v923
    %v991 = vpop.f32.mrb[0].mxu0
    %v992 = vadd.f32 %v288, %v991
    %v993 = vpop.f32.mrb[0].mxu0
    %v994 = vadd.f32 %v292, %v993
    %995 = vdwg.mxu0
    %996 = vmatprep.subr.mxu0 0.0
    %997 = vmatpush1.msra.mxu0 %v254
    %998 = vmatprep.subr.mxu0 0.0
    %999 = vmatpush1.msra.mxu0 %v257
    %1000 = vmatprep.subr.mxu0 0.0
    %1001 = vmatpush1.msra.mxu0 %v260
    %1002 = vmatprep.subr.mxu0 0.0
    %1003 = vmatpush1.msra.mxu0 %v263
    %1004 = vmatprep.subr.mxu0 0.0
    %1005 = vmatpush1.msra.mxu0 %v266
    %1006 = vmatprep.subr.mxu0 0.0
    %1007 = vmatpush1.msra.mxu0 %v269
    %1008 = vmatprep.subr.mxu0 0.0
    %1009 = vmatpush1.msra.mxu0 %v272
    %1010 = vmatprep.subr.mxu0 0.0
    %1011 = vmatpush1.msra.mxu0 %v275
    %1012 = vmatprep.subr.mxu0 0.0
    %1013 = vmatpush1.msra.mxu0 0.0
    %1014 = vmatprep.subr.mxu0 0.0
    %1015 = vmatpush1.msra.mxu0 0.0
    %1016 = vmatprep.subr.mxu0 0.0
    %1017 = vmatpush1.msra.mxu0 0.0
    %1018 = vmatprep.subr.mxu0 0.0
    %1019 = vmatpush1.msra.mxu0 0.0
    %1020 = vmatprep.subr.mxu0 0.0
    %1021 = vmatpush1.msra.mxu0 0.0
    %1022 = vmatprep.subr.mxu0 0.0
    %1023 = vmatpush1.msra.mxu0 0.0
    %1024 = vmatprep.subr.mxu0 0.0
    %1025 = vmatpush1.msra.mxu0 0.0
    %1026 = vmatprep.subr.mxu0 0.0
    %1027 = vmatpush1.msra.mxu0 0.0
    %1028 = vmatprep.subr.mxu0 0.0
    %1029 = vmatpush1.msra.mxu0 0.0
    %1030 = vmatprep.subr.mxu0 0.0
    %1031 = vmatpush1.msra.mxu0 0.0
    %1032 = vmatprep.subr.mxu0 0.0
    %1033 = vmatpush1.msra.mxu0 0.0
    %1034 = vmatprep.subr.mxu0 0.0
    %1035 = vmatpush1.msra.mxu0 0.0
    %1036 = vmatprep.subr.mxu0 0.0
    %1037 = vmatpush1.msra.mxu0 0.0
    %1038 = vmatprep.subr.mxu0 0.0
    %1039 = vmatpush1.msra.mxu0 0.0
    %1040 = vmatprep.subr.mxu0 0.0
    %1041 = vmatpush1.msra.mxu0 0.0
    %1042 = vmatprep.subr.mxu0 0.0
    %1043 = vmatpush1.msra.mxu0 0.0
    %1044 = vmatprep.subr.mxu0 0.0
    %1045 = vmatpush1.msra.mxu0 0.0
    %1046 = vmatprep.subr.mxu0 0.0
    %1047 = vmatpush1.msra.mxu0 0.0
    %1048 = vmatprep.subr.mxu0 0.0
    %1049 = vmatpush1.msra.mxu0 0.0
    %1050 = vmatprep.subr.mxu0 0.0
    %1051 = vmatpush1.msra.mxu0 0.0
    %1052 = vmatprep.subr.mxu0 0.0
    %1053 = vmatpush1.msra.mxu0 0.0
    %1054 = vmatprep.subr.mxu0 0.0
    %1055 = vmatpush1.msra.mxu0 0.0
    %1056 = vmatprep.subr.mxu0 0.0
    %1057 = vmatpush1.msra.mxu0 0.0
    %1058 = vmatprep.subr.mxu0 0.0
    %1059 = vmatpush1.msra.mxu0 0.0
    %1060 = vmatprep.mubr.f32.mxu0 0.0
    %1061 = vmatmul.mubr.f32.gmra.mrb[0].mxu0 %v923
    %v1062 = vpop.f32.mrb[0].mxu0
    %v1063 = vadd.f32 %v296, %v1062
    %v1064 = vpop.f32.mrb[0].mxu0
    %1065 = vdwg.mxu0
    %v1066 = vmul.f32 %v992, 0.5
    %v1067 = vtanh.pop %v1066
    %v1068 = vadd.f32 %v1067, 1.0
    %v1069 = vmul.f32 %v1068, 0.5
    %v1070 = vmul.f32 %v1069, %v1063
    %v1071 = vadd.f32 %v994, %v1070
    %v1072 = vtanh.pop %v1071
    %v1073 = vsub.f32 1.0, %v1069
    %1075 = vrot.lane.b32.xlu0 %v1072, 64
    %v1076 = vpop.permute.xlu0 %1075
    %v1078 = vmul.f32 %v1073, %v1076
    %v1079 = vmul.f32 %v1069, %v819
    %v1080 = vadd.f32 %v1078, %v1079
    %s1081 = scalar_lea.vmem [#allocation2], 48
    %v1082 = vld [vmem:[%s1081] sm:$0xff]
    %v1083 = vld [vmem:[%s1081 + $0x8] sm:$0xff]
    %v1084 = vsel %vm302, %v915, 0
    %1086 = vmatprep.subr.mxu0 %v245
    %1087 = vmatpush1.msra.mxu0 %v244
    %1088 = vmatprep.subr.mxu0 %v247
    %1089 = vmatpush1.msra.mxu0 %v246
    %1090 = vmatprep.subr.mxu0 %v249
    %1091 = vmatpush1.msra.mxu0 %v248
    %1092 = vmatprep.subr.mxu0 %v251
    %1093 = vmatpush1.msra.mxu0 %v250
    %1094 = vmatprep.subr.mxu0 0.0
    %1095 = vmatpush1.msra.mxu0 0.0
    %1096 = vmatprep.subr.mxu0 0.0
    %1097 = vmatpush1.msra.mxu0 0.0
    %1098 = vmatprep.subr.mxu0 0.0
    %1099 = vmatpush1.msra.mxu0 0.0
    %1100 = vmatprep.subr.mxu0 0.0
    %1101 = vmatpush1.msra.mxu0 0.0
    %1102 = vmatprep.subr.mxu0 0.0
    %1103 = vmatpush1.msra.mxu0 0.0
    %1104 = vmatprep.subr.mxu0 0.0
    %1105 = vmatpush1.msra.mxu0 0.0
    %1106 = vmatprep.subr.mxu0 0.0
    %1107 = vmatpush1.msra.mxu0 0.0
    %1108 = vmatprep.subr.mxu0 0.0
    %1109 = vmatpush1.msra.mxu0 0.0
    %1110 = vmatprep.subr.mxu0 0.0
    %1111 = vmatpush1.msra.mxu0 0.0
    %1112 = vmatprep.subr.mxu0 0.0
    %1113 = vmatpush1.msra.mxu0 0.0
    %1114 = vmatprep.subr.mxu0 0.0
    %1115 = vmatpush1.msra.mxu0 0.0
    %1116 = vmatprep.subr.mxu0 0.0
    %1117 = vmatpush1.msra.mxu0 0.0
    %1118 = vmatprep.subr.mxu0 0.0
    %1119 = vmatpush1.msra.mxu0 0.0
    %1120 = vmatprep.subr.mxu0 0.0
    %1121 = vmatpush1.msra.mxu0 0.0
    %1122 = vmatprep.subr.mxu0 0.0
    %1123 = vmatpush1.msra.mxu0 0.0
    %1124 = vmatprep.subr.mxu0 0.0
    %1125 = vmatpush1.msra.mxu0 0.0
    %1126 = vmatprep.subr.mxu0 0.0
    %1127 = vmatpush1.msra.mxu0 0.0
    %1128 = vmatprep.subr.mxu0 0.0
    %1129 = vmatpush1.msra.mxu0 0.0
    %1130 = vmatprep.subr.mxu0 0.0
    %1131 = vmatpush1.msra.mxu0 0.0
    %1132 = vmatprep.subr.mxu0 0.0
    %1133 = vmatpush1.msra.mxu0 0.0
    %1134 = vmatprep.subr.mxu0 0.0
    %1135 = vmatpush1.msra.mxu0 0.0
    %1136 = vmatprep.subr.mxu0 0.0
    %1137 = vmatpush1.msra.mxu0 0.0
    %1138 = vmatprep.subr.mxu0 0.0
    %1139 = vmatpush1.msra.mxu0 0.0
    %1140 = vmatprep.subr.mxu0 0.0
    %1141 = vmatpush1.msra.mxu0 0.0
    %1142 = vmatprep.subr.mxu0 0.0
    %1143 = vmatpush1.msra.mxu0 0.0
    %1144 = vmatprep.subr.mxu0 0.0
    %1145 = vmatpush1.msra.mxu0 0.0
    %1146 = vmatprep.subr.mxu0 0.0
    %1147 = vmatpush1.msra.mxu0 0.0
    %1148 = vmatprep.subr.mxu0 0.0
    %1149 = vmatpush1.msra.mxu0 0.0
    %1150 = vmatprep.mubr.f32.mxu0 0.0
    %1151 = vmatmul.mubr.f32.gmra.mrb[0].mxu0 %v1084
    %v1152 = vpop.f32.mrb[0].mxu0
    %v1153 = vadd.f32 0.0, %v1152
    %v1154 = vpop.f32.mrb[0].mxu0
    %v1155 = vadd.f32 0.0, %v1154
    %1156 = vdwg.mxu0
    %v1157 = vadd.f32 %v1082, %v1153
    %v1158 = vmul.f32 %v1157, 0.5
    %v1159 = vtanh.pop %v1158
    %v1160 = vadd.f32 %v1159, 1.0
    %v1161 = vmul.f32 %v1160, 0.5
    %v1162 = vadd.f32 %v1155, %v281
    %v1163 = vmul.f32 %v1161, %v1162
    %v1164 = vadd.f32 %v1083, %v1163
    %v1165 = vtanh.pop %v1164
    %v1166 = vsub.f32 1.0, %v1161
    %1168 = vrot.lane.b32.xlu0 %v1165, 64
    %v1169 = vpop.permute.xlu0 %1168
    %v1171 = vmul.f32 %v1166, %v1169
    %v1172 = vmul.f32 %v1161, %v912
    %v1173 = vadd.f32 %v1171, %v1172
    %1175 = vrot.lane.b32.xlu0 %v1173, 64
    %v1176 = vpop.permute.xlu0 %1175
    %1179 = vrot.lane.b32.xlu0 %v1080, 96
    %v1180 = vpop.permute.xlu0 %1179
    %v1182 = vsel %vm302, %v1176, %v1180
    %v1184 = vsel %vm399, %v1182, 0
    %1186 = vmatprep.subr.mxu0 %v253
    %1187 = vmatpush1.msra.mxu0 %v252
    %1188 = vmatprep.subr.mxu0 %v256
    %1189 = vmatpush1.msra.mxu0 %v255
    %1190 = vmatprep.subr.mxu0 %v259
    %1191 = vmatpush1.msra.mxu0 %v258
    %1192 = vmatprep.subr.mxu0 %v262
    %1193 = vmatpush1.msra.mxu0 %v261
    %1194 = vmatprep.subr.mxu0 %v265
    %1195 = vmatpush1.msra.mxu0 %v264
    %1196 = vmatprep.subr.mxu0 %v268
    %1197 = vmatpush1.msra.mxu0 %v267
    %1198 = vmatprep.subr.mxu0 %v271
    %1199 = vmatpush1.msra.mxu0 %v270
    %1200 = vmatprep.subr.mxu0 %v274
    %1201 = vmatpush1.msra.mxu0 %v273
    %1202 = vmatprep.subr.mxu0 0.0
    %1203 = vmatpush1.msra.mxu0 0.0
    %1204 = vmatprep.subr.mxu0 0.0
    %1205 = vmatpush1.msra.mxu0 0.0
    %1206 = vmatprep.subr.mxu0 0.0
    %1207 = vmatpush1.msra.mxu0 0.0
    %1208 = vmatprep.subr.mxu0 0.0
    %1209 = vmatpush1.msra.mxu0 0.0
    %1210 = vmatprep.subr.mxu0 0.0
    %1211 = vmatpush1.msra.mxu0 0.0
    %1212 = vmatprep.subr.mxu0 0.0
    %1213 = vmatpush1.msra.mxu0 0.0
    %1214 = vmatprep.subr.mxu0 0.0
    %1215 = vmatpush1.msra.mxu0 0.0
    %1216 = vmatprep.subr.mxu0 0.0
    %1217 = vmatpush1.msra.mxu0 0.0
    %1218 = vmatprep.subr.mxu0 0.0
    %1219 = vmatpush1.msra.mxu0 0.0
    %1220 = vmatprep.subr.mxu0 0.0
    %1221 = vmatpush1.msra.mxu0 0.0
    %1222 = vmatprep.subr.mxu0 0.0
    %1223 = vmatpush1.msra.mxu0 0.0
    %1224 = vmatprep.subr.mxu0 0.0
    %1225 = vmatpush1.msra.mxu0 0.0
    %1226 = vmatprep.subr.mxu0 0.0
    %1227 = vmatpush1.msra.mxu0 0.0
    %1228 = vmatprep.subr.mxu0 0.0
    %1229 = vmatpush1.msra.mxu0 0.0
    %1230 = vmatprep.subr.mxu0 0.0
    %1231 = vmatpush1.msra.mxu0 0.0
    %1232 = vmatprep.subr.mxu0 0.0
    %1233 = vmatpush1.msra.mxu0 0.0
    %1234 = vmatprep.subr.mxu0 0.0
    %1235 = vmatpush1.msra.mxu0 0.0
    %1236 = vmatprep.subr.mxu0 0.0
    %1237 = vmatpush1.msra.mxu0 0.0
    %1238 = vmatprep.subr.mxu0 0.0
    %1239 = vmatpush1.msra.mxu0 0.0
    %1240 = vmatprep.subr.mxu0 0.0
    %1241 = vmatpush1.msra.mxu0 0.0
    %1242 = vmatprep.subr.mxu0 0.0
    %1243 = vmatpush1.msra.mxu0 0.0
    %1244 = vmatprep.subr.mxu0 0.0
    %1245 = vmatpush1.msra.mxu0 0.0
    %1246 = vmatprep.subr.mxu0 0.0
    %1247 = vmatpush1.msra.mxu0 0.0
    %1248 = vmatprep.subr.mxu0 0.0
    %1249 = vmatpush1.msra.mxu0 0.0
    %1250 = vmatprep.mubr.f32.mxu0 0.0
    %1251 = vmatmul.mubr.f32.gmra.mrb[0].mxu0 %v1184
    %v1252 = vpop.f32.mrb[0].mxu0
    %v1253 = vadd.f32 %v288, %v1252
    %v1254 = vpop.f32.mrb[0].mxu0
    %v1255 = vadd.f32 %v292, %v1254
    %1256 = vdwg.mxu0
    %1257 = vmatprep.subr.mxu0 0.0
    %1258 = vmatpush1.msra.mxu0 %v254
    %1259 = vmatprep.subr.mxu0 0.0
    %1260 = vmatpush1.msra.mxu0 %v257
    %1261 = vmatprep.subr.mxu0 0.0
    %1262 = vmatpush1.msra.mxu0 %v260
    %1263 = vmatprep.subr.mxu0 0.0
    %1264 = vmatpush1.msra.mxu0 %v263
    %1265 = vmatprep.subr.mxu0 0.0
    %1266 = vmatpush1.msra.mxu0 %v266
    %1267 = vmatprep.subr.mxu0 0.0
    %1268 = vmatpush1.msra.mxu0 %v269
    %1269 = vmatprep.subr.mxu0 0.0
    %1270 = vmatpush1.msra.mxu0 %v272
    %1271 = vmatprep.subr.mxu0 0.0
    %1272 = vmatpush1.msra.mxu0 %v275
    %1273 = vmatprep.subr.mxu0 0.0
    %1274 = vmatpush1.msra.mxu0 0.0
    %1275 = vmatprep.subr.mxu0 0.0
    %1276 = vmatpush1.msra.mxu0 0.0
    %1277 = vmatprep.subr.mxu0 0.0
    %1278 = vmatpush1.msra.mxu0 0.0
    %1279 = vmatprep.subr.mxu0 0.0
    %1280 = vmatpush1.msra.mxu0 0.0
    %1281 = vmatprep.subr.mxu0 0.0
    %1282 = vmatpush1.msra.mxu0 0.0
    %1283 = vmatprep.subr.mxu0 0.0
    %1284 = vmatpush1.msra.mxu0 0.0
    %1285 = vmatprep.subr.mxu0 0.0
    %1286 = vmatpush1.msra.mxu0 0.0
    %1287 = vmatprep.subr.mxu0 0.0
    %1288 = vmatpush1.msra.mxu0 0.0
    %1289 = vmatprep.subr.mxu0 0.0
    %1290 = vmatpush1.msra.mxu0 0.0
    %1291 = vmatprep.subr.mxu0 0.0
    %1292 = vmatpush1.msra.mxu0 0.0
    %1293 = vmatprep.subr.mxu0 0.0
    %1294 = vmatpush1.msra.mxu0 0.0
    %1295 = vmatprep.subr.mxu0 0.0
    %1296 = vmatpush1.msra.mxu0 0.0
    %1297 = vmatprep.subr.mxu0 0.0
    %1298 = vmatpush1.msra.mxu0 0.0
    %1299 = vmatprep.subr.mxu0 0.0
    %1300 = vmatpush1.msra.mxu0 0.0
    %1301 = vmatprep.subr.mxu0 0.0
    %1302 = vmatpush1.msra.mxu0 0.0
    %1303 = vmatprep.subr.mxu0 0.0
    %1304 = vmatpush1.msra.mxu0 0.0
    %1305 = vmatprep.subr.mxu0 0.0
    %1306 = vmatpush1.msra.mxu0 0.0
    %1307 = vmatprep.subr.mxu0 0.0
    %1308 = vmatpush1.msra.mxu0 0.0
    %1309 = vmatprep.subr.mxu0 0.0
    %1310 = vmatpush1.msra.mxu0 0.0
    %1311 = vmatprep.subr.mxu0 0.0
    %1312 = vmatpush1.msra.mxu0 0.0
    %1313 = vmatprep.subr.mxu0 0.0
    %1314 = vmatpush1.msra.mxu0 0.0
    %1315 = vmatprep.subr.mxu0 0.0
    %1316 = vmatpush1.msra.mxu0 0.0
    %1317 = vmatprep.subr.mxu0 0.0
    %1318 = vmatpush1.msra.mxu0 0.0
    %1319 = vmatprep.subr.mxu0 0.0
    %1320 = vmatpush1.msra.mxu0 0.0
    %1321 = vmatprep.mubr.f32.mxu0 0.0
    %1322 = vmatmul.mubr.f32.gmra.mrb[0].mxu0 %v1184
    %v1323 = vpop.f32.mrb[0].mxu0
    %v1324 = vadd.f32 %v296, %v1323
    %v1325 = vpop.f32.mrb[0].mxu0
    %1326 = vdwg.mxu0
    %v1327 = vmul.f32 %v1253, 0.5
    %v1328 = vtanh.pop %v1327
    %v1329 = vadd.f32 %v1328, 1.0
    %v1330 = vmul.f32 %v1329, 0.5
    %v1331 = vmul.f32 %v1330, %v1324
    %v1332 = vadd.f32 %v1255, %v1331
    %v1333 = vtanh.pop %v1332
    %v1334 = vsub.f32 1.0, %v1330
    %1336 = vrot.lane.b32.xlu0 %v1333, 64
    %v1337 = vpop.permute.xlu0 %1336
    %v1339 = vmul.f32 %v1334, %v1337
    %v1340 = vmul.f32 %v1330, %v1080
    %v1341 = vadd.f32 %v1339, %v1340
    %s1342 = scalar_lea.vmem [#allocation2], 64
    %v1343 = vld [vmem:[%s1342] sm:$0xff]
    %v1344 = vld [vmem:[%s1342 + $0x8] sm:$0xff]
    %v1345 = vsel %vm302, %v1176, 0
    %1347 = vmatprep.subr.mxu0 %v245
    %1348 = vmatpush1.msra.mxu0 %v244
    %1349 = vmatprep.subr.mxu0 %v247
    %1350 = vmatpush1.msra.mxu0 %v246
    %1351 = vmatprep.subr.mxu0 %v249
    %1352 = vmatpush1.msra.mxu0 %v248
    %1353 = vmatprep.subr.mxu0 %v251
    %1354 = vmatpush1.msra.mxu0 %v250
    %1355 = vmatprep.subr.mxu0 0.0
    %1356 = vmatpush1.msra.mxu0 0.0
    %1357 = vmatprep.subr.mxu0 0.0
    %1358 = vmatpush1.msra.mxu0 0.0
    %1359 = vmatprep.subr.mxu0 0.0
    %1360 = vmatpush1.msra.mxu0 0.0
    %1361 = vmatprep.subr.mxu0 0.0
    %1362 = vmatpush1.msra.mxu0 0.0
    %1363 = vmatprep.subr.mxu0 0.0
    %1364 = vmatpush1.msra.mxu0 0.0
    %1365 = vmatprep.subr.mxu0 0.0
    %1366 = vmatpush1.msra.mxu0 0.0
    %1367 = vmatprep.subr.mxu0 0.0
    %1368 = vmatpush1.msra.mxu0 0.0
    %1369 = vmatprep.subr.mxu0 0.0
    %1370 = vmatpush1.msra.mxu0 0.0
    %1371 = vmatprep.subr.mxu0 0.0
    %1372 = vmatpush1.msra.mxu0 0.0
    %1373 = vmatprep.subr.mxu0 0.0
    %1374 = vmatpush1.msra.mxu0 0.0
    %1375 = vmatprep.subr.mxu0 0.0
    %1376 = vmatpush1.msra.mxu0 0.0
    %1377 = vmatprep.subr.mxu0 0.0
    %1378 = vmatpush1.msra.mxu0 0.0
    %1379 = vmatprep.subr.mxu0 0.0
    %1380 = vmatpush1.msra.mxu0 0.0
    %1381 = vmatprep.subr.mxu0 0.0
    %1382 = vmatpush1.msra.mxu0 0.0
    %1383 = vmatprep.subr.mxu0 0.0
    %1384 = vmatpush1.msra.mxu0 0.0
    %1385 = vmatprep.subr.mxu0 0.0
    %1386 = vmatpush1.msra.mxu0 0.0
    %1387 = vmatprep.subr.mxu0 0.0
    %1388 = vmatpush1.msra.mxu0 0.0
    %1389 = vmatprep.subr.mxu0 0.0
    %1390 = vmatpush1.msra.mxu0 0.0
    %1391 = vmatprep.subr.mxu0 0.0
    %1392 = vmatpush1.msra.mxu0 0.0
    %1393 = vmatprep.subr.mxu0 0.0
    %1394 = vmatpush1.msra.mxu0 0.0
    %1395 = vmatprep.subr.mxu0 0.0
    %1396 = vmatpush1.msra.mxu0 0.0
    %1397 = vmatprep.subr.mxu0 0.0
    %1398 = vmatpush1.msra.mxu0 0.0
    %1399 = vmatprep.subr.mxu0 0.0
    %1400 = vmatpush1.msra.mxu0 0.0
    %1401 = vmatprep.subr.mxu0 0.0
    %1402 = vmatpush1.msra.mxu0 0.0
    %1403 = vmatprep.subr.mxu0 0.0
    %1404 = vmatpush1.msra.mxu0 0.0
    %1405 = vmatprep.subr.mxu0 0.0
    %1406 = vmatpush1.msra.mxu0 0.0
    %1407 = vmatprep.subr.mxu0 0.0
    %1408 = vmatpush1.msra.mxu0 0.0
    %1409 = vmatprep.subr.mxu0 0.0
    %1410 = vmatpush1.msra.mxu0 0.0
    %1411 = vmatprep.mubr.f32.mxu0 0.0
    %1412 = vmatmul.mubr.f32.gmra.mrb[0].mxu0 %v1345
    %v1413 = vpop.f32.mrb[0].mxu0
    %v1414 = vadd.f32 0.0, %v1413
    %v1415 = vpop.f32.mrb[0].mxu0
    %v1416 = vadd.f32 0.0, %v1415
    %1417 = vdwg.mxu0
    %v1418 = vadd.f32 %v1343, %v1414
    %v1419 = vmul.f32 %v1418, 0.5
    %v1420 = vtanh.pop %v1419
    %v1421 = vadd.f32 %v1420, 1.0
    %v1422 = vmul.f32 %v1421, 0.5
    %v1423 = vadd.f32 %v1416, %v281
    %v1424 = vmul.f32 %v1422, %v1423
    %v1425 = vadd.f32 %v1344, %v1424
    %v1426 = vtanh.pop %v1425
    %v1427 = vsub.f32 1.0, %v1422
    %1429 = vrot.lane.b32.xlu0 %v1426, 64
    %v1430 = vpop.permute.xlu0 %1429
    %v1432 = vmul.f32 %v1427, %v1430
    %v1433 = vmul.f32 %v1422, %v1173
    %v1434 = vadd.f32 %v1432, %v1433
    %1436 = vrot.lane.b32.xlu0 %v1434, 64
    %v1437 = vpop.permute.xlu0 %1436
    %1440 = vrot.lane.b32.xlu0 %v1341, 96
    %v1441 = vpop.permute.xlu0 %1440
    %v1443 = vsel %vm302, %v1437, %v1441
    %v1445 = vsel %vm399, %v1443, 0
    %1447 = vmatprep.subr.mxu0 %v253
    %1448 = vmatpush1.msra.mxu0 %v252
    %1449 = vmatprep.subr.mxu0 %v256
    %1450 = vmatpush1.msra.mxu0 %v255
    %1451 = vmatprep.subr.mxu0 %v259
    %1452 = vmatpush1.msra.mxu0 %v258
    %1453 = vmatprep.subr.mxu0 %v262
    %1454 = vmatpush1.msra.mxu0 %v261
    %1455 = vmatprep.subr.mxu0 %v265
    %1456 = vmatpush1.msra.mxu0 %v264
    %1457 = vmatprep.subr.mxu0 %v268
    %1458 = vmatpush1.msra.mxu0 %v267
    %1459 = vmatprep.subr.mxu0 %v271
    %1460 = vmatpush1.msra.mxu0 %v270
    %1461 = vmatprep.subr.mxu0 %v274
    %1462 = vmatpush1.msra.mxu0 %v273
    %1463 = vmatprep.subr.mxu0 0.0
    %1464 = vmatpush1.msra.mxu0 0.0
    %1465 = vmatprep.subr.mxu0 0.0
    %1466 = vmatpush1.msra.mxu0 0.0
    %1467 = vmatprep.subr.mxu0 0.0
    %1468 = vmatpush1.msra.mxu0 0.0
    %1469 = vmatprep.subr.mxu0 0.0
    %1470 = vmatpush1.msra.mxu0 0.0
    %1471 = vmatprep.subr.mxu0 0.0
    %1472 = vmatpush1.msra.mxu0 0.0
    %1473 = vmatprep.subr.mxu0 0.0
    %1474 = vmatpush1.msra.mxu0 0.0
    %1475 = vmatprep.subr.mxu0 0.0
    %1476 = vmatpush1.msra.mxu0 0.0
    %1477 = vmatprep.subr.mxu0 0.0
    %1478 = vmatpush1.msra.mxu0 0.0
    %1479 = vmatprep.subr.mxu0 0.0
    %1480 = vmatpush1.msra.mxu0 0.0
    %1481 = vmatprep.subr.mxu0 0.0
    %1482 = vmatpush1.msra.mxu0 0.0
    %1483 = vmatprep.subr.mxu0 0.0
    %1484 = vmatpush1.msra.mxu0 0.0
    %1485 = vmatprep.subr.mxu0 0.0
    %1486 = vmatpush1.msra.mxu0 0.0
    %1487 = vmatprep.subr.mxu0 0.0
    %1488 = vmatpush1.msra.mxu0 0.0
    %1489 = vmatprep.subr.mxu0 0.0
    %1490 = vmatpush1.msra.mxu0 0.0
    %1491 = vmatprep.subr.mxu0 0.0
    %1492 = vmatpush1.msra.mxu0 0.0
    %1493 = vmatprep.subr.mxu0 0.0
    %1494 = vmatpush1.msra.mxu0 0.0
    %1495 = vmatprep.subr.mxu0 0.0
    %1496 = vmatpush1.msra.mxu0 0.0
    %1497 = vmatprep.subr.mxu0 0.0
    %1498 = vmatpush1.msra.mxu0 0.0
    %1499 = vmatprep.subr.mxu0 0.0
    %1500 = vmatpush1.msra.mxu0 0.0
    %1501 = vmatprep.subr.mxu0 0.0
    %1502 = vmatpush1.msra.mxu0 0.0
    %1503 = vmatprep.subr.mxu0 0.0
    %1504 = vmatpush1.msra.mxu0 0.0
    %1505 = vmatprep.subr.mxu0 0.0
    %1506 = vmatpush1.msra.mxu0 0.0
    %1507 = vmatprep.subr.mxu0 0.0
    %1508 = vmatpush1.msra.mxu0 0.0
    %1509 = vmatprep.subr.mxu0 0.0
    %1510 = vmatpush1.msra.mxu0 0.0
    %1511 = vmatprep.mubr.f32.mxu0 0.0
    %1512 = vmatmul.mubr.f32.gmra.mrb[0].mxu0 %v1445
    %v1513 = vpop.f32.mrb[0].mxu0
    %v1514 = vadd.f32 %v288, %v1513
    %v1515 = vpop.f32.mrb[0].mxu0
    %v1516 = vadd.f32 %v292, %v1515
    %1517 = vdwg.mxu0
    %1518 = vmatprep.subr.mxu0 0.0
    %1519 = vmatpush1.msra.mxu0 %v254
    %1520 = vmatprep.subr.mxu0 0.0
    %1521 = vmatpush1.msra.mxu0 %v257
    %1522 = vmatprep.subr.mxu0 0.0
    %1523 = vmatpush1.msra.mxu0 %v260
    %1524 = vmatprep.subr.mxu0 0.0
    %1525 = vmatpush1.msra.mxu0 %v263
    %1526 = vmatprep.subr.mxu0 0.0
    %1527 = vmatpush1.msra.mxu0 %v266
    %1528 = vmatprep.subr.mxu0 0.0
    %1529 = vmatpush1.msra.mxu0 %v269
    %1530 = vmatprep.subr.mxu0 0.0
    %1531 = vmatpush1.msra.mxu0 %v272
    %1532 = vmatprep.subr.mxu0 0.0
    %1533 = vmatpush1.msra.mxu0 %v275
    %1534 = vmatprep.subr.mxu0 0.0
    %1535 = vmatpush1.msra.mxu0 0.0
    %1536 = vmatprep.subr.mxu0 0.0
    %1537 = vmatpush1.msra.mxu0 0.0
    %1538 = vmatprep.subr.mxu0 0.0
    %1539 = vmatpush1.msra.mxu0 0.0
    %1540 = vmatprep.subr.mxu0 0.0
    %1541 = vmatpush1.msra.mxu0 0.0
    %1542 = vmatprep.subr.mxu0 0.0
    %1543 = vmatpush1.msra.mxu0 0.0
    %1544 = vmatprep.subr.mxu0 0.0
    %1545 = vmatpush1.msra.mxu0 0.0
    %1546 = vmatprep.subr.mxu0 0.0
    %1547 = vmatpush1.msra.mxu0 0.0
    %1548 = vmatprep.subr.mxu0 0.0
    %1549 = vmatpush1.msra.mxu0 0.0
    %1550 = vmatprep.subr.mxu0 0.0
    %1551 = vmatpush1.msra.mxu0 0.0
    %1552 = vmatprep.subr.mxu0 0.0
    %1553 = vmatpush1.msra.mxu0 0.0
    %1554 = vmatprep.subr.mxu0 0.0
    %1555 = vmatpush1.msra.mxu0 0.0
    %1556 = vmatprep.subr.mxu0 0.0
    %1557 = vmatpush1.msra.mxu0 0.0
    %1558 = vmatprep.subr.mxu0 0.0
    %1559 = vmatpush1.msra.mxu0 0.0
    %1560 = vmatprep.subr.mxu0 0.0
    %1561 = vmatpush1.msra.mxu0 0.0
    %1562 = vmatprep.subr.mxu0 0.0
    %1563 = vmatpush1.msra.mxu0 0.0
    %1564 = vmatprep.subr.mxu0 0.0
    %1565 = vmatpush1.msra.mxu0 0.0
    %1566 = vmatprep.subr.mxu0 0.0
    %1567 = vmatpush1.msra.mxu0 0.0
    %1568 = vmatprep.subr.mxu0 0.0
    %1569 = vmatpush1.msra.mxu0 0.0
    %1570 = vmatprep.subr.mxu0 0.0
    %1571 = vmatpush1.msra.mxu0 0.0
    %1572 = vmatprep.subr.mxu0 0.0
    %1573 = vmatpush1.msra.mxu0 0.0
    %1574 = vmatprep.subr.mxu0 0.0
    %1575 = vmatpush1.msra.mxu0 0.0
    %1576 = vmatprep.subr.mxu0 0.0
    %1577 = vmatpush1.msra.mxu0 0.0
    %1578 = vmatprep.subr.mxu0 0.0
    %1579 = vmatpush1.msra.mxu0 0.0
    %1580 = vmatprep.subr.mxu0 0.0
    %1581 = vmatpush1.msra.mxu0 0.0
    %1582 = vmatprep.mubr.f32.mxu0 0.0
    %1583 = vmatmul.mubr.f32.gmra.mrb[0].mxu0 %v1445
    %v1584 = vpop.f32.mrb[0].mxu0
    %v1585 = vadd.f32 %v296, %v1584
    %v1586 = vpop.f32.mrb[0].mxu0
    %1587 = vdwg.mxu0
    %v1588 = vmul.f32 %v1514, 0.5
    %v1589 = vtanh.pop %v1588
    %v1590 = vadd.f32 %v1589, 1.0
    %v1591 = vmul.f32 %v1590, 0.5
    %v1592 = vmul.f32 %v1591, %v1585
    %v1593 = vadd.f32 %v1516, %v1592
    %v1594 = vtanh.pop %v1593
    %v1595 = vsub.f32 1.0, %v1591
    %1597 = vrot.lane.b32.xlu0 %v1594, 64
    %v1598 = vpop.permute.xlu0 %1597
    %v1600 = vmul.f32 %v1595, %v1598
    %v1601 = vmul.f32 %v1591, %v1341
    %v1602 = vadd.f32 %v1600, %v1601
    %s1603 = scalar_lea.vmem [#allocation2], 80
    %v1604 = vld [vmem:[%s1603] sm:$0xff]
    %v1605 = vld [vmem:[%s1603 + $0x8] sm:$0xff]
    %v1606 = vsel %vm302, %v1437, 0
    %1608 = vmatprep.subr.mxu0 %v245
    %1609 = vmatpush1.msra.mxu0 %v244
    %1610 = vmatprep.subr.mxu0 %v247
    %1611 = vmatpush1.msra.mxu0 %v246
    %1612 = vmatprep.subr.mxu0 %v249
    %1613 = vmatpush1.msra.mxu0 %v248
    %1614 = vmatprep.subr.mxu0 %v251
    %1615 = vmatpush1.msra.mxu0 %v250
    %1616 = vmatprep.subr.mxu0 0.0
    %1617 = vmatpush1.msra.mxu0 0.0
    %1618 = vmatprep.subr.mxu0 0.0
    %1619 = vmatpush1.msra.mxu0 0.0
    %1620 = vmatprep.subr.mxu0 0.0
    %1621 = vmatpush1.msra.mxu0 0.0
    %1622 = vmatprep.subr.mxu0 0.0
    %1623 = vmatpush1.msra.mxu0 0.0
    %1624 = vmatprep.subr.mxu0 0.0
    %1625 = vmatpush1.msra.mxu0 0.0
    %1626 = vmatprep.subr.mxu0 0.0
    %1627 = vmatpush1.msra.mxu0 0.0
    %1628 = vmatprep.subr.mxu0 0.0
    %1629 = vmatpush1.msra.mxu0 0.0
    %1630 = vmatprep.subr.mxu0 0.0
    %1631 = vmatpush1.msra.mxu0 0.0
    %1632 = vmatprep.subr.mxu0 0.0
    %1633 = vmatpush1.msra.mxu0 0.0
    %1634 = vmatprep.subr.mxu0 0.0
    %1635 = vmatpush1.msra.mxu0 0.0
    %1636 = vmatprep.subr.mxu0 0.0
    %1637 = vmatpush1.msra.mxu0 0.0
    %1638 = vmatprep.subr.mxu0 0.0
    %1639 = vmatpush1.msra.mxu0 0.0
    %1640 = vmatprep.subr.mxu0 0.0
    %1641 = vmatpush1.msra.mxu0 0.0
    %1642 = vmatprep.subr.mxu0 0.0
    %1643 = vmatpush1.msra.mxu0 0.0
    %1644 = vmatprep.subr.mxu0 0.0
    %1645 = vmatpush1.msra.mxu0 0.0
    %1646 = vmatprep.subr.mxu0 0.0
    %1647 = vmatpush1.msra.mxu0 0.0
    %1648 = vmatprep.subr.mxu0 0.0
    %1649 = vmatpush1.msra.mxu0 0.0
    %1650 = vmatprep.subr.mxu0 0.0
    %1651 = vmatpush1.msra.mxu0 0.0
    %1652 = vmatprep.subr.mxu0 0.0
    %1653 = vmatpush1.msra.mxu0 0.0
    %1654 = vmatprep.subr.mxu0 0.0
    %1655 = vmatpush1.msra.mxu0 0.0
    %1656 = vmatprep.subr.mxu0 0.0
    %1657 = vmatpush1.msra.mxu0 0.0
    %1658 = vmatprep.subr.mxu0 0.0
    %1659 = vmatpush1.msra.mxu0 0.0
    %1660 = vmatprep.subr.mxu0 0.0
    %1661 = vmatpush1.msra.mxu0 0.0
    %1662 = vmatprep.subr.mxu0 0.0
    %1663 = vmatpush1.msra.mxu0 0.0
    %1664 = vmatprep.subr.mxu0 0.0
    %1665 = vmatpush1.msra.mxu0 0.0
    %1666 = vmatprep.subr.mxu0 0.0
    %1667 = vmatpush1.msra.mxu0 0.0
    %1668 = vmatprep.subr.mxu0 0.0
    %1669 = vmatpush1.msra.mxu0 0.0
    %1670 = vmatprep.subr.mxu0 0.0
    %1671 = vmatpush1.msra.mxu0 0.0
    %1672 = vmatprep.mubr.f32.mxu0 0.0
    %1673 = vmatmul.mubr.f32.gmra.mrb[0].mxu0 %v1606
    %v1674 = vpop.f32.mrb[0].mxu0
    %v1675 = vadd.f32 0.0, %v1674
    %v1676 = vpop.f32.mrb[0].mxu0
    %v1677 = vadd.f32 0.0, %v1676
    %1678 = vdwg.mxu0
    %v1679 = vadd.f32 %v1604, %v1675
    %v1680 = vmul.f32 %v1679, 0.5
    %v1681 = vtanh.pop %v1680
    %v1682 = vadd.f32 %v1681, 1.0
    %v1683 = vmul.f32 %v1682, 0.5
    %v1684 = vadd.f32 %v1677, %v281
    %v1685 = vmul.f32 %v1683, %v1684
    %v1686 = vadd.f32 %v1605, %v1685
    %v1687 = vtanh.pop %v1686
    %v1688 = vsub.f32 1.0, %v1683
    %1690 = vrot.lane.b32.xlu0 %v1687, 64
    %v1691 = vpop.permute.xlu0 %1690
    %v1693 = vmul.f32 %v1688, %v1691
    %v1694 = vmul.f32 %v1683, %v1434
    %v1695 = vadd.f32 %v1693, %v1694
    %1697 = vrot.lane.b32.xlu0 %v1695, 64
    %v1698 = vpop.permute.xlu0 %1697
    %1701 = vrot.lane.b32.xlu0 %v1602, 96
    %v1702 = vpop.permute.xlu0 %1701
    %v1704 = vsel %vm302, %v1698, %v1702
    %v1706 = vsel %vm399, %v1704, 0
    %1708 = vmatprep.subr.mxu0 %v253
    %1709 = vmatpush1.msra.mxu0 %v252
    %1710 = vmatprep.subr.mxu0 %v256
    %1711 = vmatpush1.msra.mxu0 %v255
    %1712 = vmatprep.subr.mxu0 %v259
    %1713 = vmatpush1.msra.mxu0 %v258
    %1714 = vmatprep.subr.mxu0 %v262
    %1715 = vmatpush1.msra.mxu0 %v261
    %1716 = vmatprep.subr.mxu0 %v265
    %1717 = vmatpush1.msra.mxu0 %v264
    %1718 = vmatprep.subr.mxu0 %v268
    %1719 = vmatpush1.msra.mxu0 %v267
    %1720 = vmatprep.subr.mxu0 %v271
    %1721 = vmatpush1.msra.mxu0 %v270
    %1722 = vmatprep.subr.mxu0 %v274
    %1723 = vmatpush1.msra.mxu0 %v273
    %1724 = vmatprep.subr.mxu0 0.0
    %1725 = vmatpush1.msra.mxu0 0.0
    %1726 = vmatprep.subr.mxu0 0.0
    %1727 = vmatpush1.msra.mxu0 0.0
    %1728 = vmatprep.subr.mxu0 0.0
    %1729 = vmatpush1.msra.mxu0 0.0
    %1730 = vmatprep.subr.mxu0 0.0
    %1731 = vmatpush1.msra.mxu0 0.0
    %1732 = vmatprep.subr.mxu0 0.0
    %1733 = vmatpush1.msra.mxu0 0.0
    %1734 = vmatprep.subr.mxu0 0.0
    %1735 = vmatpush1.msra.mxu0 0.0
    %1736 = vmatprep.subr.mxu0 0.0
    %1737 = vmatpush1.msra.mxu0 0.0
    %1738 = vmatprep.subr.mxu0 0.0
    %1739 = vmatpush1.msra.mxu0 0.0
    %1740 = vmatprep.subr.mxu0 0.0
    %1741 = vmatpush1.msra.mxu0 0.0
    %1742 = vmatprep.subr.mxu0 0.0
    %1743 = vmatpush1.msra.mxu0 0.0
    %1744 = vmatprep.subr.mxu0 0.0
    %1745 = vmatpush1.msra.mxu0 0.0
    %1746 = vmatprep.subr.mxu0 0.0
    %1747 = vmatpush1.msra.mxu0 0.0
    %1748 = vmatprep.subr.mxu0 0.0
    %1749 = vmatpush1.msra.mxu0 0.0
    %1750 = vmatprep.subr.mxu0 0.0
    %1751 = vmatpush1.msra.mxu0 0.0
    %1752 = vmatprep.subr.mxu0 0.0
    %1753 = vmatpush1.msra.mxu0 0.0
    %1754 = vmatprep.subr.mxu0 0.0
    %1755 = vmatpush1.msra.mxu0 0.0
    %1756 = vmatprep.subr.mxu0 0.0
    %1757 = vmatpush1.msra.mxu0 0.0
    %1758 = vmatprep.subr.mxu0 0.0
    %1759 = vmatpush1.msra.mxu0 0.0
    %1760 = vmatprep.subr.mxu0 0.0
    %1761 = vmatpush1.msra.mxu0 0.0
    %1762 = vmatprep.subr.mxu0 0.0
    %1763 = vmatpush1.msra.mxu0 0.0
    %1764 = vmatprep.subr.mxu0 0.0
    %1765 = vmatpush1.msra.mxu0 0.0
    %1766 = vmatprep.subr.mxu0 0.0
    %1767 = vmatpush1.msra.mxu0 0.0
    %1768 = vmatprep.subr.mxu0 0.0
    %1769 = vmatpush1.msra.mxu0 0.0
    %1770 = vmatprep.subr.mxu0 0.0
    %1771 = vmatpush1.msra.mxu0 0.0
    %1772 = vmatprep.mubr.f32.mxu0 0.0
    %1773 = vmatmul.mubr.f32.gmra.mrb[0].mxu0 %v1706
    %v1774 = vpop.f32.mrb[0].mxu0
    %v1775 = vadd.f32 %v288, %v1774
    %v1776 = vpop.f32.mrb[0].mxu0
    %v1777 = vadd.f32 %v292, %v1776
    %1778 = vdwg.mxu0
    %1779 = vmatprep.subr.mxu0 0.0
    %1780 = vmatpush1.msra.mxu0 %v254
    %1781 = vmatprep.subr.mxu0 0.0
    %1782 = vmatpush1.msra.mxu0 %v257
    %1783 = vmatprep.subr.mxu0 0.0
    %1784 = vmatpush1.msra.mxu0 %v260
    %1785 = vmatprep.subr.mxu0 0.0
    %1786 = vmatpush1.msra.mxu0 %v263
    %1787 = vmatprep.subr.mxu0 0.0
    %1788 = vmatpush1.msra.mxu0 %v266
    %1789 = vmatprep.subr.mxu0 0.0
    %1790 = vmatpush1.msra.mxu0 %v269
    %1791 = vmatprep.subr.mxu0 0.0
    %1792 = vmatpush1.msra.mxu0 %v272
    %1793 = vmatprep.subr.mxu0 0.0
    %1794 = vmatpush1.msra.mxu0 %v275
    %1795 = vmatprep.subr.mxu0 0.0
    %1796 = vmatpush1.msra.mxu0 0.0
    %1797 = vmatprep.subr.mxu0 0.0
    %1798 = vmatpush1.msra.mxu0 0.0
    %1799 = vmatprep.subr.mxu0 0.0
    %1800 = vmatpush1.msra.mxu0 0.0
    %1801 = vmatprep.subr.mxu0 0.0
    %1802 = vmatpush1.msra.mxu0 0.0
    %1803 = vmatprep.subr.mxu0 0.0
    %1804 = vmatpush1.msra.mxu0 0.0
    %1805 = vmatprep.subr.mxu0 0.0
    %1806 = vmatpush1.msra.mxu0 0.0
    %1807 = vmatprep.subr.mxu0 0.0
    %1808 = vmatpush1.msra.mxu0 0.0
    %1809 = vmatprep.subr.mxu0 0.0
    %1810 = vmatpush1.msra.mxu0 0.0
    %1811 = vmatprep.subr.mxu0 0.0
    %1812 = vmatpush1.msra.mxu0 0.0
    %1813 = vmatprep.subr.mxu0 0.0
    %1814 = vmatpush1.msra.mxu0 0.0
    %1815 = vmatprep.subr.mxu0 0.0
    %1816 = vmatpush1.msra.mxu0 0.0
    %1817 = vmatprep.subr.mxu0 0.0
    %1818 = vmatpush1.msra.mxu0 0.0
    %1819 = vmatprep.subr.mxu0 0.0
    %1820 = vmatpush1.msra.mxu0 0.0
    %1821 = vmatprep.subr.mxu0 0.0
    %1822 = vmatpush1.msra.mxu0 0.0
    %1823 = vmatprep.subr.mxu0 0.0
    %1824 = vmatpush1.msra.mxu0 0.0
    %1825 = vmatprep.subr.mxu0 0.0
    %1826 = vmatpush1.msra.mxu0 0.0
    %1827 = vmatprep.subr.mxu0 0.0
    %1828 = vmatpush1.msra.mxu0 0.0
    %1829 = vmatprep.subr.mxu0 0.0
    %1830 = vmatpush1.msra.mxu0 0.0
    %1831 = vmatprep.subr.mxu0 0.0
    %1832 = vmatpush1.msra.mxu0 0.0
    %1833 = vmatprep.subr.mxu0 0.0
    %1834 = vmatpush1.msra.mxu0 0.0
    %1835 = vmatprep.subr.mxu0 0.0
    %1836 = vmatpush1.msra.mxu0 0.0
    %1837 = vmatprep.subr.mxu0 0.0
    %1838 = vmatpush1.msra.mxu0 0.0
    %1839 = vmatprep.subr.mxu0 0.0
    %1840 = vmatpush1.msra.mxu0 0.0
    %1841 = vmatprep.subr.mxu0 0.0
    %1842 = vmatpush1.msra.mxu0 0.0
    %1843 = vmatprep.mubr.f32.mxu0 0.0
    %1844 = vmatmul.mubr.f32.gmra.mrb[0].mxu0 %v1706
    %v1845 = vpop.f32.mrb[0].mxu0
    %v1846 = vadd.f32 %v296, %v1845
    %v1847 = vpop.f32.mrb[0].mxu0
    %1848 = vdwg.mxu0
    %v1849 = vmul.f32 %v1775, 0.5
    %v1850 = vtanh.pop %v1849
    %v1851 = vadd.f32 %v1850, 1.0
    %v1852 = vmul.f32 %v1851, 0.5
    %v1853 = vmul.f32 %v1852, %v1846
    %v1854 = vadd.f32 %v1777, %v1853
    %v1855 = vtanh.pop %v1854
    %v1856 = vsub.f32 1.0, %v1852
    %1858 = vrot.lane.b32.xlu0 %v1855, 64
    %v1859 = vpop.permute.xlu0 %1858
    %v1861 = vmul.f32 %v1856, %v1859
    %v1862 = vmul.f32 %v1852, %v1602
    %v1863 = vadd.f32 %v1861, %v1862
    %s1864 = scalar_lea.vmem [#allocation2], 96
    %v1865 = vld [vmem:[%s1864] sm:$0xff]
    %v1866 = vld [vmem:[%s1864 + $0x8] sm:$0xff]
    %v1867 = vsel %vm302, %v1698, 0
    %1869 = vmatprep.subr.mxu0 %v245
    %1870 = vmatpush1.msra.mxu0 %v244
    %1871 = vmatprep.subr.mxu0 %v247
    %1872 = vmatpush1.msra.mxu0 %v246
    %1873 = vmatprep.subr.mxu0 %v249
    %1874 = vmatpush1.msra.mxu0 %v248
    %1875 = vmatprep.subr.mxu0 %v251
    %1876 = vmatpush1.msra.mxu0 %v250
    %1877 = vmatprep.subr.mxu0 0.0
    %1878 = vmatpush1.msra.mxu0 0.0
    %1879 = vmatprep.subr.mxu0 0.0
    %1880 = vmatpush1.msra.mxu0 0.0
    %1881 = vmatprep.subr.mxu0 0.0
    %1882 = vmatpush1.msra.mxu0 0.0
    %1883 = vmatprep.subr.mxu0 0.0
    %1884 = vmatpush1.msra.mxu0 0.0
    %1885 = vmatprep.subr.mxu0 0.0
    %1886 = vmatpush1.msra.mxu0 0.0
    %1887 = vmatprep.subr.mxu0 0.0
    %1888 = vmatpush1.msra.mxu0 0.0
    %1889 = vmatprep.subr.mxu0 0.0
    %1890 = vmatpush1.msra.mxu0 0.0
    %1891 = vmatprep.subr.mxu0 0.0
    %1892 = vmatpush1.msra.mxu0 0.0
    %1893 = vmatprep.subr.mxu0 0.0
    %1894 = vmatpush1.msra.mxu0 0.0
    %1895 = vmatprep.subr.mxu0 0.0
    %1896 = vmatpush1.msra.mxu0 0.0
    %1897 = vmatprep.subr.mxu0 0.0
    %1898 = vmatpush1.msra.mxu0 0.0
    %1899 = vmatprep.subr.mxu0 0.0
    %1900 = vmatpush1.msra.mxu0 0.0
    %1901 = vmatprep.subr.mxu0 0.0
    %1902 = vmatpush1.msra.mxu0 0.0
    %1903 = vmatprep.subr.mxu0 0.0
    %1904 = vmatpush1.msra.mxu0 0.0
    %1905 = vmatprep.subr.mxu0 0.0
    %1906 = vmatpush1.msra.mxu0 0.0
    %1907 = vmatprep.subr.mxu0 0.0
    %1908 = vmatpush1.msra.mxu0 0.0
    %1909 = vmatprep.subr.mxu0 0.0
    %1910 = vmatpush1.msra.mxu0 0.0
    %1911 = vmatprep.subr.mxu0 0.0
    %1912 = vmatpush1.msra.mxu0 0.0
    %1913 = vmatprep.subr.mxu0 0.0
    %1914 = vmatpush1.msra.mxu0 0.0
    %1915 = vmatprep.subr.mxu0 0.0
    %1916 = vmatpush1.msra.mxu0 0.0
    %1917 = vmatprep.subr.mxu0 0.0
    %1918 = vmatpush1.msra.mxu0 0.0
    %1919 = vmatprep.subr.mxu0 0.0
    %1920 = vmatpush1.msra.mxu0 0.0
    %1921 = vmatprep.subr.mxu0 0.0
    %1922 = vmatpush1.msra.mxu0 0.0
    %1923 = vmatprep.subr.mxu0 0.0
    %1924 = vmatpush1.msra.mxu0 0.0
    %1925 = vmatprep.subr.mxu0 0.0
    %1926 = vmatpush1.msra.mxu0 0.0
    %1927 = vmatprep.subr.mxu0 0.0
    %1928 = vmatpush1.msra.mxu0 0.0
    %1929 = vmatprep.subr.mxu0 0.0
    %1930 = vmatpush1.msra.mxu0 0.0
    %1931 = vmatprep.subr.mxu0 0.0
    %1932 = vmatpush1.msra.mxu0 0.0
    %1933 = vmatprep.mubr.f32.mxu0 0.0
    %1934 = vmatmul.mubr.f32.gmra.mrb[0].mxu0 %v1867
    %v1935 = vpop.f32.mrb[0].mxu0
    %v1936 = vadd.f32 0.0, %v1935
    %v1937 = vpop.f32.mrb[0].mxu0
    %v1938 = vadd.f32 0.0, %v1937
    %1939 = vdwg.mxu0
    %v1940 = vadd.f32 %v1865, %v1936
    %v1941 = vmul.f32 %v1940, 0.5
    %v1942 = vtanh.pop %v1941
    %v1943 = vadd.f32 %v1942, 1.0
    %v1944 = vmul.f32 %v1943, 0.5
    %v1945 = vadd.f32 %v1938, %v281
    %v1946 = vmul.f32 %v1944, %v1945
    %v1947 = vadd.f32 %v1866, %v1946
    %v1948 = vtanh.pop %v1947
    %v1949 = vsub.f32 1.0, %v1944
    %1951 = vrot.lane.b32.xlu0 %v1948, 64
    %v1952 = vpop.permute.xlu0 %1951
    %v1954 = vmul.f32 %v1949, %v1952
    %v1955 = vmul.f32 %v1944, %v1695
    %v1956 = vadd.f32 %v1954, %v1955
    %1958 = vrot.lane.b32.xlu0 %v1956, 64
    %v1959 = vpop.permute.xlu0 %1958
    %1962 = vrot.lane.b32.xlu0 %v1863, 96
    %v1963 = vpop.permute.xlu0 %1962
    %v1965 = vsel %vm302, %v1959, %v1963
    %v1967 = vsel %vm399, %v1965, 0
    %1969 = vmatprep.subr.mxu0 %v253
    %1970 = vmatpush1.msra.mxu0 %v252
    %1971 = vmatprep.subr.mxu0 %v256
    %1972 = vmatpush1.msra.mxu0 %v255
    %1973 = vmatprep.subr.mxu0 %v259
    %1974 = vmatpush1.msra.mxu0 %v258
    %1975 = vmatprep.subr.mxu0 %v262
    %1976 = vmatpush1.msra.mxu0 %v261
    %1977 = vmatprep.subr.mxu0 %v265
    %1978 = vmatpush1.msra.mxu0 %v264
    %1979 = vmatprep.subr.mxu0 %v268
    %1980 = vmatpush1.msra.mxu0 %v267
    %1981 = vmatprep.subr.mxu0 %v271
    %1982 = vmatpush1.msra.mxu0 %v270
    %1983 = vmatprep.subr.mxu0 %v274
    %1984 = vmatpush1.msra.mxu0 %v273
    %1985 = vmatprep.subr.mxu0 0.0
    %1986 = vmatpush1.msra.mxu0 0.0
    %1987 = vmatprep.subr.mxu0 0.0
    %1988 = vmatpush1.msra.mxu0 0.0
    %1989 = vmatprep.subr.mxu0 0.0
    %1990 = vmatpush1.msra.mxu0 0.0
    %1991 = vmatprep.subr.mxu0 0.0
    %1992 = vmatpush1.msra.mxu0 0.0
    %1993 = vmatprep.subr.mxu0 0.0
    %1994 = vmatpush1.msra.mxu0 0.0
    %1995 = vmatprep.subr.mxu0 0.0
    %1996 = vmatpush1.msra.mxu0 0.0
    %1997 = vmatprep.subr.mxu0 0.0
    %1998 = vmatpush1.msra.mxu0 0.0
    %1999 = vmatprep.subr.mxu0 0.0
    %2000 = vmatpush1.msra.mxu0 0.0
    %2001 = vmatprep.subr.mxu0 0.0
    %2002 = vmatpush1.msra.mxu0 0.0
    %2003 = vmatprep.subr.mxu0 0.0
    %2004 = vmatpush1.msra.mxu0 0.0
    %2005 = vmatprep.subr.mxu0 0.0
    %2006 = vmatpush1.msra.mxu0 0.0
    %2007 = vmatprep.subr.mxu0 0.0
    %2008 = vmatpush1.msra.mxu0 0.0
    %2009 = vmatprep.subr.mxu0 0.0
    %2010 = vmatpush1.msra.mxu0 0.0
    %2011 = vmatprep.subr.mxu0 0.0
    %2012 = vmatpush1.msra.mxu0 0.0
    %2013 = vmatprep.subr.mxu0 0.0
    %2014 = vmatpush1.msra.mxu0 0.0
    %2015 = vmatprep.subr.mxu0 0.0
    %2016 = vmatpush1.msra.mxu0 0.0
    %2017 = vmatprep.subr.mxu0 0.0
    %2018 = vmatpush1.msra.mxu0 0.0
    %2019 = vmatprep.subr.mxu0 0.0
    %2020 = vmatpush1.msra.mxu0 0.0
    %2021 = vmatprep.subr.mxu0 0.0
    %2022 = vmatpush1.msra.mxu0 0.0
    %2023 = vmatprep.subr.mxu0 0.0
    %2024 = vmatpush1.msra.mxu0 0.0
    %2025 = vmatprep.subr.mxu0 0.0
    %2026 = vmatpush1.msra.mxu0 0.0
    %2027 = vmatprep.subr.mxu0 0.0
    %2028 = vmatpush1.msra.mxu0 0.0
    %2029 = vmatprep.subr.mxu0 0.0
    %2030 = vmatpush1.msra.mxu0 0.0
    %2031 = vmatprep.subr.mxu0 0.0
    %2032 = vmatpush1.msra.mxu0 0.0
    %2033 = vmatprep.mubr.f32.mxu0 0.0
    %2034 = vmatmul.mubr.f32.gmra.mrb[0].mxu0 %v1967
    %v2035 = vpop.f32.mrb[0].mxu0
    %v2036 = vadd.f32 %v288, %v2035
    %v2037 = vpop.f32.mrb[0].mxu0
    %v2038 = vadd.f32 %v292, %v2037
    %2039 = vdwg.mxu0
    %2040 = vmatprep.subr.mxu0 0.0
    %2041 = vmatpush1.msra.mxu0 %v254
    %2042 = vmatprep.subr.mxu0 0.0
    %2043 = vmatpush1.msra.mxu0 %v257
    %2044 = vmatprep.subr.mxu0 0.0
    %2045 = vmatpush1.msra.mxu0 %v260
    %2046 = vmatprep.subr.mxu0 0.0
    %2047 = vmatpush1.msra.mxu0 %v263
    %2048 = vmatprep.subr.mxu0 0.0
    %2049 = vmatpush1.msra.mxu0 %v266
    %2050 = vmatprep.subr.mxu0 0.0
    %2051 = vmatpush1.msra.mxu0 %v269
    %2052 = vmatprep.subr.mxu0 0.0
    %2053 = vmatpush1.msra.mxu0 %v272
    %2054 = vmatprep.subr.mxu0 0.0
    %2055 = vmatpush1.msra.mxu0 %v275
    %2056 = vmatprep.subr.mxu0 0.0
    %2057 = vmatpush1.msra.mxu0 0.0
    %2058 = vmatprep.subr.mxu0 0.0
    %2059 = vmatpush1.msra.mxu0 0.0
    %2060 = vmatprep.subr.mxu0 0.0
    %2061 = vmatpush1.msra.mxu0 0.0
    %2062 = vmatprep.subr.mxu0 0.0
    %2063 = vmatpush1.msra.mxu0 0.0
    %2064 = vmatprep.subr.mxu0 0.0
    %2065 = vmatpush1.msra.mxu0 0.0
    %2066 = vmatprep.subr.mxu0 0.0
    %2067 = vmatpush1.msra.mxu0 0.0
    %2068 = vmatprep.subr.mxu0 0.0
    %2069 = vmatpush1.msra.mxu0 0.0
    %2070 = vmatprep.subr.mxu0 0.0
    %2071 = vmatpush1.msra.mxu0 0.0
    %2072 = vmatprep.subr.mxu0 0.0
    %2073 = vmatpush1.msra.mxu0 0.0
    %2074 = vmatprep.subr.mxu0 0.0
    %2075 = vmatpush1.msra.mxu0 0.0
    %2076 = vmatprep.subr.mxu0 0.0
    %2077 = vmatpush1.msra.mxu0 0.0
    %2078 = vmatprep.subr.mxu0 0.0
    %2079 = vmatpush1.msra.mxu0 0.0
    %2080 = vmatprep.subr.mxu0 0.0
    %2081 = vmatpush1.msra.mxu0 0.0
    %2082 = vmatprep.subr.mxu0 0.0
    %2083 = vmatpush1.msra.mxu0 0.0
    %2084 = vmatprep.subr.mxu0 0.0
    %2085 = vmatpush1.msra.mxu0 0.0
    %2086 = vmatprep.subr.mxu0 0.0
    %2087 = vmatpush1.msra.mxu0 0.0
    %2088 = vmatprep.subr.mxu0 0.0
    %2089 = vmatpush1.msra.mxu0 0.0
    %2090 = vmatprep.subr.mxu0 0.0
    %2091 = vmatpush1.msra.mxu0 0.0
    %2092 = vmatprep.subr.mxu0 0.0
    %2093 = vmatpush1.msra.mxu0 0.0
    %2094 = vmatprep.subr.mxu0 0.0
    %2095 = vmatpush1.msra.mxu0 0.0
    %2096 = vmatprep.subr.mxu0 0.0
    %2097 = vmatpush1.msra.mxu0 0.0
    %2098 = vmatprep.subr.mxu0 0.0
    %2099 = vmatpush1.msra.mxu0 0.0
    %2100 = vmatprep.subr.mxu0 0.0
    %2101 = vmatpush1.msra.mxu0 0.0
    %2102 = vmatprep.subr.mxu0 0.0
    %2103 = vmatpush1.msra.mxu0 0.0
    %2104 = vmatprep.mubr.f32.mxu0 0.0
    %2105 = vmatmul.mubr.f32.gmra.mrb[0].mxu0 %v1967
    %v2106 = vpop.f32.mrb[0].mxu0
    %v2107 = vadd.f32 %v296, %v2106
    %v2108 = vpop.f32.mrb[0].mxu0
    %2109 = vdwg.mxu0
    %v2110 = vmul.f32 %v2036, 0.5
    %v2111 = vtanh.pop %v2110
    %v2112 = vadd.f32 %v2111, 1.0
    %v2113 = vmul.f32 %v2112, 0.5
    %v2114 = vmul.f32 %v2113, %v2107
    %v2115 = vadd.f32 %v2038, %v2114
    %v2116 = vtanh.pop %v2115
    %v2117 = vsub.f32 1.0, %v2113
    %2119 = vrot.lane.b32.xlu0 %v2116, 64
    %v2120 = vpop.permute.xlu0 %2119
    %v2122 = vmul.f32 %v2117, %v2120
    %v2123 = vmul.f32 %v2113, %v1863
    %v2124 = vadd.f32 %v2122, %v2123
    %s2125 = scalar_lea.vmem [#allocation2], 112
    %v2126 = vld [vmem:[%s2125] sm:$0xff]
    %v2127 = vld [vmem:[%s2125 + $0x8] sm:$0xff]
    %v2128 = vsel %vm302, %v1959, 0
    %2130 = vmatprep.subr.mxu0 %v245
    %2131 = vmatpush1.msra.mxu0 %v244
    %2132 = vmatprep.subr.mxu0 %v247
    %2133 = vmatpush1.msra.mxu0 %v246
    %2134 = vmatprep.subr.mxu0 %v249
    %2135 = vmatpush1.msra.mxu0 %v248
    %2136 = vmatprep.subr.mxu0 %v251
    %2137 = vmatpush1.msra.mxu0 %v250
    %2138 = vmatprep.subr.mxu0 0.0
    %2139 = vmatpush1.msra.mxu0 0.0
    %2140 = vmatprep.subr.mxu0 0.0
    %2141 = vmatpush1.msra.mxu0 0.0
    %2142 = vmatprep.subr.mxu0 0.0
    %2143 = vmatpush1.msra.mxu0 0.0
    %2144 = vmatprep.subr.mxu0 0.0
    %2145 = vmatpush1.msra.mxu0 0.0
    %2146 = vmatprep.subr.mxu0 0.0
    %2147 = vmatpush1.msra.mxu0 0.0
    %2148 = vmatprep.subr.mxu0 0.0
    %2149 = vmatpush1.msra.mxu0 0.0
    %2150 = vmatprep.subr.mxu0 0.0
    %2151 = vmatpush1.msra.mxu0 0.0
    %2152 = vmatprep.subr.mxu0 0.0
    %2153 = vmatpush1.msra.mxu0 0.0
    %2154 = vmatprep.subr.mxu0 0.0
    %2155 = vmatpush1.msra.mxu0 0.0
    %2156 = vmatprep.subr.mxu0 0.0
    %2157 = vmatpush1.msra.mxu0 0.0
    %2158 = vmatprep.subr.mxu0 0.0
    %2159 = vmatpush1.msra.mxu0 0.0
    %2160 = vmatprep.subr.mxu0 0.0
    %2161 = vmatpush1.msra.mxu0 0.0
    %2162 = vmatprep.subr.mxu0 0.0
    %2163 = vmatpush1.msra.mxu0 0.0
    %2164 = vmatprep.subr.mxu0 0.0
    %2165 = vmatpush1.msra.mxu0 0.0
    %2166 = vmatprep.subr.mxu0 0.0
    %2167 = vmatpush1.msra.mxu0 0.0
    %2168 = vmatprep.subr.mxu0 0.0
    %2169 = vmatpush1.msra.mxu0 0.0
    %2170 = vmatprep.subr.mxu0 0.0
    %2171 = vmatpush1.msra.mxu0 0.0
    %2172 = vmatprep.subr.mxu0 0.0
    %2173 = vmatpush1.msra.mxu0 0.0
    %2174 = vmatprep.subr.mxu0 0.0
    %2175 = vmatpush1.msra.mxu0 0.0
    %2176 = vmatprep.subr.mxu0 0.0
    %2177 = vmatpush1.msra.mxu0 0.0
    %2178 = vmatprep.subr.mxu0 0.0
    %2179 = vmatpush1.msra.mxu0 0.0
    %2180 = vmatprep.subr.mxu0 0.0
    %2181 = vmatpush1.msra.mxu0 0.0
    %2182 = vmatprep.subr.mxu0 0.0
    %2183 = vmatpush1.msra.mxu0 0.0
    %2184 = vmatprep.subr.mxu0 0.0
    %2185 = vmatpush1.msra.mxu0 0.0
    %2186 = vmatprep.subr.mxu0 0.0
    %2187 = vmatpush1.msra.mxu0 0.0
    %2188 = vmatprep.subr.mxu0 0.0
    %2189 = vmatpush1.msra.mxu0 0.0
    %2190 = vmatprep.subr.mxu0 0.0
    %2191 = vmatpush1.msra.mxu0 0.0
    %2192 = vmatprep.subr.mxu0 0.0
    %2193 = vmatpush1.msra.mxu0 0.0
    %2194 = vmatprep.mubr.f32.mxu0 0.0
    %2195 = vmatmul.mubr.f32.gmra.mrb[0].mxu0 %v2128
    %v2196 = vpop.f32.mrb[0].mxu0
    %v2197 = vadd.f32 0.0, %v2196
    %v2198 = vpop.f32.mrb[0].mxu0
    %v2199 = vadd.f32 0.0, %v2198
    %2200 = vdwg.mxu0
    %v2201 = vadd.f32 %v2126, %v2197
    %v2202 = vmul.f32 %v2201, 0.5
    %v2203 = vtanh.pop %v2202
    %v2204 = vadd.f32 %v2203, 1.0
    %v2205 = vmul.f32 %v2204, 0.5
    %v2206 = vadd.f32 %v2199, %v281
    %v2207 = vmul.f32 %v2205, %v2206
    %v2208 = vadd.f32 %v2127, %v2207
    %v2209 = vtanh.pop %v2208
    %v2210 = vsub.f32 1.0, %v2205
    %2212 = vrot.lane.b32.xlu0 %v2209, 64
    %v2213 = vpop.permute.xlu0 %2212
    %v2215 = vmul.f32 %v2210, %v2213
    %v2216 = vmul.f32 %v2205, %v1956
    %v2217 = vadd.f32 %v2215, %v2216
    %2219 = vrot.lane.b32.xlu0 %v2217, 64
    %v2220 = vpop.permute.xlu0 %2219
    %2223 = vrot.lane.b32.xlu0 %v2124, 96
    %v2224 = vpop.permute.xlu0 %2223
    %v2226 = vsel %vm302, %v2220, %v2224
    %v2228 = vsel %vm399, %v2226, 0
    %2230 = vmatprep.subr.mxu0 %v253
    %2231 = vmatpush1.msra.mxu0 %v252
    %2232 = vmatprep.subr.mxu0 %v256
    %2233 = vmatpush1.msra.mxu0 %v255
    %2234 = vmatprep.subr.mxu0 %v259
    %2235 = vmatpush1.msra.mxu0 %v258
    %2236 = vmatprep.subr.mxu0 %v262
    %2237 = vmatpush1.msra.mxu0 %v261
    %2238 = vmatprep.subr.mxu0 %v265
    %2239 = vmatpush1.msra.mxu0 %v264
    %2240 = vmatprep.subr.mxu0 %v268
    %2241 = vmatpush1.msra.mxu0 %v267
    %2242 = vmatprep.subr.mxu0 %v271
    %2243 = vmatpush1.msra.mxu0 %v270
    %2244 = vmatprep.subr.mxu0 %v274
    %2245 = vmatpush1.msra.mxu0 %v273
    %2246 = vmatprep.subr.mxu0 0.0
    %2247 = vmatpush1.msra.mxu0 0.0
    %2248 = vmatprep.subr.mxu0 0.0
    %2249 = vmatpush1.msra.mxu0 0.0
    %2250 = vmatprep.subr.mxu0 0.0
    %2251 = vmatpush1.msra.mxu0 0.0
    %2252 = vmatprep.subr.mxu0 0.0
    %2253 = vmatpush1.msra.mxu0 0.0
    %2254 = vmatprep.subr.mxu0 0.0
    %2255 = vmatpush1.msra.mxu0 0.0
    %2256 = vmatprep.subr.mxu0 0.0
    %2257 = vmatpush1.msra.mxu0 0.0
    %2258 = vmatprep.subr.mxu0 0.0
    %2259 = vmatpush1.msra.mxu0 0.0
    %2260 = vmatprep.subr.mxu0 0.0
    %2261 = vmatpush1.msra.mxu0 0.0
    %2262 = vmatprep.subr.mxu0 0.0
    %2263 = vmatpush1.msra.mxu0 0.0
    %2264 = vmatprep.subr.mxu0 0.0
    %2265 = vmatpush1.msra.mxu0 0.0
    %2266 = vmatprep.subr.mxu0 0.0
    %2267 = vmatpush1.msra.mxu0 0.0
    %2268 = vmatprep.subr.mxu0 0.0
    %2269 = vmatpush1.msra.mxu0 0.0
    %2270 = vmatprep.subr.mxu0 0.0
    %2271 = vmatpush1.msra.mxu0 0.0
    %2272 = vmatprep.subr.mxu0 0.0
    %2273 = vmatpush1.msra.mxu0 0.0
    %2274 = vmatprep.subr.mxu0 0.0
    %2275 = vmatpush1.msra.mxu0 0.0
    %2276 = vmatprep.subr.mxu0 0.0
    %2277 = vmatpush1.msra.mxu0 0.0
    %2278 = vmatprep.subr.mxu0 0.0
    %2279 = vmatpush1.msra.mxu0 0.0
    %2280 = vmatprep.subr.mxu0 0.0
    %2281 = vmatpush1.msra.mxu0 0.0
    %2282 = vmatprep.subr.mxu0 0.0
    %2283 = vmatpush1.msra.mxu0 0.0
    %2284 = vmatprep.subr.mxu0 0.0
    %2285 = vmatpush1.msra.mxu0 0.0
    %2286 = vmatprep.subr.mxu0 0.0
    %2287 = vmatpush1.msra.mxu0 0.0
    %2288 = vmatprep.subr.mxu0 0.0
    %2289 = vmatpush1.msra.mxu0 0.0
    %2290 = vmatprep.subr.mxu0 0.0
    %2291 = vmatpush1.msra.mxu0 0.0
    %2292 = vmatprep.subr.mxu0 0.0
    %2293 = vmatpush1.msra.mxu0 0.0
    %2294 = vmatprep.mubr.f32.mxu0 0.0
    %2295 = vmatmul.mubr.f32.gmra.mrb[0].mxu0 %v2228
    %v2296 = vpop.f32.mrb[0].mxu0
    %v2297 = vadd.f32 %v288, %v2296
    %v2298 = vpop.f32.mrb[0].mxu0
    %v2299 = vadd.f32 %v292, %v2298
    %2300 = vdwg.mxu0
    %2301 = vmatprep.subr.mxu0 0.0
    %2302 = vmatpush1.msra.mxu0 %v254
    %2303 = vmatprep.subr.mxu0 0.0
    %2304 = vmatpush1.msra.mxu0 %v257
    %2305 = vmatprep.subr.mxu0 0.0
    %2306 = vmatpush1.msra.mxu0 %v260
    %2307 = vmatprep.subr.mxu0 0.0
    %2308 = vmatpush1.msra.mxu0 %v263
    %2309 = vmatprep.subr.mxu0 0.0
    %2310 = vmatpush1.msra.mxu0 %v266
    %2311 = vmatprep.subr.mxu0 0.0
    %2312 = vmatpush1.msra.mxu0 %v269
    %2313 = vmatprep.subr.mxu0 0.0
    %2314 = vmatpush1.msra.mxu0 %v272
    %2315 = vmatprep.subr.mxu0 0.0
    %2316 = vmatpush1.msra.mxu0 %v275
    %2317 = vmatprep.subr.mxu0 0.0
    %2318 = vmatpush1.msra.mxu0 0.0
    %2319 = vmatprep.subr.mxu0 0.0
    %2320 = vmatpush1.msra.mxu0 0.0
    %2321 = vmatprep.subr.mxu0 0.0
    %2322 = vmatpush1.msra.mxu0 0.0
    %2323 = vmatprep.subr.mxu0 0.0
    %2324 = vmatpush1.msra.mxu0 0.0
    %2325 = vmatprep.subr.mxu0 0.0
    %2326 = vmatpush1.msra.mxu0 0.0
    %2327 = vmatprep.subr.mxu0 0.0
    %2328 = vmatpush1.msra.mxu0 0.0
    %2329 = vmatprep.subr.mxu0 0.0
    %2330 = vmatpush1.msra.mxu0 0.0
    %2331 = vmatprep.subr.mxu0 0.0
    %2332 = vmatpush1.msra.mxu0 0.0
    %2333 = vmatprep.subr.mxu0 0.0
    %2334 = vmatpush1.msra.mxu0 0.0
    %2335 = vmatprep.subr.mxu0 0.0
    %2336 = vmatpush1.msra.mxu0 0.0
    %2337 = vmatprep.subr.mxu0 0.0
    %2338 = vmatpush1.msra.mxu0 0.0
    %2339 = vmatprep.subr.mxu0 0.0
    %2340 = vmatpush1.msra.mxu0 0.0
    %2341 = vmatprep.subr.mxu0 0.0
    %2342 = vmatpush1.msra.mxu0 0.0
    %2343 = vmatprep.subr.mxu0 0.0
    %2344 = vmatpush1.msra.mxu0 0.0
    %2345 = vmatprep.subr.mxu0 0.0
    %2346 = vmatpush1.msra.mxu0 0.0
    %2347 = vmatprep.subr.mxu0 0.0
    %2348 = vmatpush1.msra.mxu0 0.0
    %2349 = vmatprep.subr.mxu0 0.0
    %2350 = vmatpush1.msra.mxu0 0.0
    %2351 = vmatprep.subr.mxu0 0.0
    %2352 = vmatpush1.msra.mxu0 0.0
    %2353 = vmatprep.subr.mxu0 0.0
    %2354 = vmatpush1.msra.mxu0 0.0
    %2355 = vmatprep.subr.mxu0 0.0
    %2356 = vmatpush1.msra.mxu0 0.0
    %2357 = vmatprep.subr.mxu0 0.0
    %2358 = vmatpush1.msra.mxu0 0.0
    %2359 = vmatprep.subr.mxu0 0.0
    %2360 = vmatpush1.msra.mxu0 0.0
    %2361 = vmatprep.subr.mxu0 0.0
    %2362 = vmatpush1.msra.mxu0 0.0
    %2363 = vmatprep.subr.mxu0 0.0
    %2364 = vmatpush1.msra.mxu0 0.0
    %2365 = vmatprep.mubr.f32.mxu0 0.0
    %2366 = vmatmul.mubr.f32.gmra.mrb[0].mxu0 %v2228
    %v2367 = vpop.f32.mrb[0].mxu0
    %v2368 = vadd.f32 %v296, %v2367
    %v2369 = vpop.f32.mrb[0].mxu0
    %2370 = vdwg.mxu0
    %v2371 = vmul.f32 %v2297, 0.5
    %v2372 = vtanh.pop %v2371
    %v2373 = vadd.f32 %v2372, 1.0
    %v2374 = vmul.f32 %v2373, 0.5
    %v2375 = vmul.f32 %v2374, %v2368
    %v2376 = vadd.f32 %v2299, %v2375
    %v2377 = vtanh.pop %v2376
    %v2378 = vsub.f32 1.0, %v2374
    %2380 = vrot.lane.b32.xlu0 %v2377, 64
    %v2381 = vpop.permute.xlu0 %2380
    %v2383 = vmul.f32 %v2378, %v2381
    %v2384 = vmul.f32 %v2374, %v2124
    %v2385 = vadd.f32 %v2383, %v2384
    %vm2386 = vcmask 785920
    %v2387 = vsel %vm2386, %v2385, 0.0
    %v2388 = vrot.slane %v2387, 4
    %v2389 = vadd.f32 %v2387, %v2388
    %v2390 = vrot.slane %v2389, 2
    %v2391 = vadd.f32 %v2389, %v2390
    %v2392 = vrot.slane %v2391, 1
    %v2393 = vadd.f32 %v2391, %v2392
    %v2394 = vrcp.pop 8.0
    %v2395 = vmul.f32 %v2393, %v2394
    %v2396 = vsub.f32 %v2385, %v2395
    %v2397 = vmul.f32 %v2396, %v2396
    %v2398 = vsel %vm2386, %v2397, 0.0
    %v2399 = vrot.slane %v2398, 4
    %v2400 = vadd.f32 %v2398, %v2399
    %v2401 = vrot.slane %v2400, 2
    %v2402 = vadd.f32 %v2400, %v2401
    %v2403 = vrot.slane %v2402, 1
    %v2404 = vadd.f32 %v2402, %v2403
    %v2405 = vmul.f32 %v2404, %v2394
    %v2406 = vadd.f32 %v2405, 1e-05
    %v2407 = vrsqrt.pop %v2406
    %v2408 = vmul.f32 %v2396, %v2407
    %v2409 = vld [vmem:[%s7] sm:$0x1]
    %v2411 = vlaneseq
    %v2412 = vshrl.u32 %v2411, 7
    %v2413 = vsub.s32 0, %v2412
    %v2414 = vrot.slane %v2409, %v2413
    %2415 = vrot.lane.b32.xlu0 %v2414, 64
    %v2416 = vpop.permute.xlu0 %2415
    %v2418 = vmul.f32 %v2408, %v2416
    %v2419 = vld [vmem:[%s8] sm:$0x1]
    %v2421 = vlaneseq
    %v2422 = vshrl.u32 %v2421, 7
    %v2423 = vsub.s32 0, %v2422
    %v2424 = vrot.slane %v2419, %v2423
    %2425 = vrot.lane.b32.xlu0 %v2424, 64
    %v2426 = vpop.permute.xlu0 %2425
    %v2428 = vadd.f32 %v2418, %v2426
    %v2429 = vld [vmem:[%s9] sm:$0xff]
    %v2430 = vld [vmem:[%s9 + $0x8] sm:$0xff]
    %v2431 = vld [vmem:[%s9 + $0x10] sm:$0xff]
    %v2432 = vld [vmem:[%s9 + $0x18] sm:$0xff]
    %v2433 = vld [vmem:[%s10] sm:$0x1]
    %v2435 = vlaneseq
    %v2436 = vshrl.u32 %v2435, 7
    %v2437 = vsub.s32 0, %v2436
    %v2438 = vrot.slane %v2433, %v2437
    %2441 = vrot.lane.b32.xlu0 %v2428, 64
    %v2442 = vpop.permute.xlu0 %2441
    %v2443 = vsel %vm302, %v2442, 0
    %2445 = vmatprep.subr.mxu0 0.0
    %2446 = vmatpush1.msra.mxu0 %v2429
    %2447 = vmatprep.subr.mxu0 0.0
    %2448 = vmatpush1.msra.mxu0 %v2430
    %2449 = vmatprep.subr.mxu0 0.0
    %2450 = vmatpush1.msra.mxu0 %v2431
    %2451 = vmatprep.subr.mxu0 0.0
    %2452 = vmatpush1.msra.mxu0 %v2432
    %2453 = vmatprep.subr.mxu0 0.0
    %2454 = vmatpush1.msra.mxu0 0.0
    %2455 = vmatprep.subr.mxu0 0.0
    %2456 = vmatpush1.msra.mxu0 0.0
    %2457 = vmatprep.subr.mxu0 0.0
    %2458 = vmatpush1.msra.mxu0 0.0
    %2459 = vmatprep.subr.mxu0 0.0
    %2460 = vmatpush1.msra.mxu0 0.0
    %2461 = vmatprep.subr.mxu0 0.0
    %2462 = vmatpush1.msra.mxu0 0.0
    %2463 = vmatprep.subr.mxu0 0.0
    %2464 = vmatpush1.msra.mxu0 0.0
    %2465 = vmatprep.subr.mxu0 0.0
    %2466 = vmatpush1.msra.mxu0 0.0
    %2467 = vmatprep.subr.mxu0 0.0
    %2468 = vmatpush1.msra.mxu0 0.0
    %2469 = vmatprep.subr.mxu0 0.0
    %2470 = vmatpush1.msra.mxu0 0.0
    %2471 = vmatprep.subr.mxu0 0.0
    %2472 = vmatpush1.msra.mxu0 0.0
    %2473 = vmatprep.subr.mxu0 0.0
    %2474 = vmatpush1.msra.mxu0 0.0
    %2475 = vmatprep.subr.mxu0 0.0
    %2476 = vmatpush1.msra.mxu0 0.0
    %2477 = vmatprep.subr.mxu0 0.0
    %2478 = vmatpush1.msra.mxu0 0.0
    %2479 = vmatprep.subr.mxu0 0.0
    %2480 = vmatpush1.msra.mxu0 0.0
    %2481 = vmatprep.subr.mxu0 0.0
    %2482 = vmatpush1.msra.mxu0 0.0
    %2483 = vmatprep.subr.mxu0 0.0
    %2484 = vmatpush1.msra.mxu0 0.0
    %2485 = vmatprep.subr.mxu0 0.0
    %2486 = vmatpush1.msra.mxu0 0.0
    %2487 = vmatprep.subr.mxu0 0.0
    %2488 = vmatpush1.msra.mxu0 0.0
    %2489 = vmatprep.subr.mxu0 0.0
    %2490 = vmatpush1.msra.mxu0 0.0
    %2491 = vmatprep.subr.mxu0 0.0
    %2492 = vmatpush1.msra.mxu0 0.0
    %2493 = vmatprep.subr.mxu0 0.0
    %2494 = vmatpush1.msra.mxu0 0.0
    %2495 = vmatprep.subr.mxu0 0.0
    %2496 = vmatpush1.msra.mxu0 0.0
    %2497 = vmatprep.subr.mxu0 0.0
    %2498 = vmatpush1.msra.mxu0 0.0
    %2499 = vmatprep.subr.mxu0 0.0
    %2500 = vmatpush1.msra.mxu0 0.0
    %2501 = vmatprep.subr.mxu0 0.0
    %2502 = vmatpush1.msra.mxu0 0.0
    %2503 = vmatprep.subr.mxu0 0.0
    %2504 = vmatpush1.msra.mxu0 0.0
    %2505 = vmatprep.subr.mxu0 0.0
    %2506 = vmatpush1.msra.mxu0 0.0
    %2507 = vmatprep.subr.mxu0 0.0
    %2508 = vmatpush1.msra.mxu0 0.0
    %2509 = vmatprep.mubr.f32.mxu0 0.0
    %2510 = vmatmul.mubr.f32.gmra.mrb[0].mxu0 %v2443
    %v2511 = vpop.f32.mrb[0].mxu0
    %v2512 = vadd.f32 %v2438, %v2511
    %v2513 = vpop.f32.mrb[0].mxu0
    %2514 = vdwg.mxu0
    %vm2515 = vcmask 31744
    %2516 = vst.msk [vmem:[%s11] sm:$0xff] %vm2515, %v2512
    // Predicated region
    $region54: #{base_rnn_forward.1} parent=1 // pred_check
      _
    $region55: #{base_rnn_forward.1} parent=1 // pred_check_branch
      %2518 = sbr.rel (0) target = $region57
    $region56: #{base_rnn_forward.1} parent=1 // pred_region
      _
    $region57: #{base_rnn_forward.1} parent=1 // pred_fallthru
      _
    // Predicated region
    $region58: #{base_rnn_forward.1} parent=1 // pred_check
      _
    $region59: #{base_rnn_forward.1} parent=1 // pred_check_branch
      %2520 = sbr.rel (0) target = $region61
    $region60: #{base_rnn_forward.1} parent=1 // pred_region
      _
    $region61: #{base_rnn_forward.1} parent=1 // pred_fallthru
      _
    %2521 = vsyncpa [#allocation4], 1
    %2522 = vsyncpa [#allocation6], 1

</llo_original>
